<compile_context>
chip_gen: v7x
topology: tpu7x:2x2x1
jax: 0.10.0
libtpu: 0.0.40
codegen_flags: <defaults>
</compile_context>

<pallas_src>
import math
import functools

import jax
import jax.numpy as jnp
from jax.experimental import pallas as pl
from jax.experimental.pallas import tpu as pltpu

_BN_EPS = 1e-5
_VMEM_LIMIT = 48 * 1024 * 1024     # safe on v7x (64 MiB physical), ample on v5e/v6e


# ------------------------------ tiling helpers ------------------------------

def _pick_m_tile(M, target=1024):
    """Lane tile for the flattened spatial axis.  Full when small, else a
    multiple of 128; the ragged last block is handled by Pallas masked stores."""
    if M <= 2 * target:
        return M
    return target                                  # multiple of 128


def _pick_cout_tile(Cout):
    if Cout > 256 and Cout % 256 == 0:
        return 256
    return Cout


def _pick_k_tile(K):
    """Reduction tile; only tile K when it divides evenly (OOB K blocks would
    feed garbage into the contraction)."""
    if K <= 1536:
        return K
    for t in (1536, 1152, 1024, 768, 512):
        if K % t == 0:
            return t
    return K                                       # TODO(synk): ragged K tiling


# --------------------------- generic fused matmul ---------------------------

@functools.lru_cache(maxsize=None)
def _matmul_kernel(n_pairs, relu, has_res):
    def kernel(*refs):
        acc_ref = refs[-1]
        o_ref = refs[-2]
        r_ref = refs[-3] if has_res else None
        b_ref = refs[2 * n_pairs]
        ws = refs[0:2 * n_pairs:2]
        xs = refs[1:2 * n_pairs:2]
        k = pl.program_id(3)

        @pl.when(k == 0)
        def _():
            acc_ref[...] = jnp.zeros_like(acc_ref)

        for w_ref, x_ref in zip(ws, xs):
            acc_ref[...] += jnp.dot(w_ref[...], x_ref[0],
                                    preferred_element_type=jnp.float32)

        @pl.when(k == pl.num_programs(3) - 1)
        def _():
            out = acc_ref[...] + b_ref[...]
            if has_res:
                out = out + r_ref[0].astype(jnp.float32)
            if relu:
                out = jnp.maximum(out, 0.0)
            o_ref[0] = out.astype(o_ref.dtype)
    return kernel


def fused_matmul(pairs, bias, residual=None, relu=True):
    """out[n] = act( sum_i w_i @ x_i[n] + bias (+ residual[n]) ).

    pairs   : list of (w_i (Cout, K_i) bf16, x_i (N, K_i, M) bf16)
    bias    : (Cout, 1) f32
    residual: None or (N, Cout, M) bf16
    returns : (N, Cout, M) bf16
    """
    Cout = pairs[0][0].shape[0]
    N, _, M = pairs[0][1].shape

    TM = _pick_m_tile(M)
    TCout = _pick_cout_tile(Cout)
    if len(pairs) == 1:
        K = pairs[0][0].shape[1]
        TK = _pick_k_tile(K)
        n_k = pl.cdiv(K, TK)
    else:
        TK, n_k = None, 1
    n_m = pl.cdiv(M, TM)
    n_co = pl.cdiv(Cout, TCout)

    args, in_specs = [], []
    flops, bytes_accessed = 0, 0
    for (w, x) in pairs:
        Ki = w.shape[1]
        tki = TK if TK is not None else Ki
        in_specs.append(pl.BlockSpec((TCout, tki), lambda n, co, m, k: (co, k)))
        in_specs.append(pl.BlockSpec((1, tki, TM), lambda n, co, m, k: (n, k, m)))
        args += [w, x]
        flops += 2 * N * Cout * Ki * M
        bytes_accessed += w.size * w.dtype.itemsize + x.size * x.dtype.itemsize

    args.append(bias)
    in_specs.append(pl.BlockSpec((TCout, 1), lambda n, co, m, k: (co, 0)))
    if residual is not None:
        args.append(residual)
        in_specs.append(pl.BlockSpec((1, TCout, TM), lambda n, co, m, k: (n, co, m)))
        bytes_accessed += residual.size * residual.dtype.itemsize
    bytes_accessed += N * Cout * M * 2

    kernel = _matmul_kernel(len(pairs), bool(relu), residual is not None)
    out = pl.pallas_call(
        kernel,
        out_shape=jax.ShapeDtypeStruct((N, Cout, M), jnp.bfloat16),
        grid=(N, n_co, n_m, n_k),
        in_specs=in_specs,
        out_specs=pl.BlockSpec((1, TCout, TM), lambda n, co, m, k: (n, co, m)),
        scratch_shapes=[pltpu.VMEM((TCout, TM), jnp.float32)],
        compiler_params=pltpu.CompilerParams(
            dimension_semantics=("parallel", "parallel", "parallel", "arbitrary"),
            vmem_limit_bytes=_VMEM_LIMIT),
        cost_estimate=pl.CostEstimate(flops=int(flops), transcendentals=0,
                                      bytes_accessed=int(bytes_accessed)),
    )(*args)
    return out


# ------------------------- fused stride-1 3x3 conv --------------------------

@functools.lru_cache(maxsize=None)
def _conv3x3_kernel(relu, has_res, dil, Wp, M1):
    offs = tuple(ki * dil * Wp + kj * dil for ki in range(3) for kj in range(3))

    def kernel(*refs):
        if has_res:
            w_ref, x_ref, b_ref, r_ref, o_ref = refs
        else:
            w_ref, x_ref, b_ref, o_ref = refs
        acc = None
        for t, off in enumerate(offs):
            xt = x_ref[0, :, pl.ds(off, M1)]             # (Cin, M1) bf16, static offset
            part = jnp.dot(w_ref[t], xt, preferred_element_type=jnp.float32)
            acc = part if acc is None else acc + part
        acc = acc + b_ref[...]
        if has_res:
            acc = acc + r_ref[0].astype(jnp.float32)
        if relu:
            acc = jnp.maximum(acc, 0.0)
        o_ref[0] = acc.astype(o_ref.dtype)
    return kernel


def conv3x3_fused(x, w_taps, bias, dilation, relu, residual=None):
    """Fused 3x3 / stride-1 / padding=dilation conv + bias (+res) (+ReLU).

    x: (N, Cin, H, W) bf16.  No im2col: the padded image is flattened per
    sample; the 9 taps are static lane-offset slices of the resident block.
    """
    N, Cin, H, W = x.shape
    Cout = w_taps.shape[1]
    d = dilation
    Wp = W + 2 * d
    # top pad d, left/right pad d, bottom pad 2d+1 -> every tap slice of length
    # M1 = H*Wp starting at offset <= 2d*Wp + 2d stays in-bounds.
    xp = jnp.pad(x, ((0, 0), (0, 0), (d, 2 * d + 1), (d, d)))
    L = (H + 3 * d + 1) * Wp
    xf = xp.reshape(N, Cin, L)
    M1 = H * Wp

    TCout = _pick_cout_tile(Cout)
    n_co = pl.cdiv(Cout, TCout)

    args = [w_taps, xf, bias]
    in_specs = [
        pl.BlockSpec((9, TCout, Cin), lambda n, co: (0, co, 0)),
        pl.BlockSpec((1, Cin, L), lambda n, co: (n, 0, 0)),
        pl.BlockSpec((TCout, 1), lambda n, co: (co, 0)),
    ]
    if residual is not None:
        # residual (N, Cout, H, W) -> anchored layout (N, Cout, H, Wp)
        rf = jnp.pad(residual, ((0, 0), (0, 0), (0, 0), (0, Wp - W)))
        args.append(rf.reshape(N, Cout, M1))
        in_specs.append(pl.BlockSpec((1, TCout, M1), lambda n, co: (n, co, 0)))

    kernel = _conv3x3_kernel(bool(relu), residual is not None, d, Wp, M1)
    out = pl.pallas_call(
        kernel,
        out_shape=jax.ShapeDtypeStruct((N, Cout, M1), jnp.bfloat16),
        grid=(N, n_co),
        in_specs=in_specs,
        out_specs=pl.BlockSpec((1, TCout, M1), lambda n, co: (n, co, 0)),
        compiler_params=pltpu.CompilerParams(
            dimension_semantics=("parallel", "parallel"),
            vmem_limit_bytes=_VMEM_LIMIT),
        cost_estimate=pl.CostEstimate(
            flops=2 * N * Cout * Cin * 9 * M1, transcendentals=0,
            bytes_accessed=int(N * Cin * L * 2 + N * Cout * M1 * 2
                               + 9 * Cout * Cin * 2)),
    )(*args)
    # drop the Wp-W garbage columns (anchored layout -> valid layout)
    return out.reshape(N, Cout, H, Wp)[:, :, :, :W]
    # TODO(synk): tile M1 (with a lane halo) for very large spatial maps instead
    # of keeping the whole per-sample image resident in one block.


# --------------------------------- maxpool ----------------------------------

def _max4_kernel(a_ref, b_ref, c_ref, d_ref, o_ref):
    o_ref[...] = jnp.maximum(jnp.maximum(a_ref[...], b_ref[...]),
                             jnp.maximum(c_ref[...], d_ref[...]))


def maxpool2x2(x):
    """nn.MaxPool2d(2, 2) on (N, C, H, W) bf16 (odd H/W floored like PyTorch)."""
    N, C, H, W = x.shape
    Ho, Wo = H // 2, W // 2
    M = Ho * Wo
    R = N * C
    # TODO(synk): a fully fused single-read pooling kernel would cut the four
    # XLA strided-gather passes below to one HBM read.
    views = [x[:, :, i:2 * Ho:2, j:2 * Wo:2].reshape(R, M)
             for i in (0, 1) for j in (0, 1)]
    TM = _pick_m_tile(M)
    out = pl.pallas_call(
        _max4_kernel,
        out_shape=jax.ShapeDtypeStruct((R, M), x.dtype),
        grid=(pl.cdiv(M, TM),),
        in_specs=[pl.BlockSpec((R, TM), lambda m: (0, m)) for _ in range(4)],
        out_specs=pl.BlockSpec((R, TM), lambda m: (0, m)),
        compiler_params=pltpu.CompilerParams(
            dimension_semantics=("parallel",), vmem_limit_bytes=_VMEM_LIMIT),
    )(*views)
    return out.reshape(N, C, Ho, Wo)


# ------------------------------- conv wrapper --------------------------------

def _im2col(x, k, stride, padding, dilation):
    """(N, C, H, W) -> (N, C*k*k, Ho*Wo) bf16 patches (materialized).
    Only used for the (rare) strided 3x3 convs.
    # TODO(synk): fuse this gather into the matmul kernel for strided convs too.
    """
    N, C, H, W = x.shape
    xp = jnp.pad(x, ((0, 0), (0, 0), (padding, padding), (padding, padding)))
    Ho = (H + 2 * padding - dilation * (k - 1) - 1) // stride + 1
    Wo = (W + 2 * padding - dilation * (k - 1) - 1) // stride + 1
    taps = []
    for i in range(k):
        for j in range(k):
            hi, wi = i * dilation, j * dilation
            taps.append(xp[:, :, hi: hi + (Ho - 1) * stride + 1: stride,
                              wi: wi + (Wo - 1) * stride + 1: stride])
    p = jnp.stack(taps, axis=2).reshape(N, C * k * k, Ho * Wo)
    return p, Ho, Wo


def conv_bn(x, layer, relu=True, residual=None):
    """Conv2d(bias=False) + folded inference BN (+residual) (+ReLU), bf16."""
    N, Cin, H, W = x.shape
    if layer["kind"] == "fused3x3":
        return conv3x3_fused(x, layer["w"], layer["bias"], layer["dilation"],
                             relu, residual)
    k, stride = layer["k"], layer["stride"]
    padding, dilation = layer["padding"], layer["dilation"]
    Cout = layer["w"].shape[0]
    if k == 1 and stride == 1 and padding == 0:
        xf, Ho, Wo = x.reshape(N, Cin, H * W), H, W       # 1x1: no im2col
    else:
        xf, Ho, Wo = _im2col(x, k, stride, padding, dilation)
    res = None if residual is None else residual.reshape(N, Cout, Ho * Wo)
    out = fused_matmul([(layer["w"], xf)], layer["bias"], res, relu)
    return out.reshape(N, Cout, Ho, Wo)


# -------------------------------- parameters --------------------------------

class KeyGen:
    def __init__(self, seed=0):
        self._key = jax.random.PRNGKey(seed)
        self._n = 0

    def __call__(self):
        self._n += 1
        return jax.random.fold_in(self._key, self._n)


def make_conv_layer(kg, cin, cout, k, stride=1, padding=0, dilation=1):
    n = k * k * cout
    w = jax.random.normal(kg(), (cout, cin, k, k), jnp.float32) * math.sqrt(2.0 / n)
    # Inference-mode BatchNorm (PyTorch fresh-init statistics) folded into the
    # conv: the scale goes into the weights, only the bias stays in the kernel.
    # TODO(synk): training-mode batch statistics are not modeled.
    gamma = jnp.ones((cout,), jnp.float32)
    beta = jnp.zeros((cout,), jnp.float32)
    mean = jnp.zeros((cout,), jnp.float32)
    var = jnp.ones((cout,), jnp.float32)
    scale = gamma / jnp.sqrt(var + _BN_EPS)
    bias = (beta - mean * scale).reshape(cout, 1)
    w = w * scale[:, None, None, None]
    if k == 3 and stride == 1 and padding == dilation:
        w_taps = jnp.transpose(w, (2, 3, 0, 1)).reshape(9, cout, cin)
        return dict(kind="fused3x3", w=w_taps.astype(jnp.bfloat16), bias=bias,
                    dilation=dilation)
    w2d = w.reshape(cout, cin * k * k).astype(jnp.bfloat16)
    return dict(kind="matmul", w=w2d, bias=bias, k=k, stride=stride,
                padding=padding, dilation=dilation)


# ------------------------------- Tree structure ------------------------------

class BasicBlock:
    """DLA BasicBlock: conv3x3-BN-ReLU, conv3x3-BN, +residual, ReLU."""

    def __init__(self, kg, inplanes, planes, stride=1, dilation=1):
        self.l1 = make_conv_layer(kg, inplanes, planes, 3, stride=stride,
                                  padding=dilation, dilation=dilation)
        self.l2 = make_conv_layer(kg, planes, planes, 3, stride=1,
                                  padding=dilation, dilation=dilation)

    def __call__(self, x, residual=None):
        if residual is None:
            residual = x
        out = conv_bn(x, self.l1, relu=True)
        out = conv_bn(out, self.l2, relu=True, residual=residual)
        return out


class Root:
    def __init__(self, kg, in_channels, out_channels, kernel_size, residual):
        # DLA quirk preserved: the conv is 1x1 with padding=(kernel_size-1)//2.
        # TODO(synk): root_kernel_size > 1 (non-zero padding on a 1x1 conv,
        # which changes the spatial size) is not modeled; DLA uses 1.
        self.layer = make_conv_layer(kg, in_channels, out_channels, 1,
                                     stride=1, padding=(kernel_size - 1) // 2)
        self.residual = residual

    def __call__(self, *children):
        # No channel concat: split the 1x1 weight per child and accumulate the
        # partial matmuls inside a single kernel.
        N, _, H, W = children[0].shape
        w = self.layer["w"]                       # (Cout, sum_i C_i) bf16
        pairs, off = [], 0
        for c in children:
            Ci = c.shape[1]
            pairs.append((w[:, off:off + Ci], c.reshape(N, Ci, H * W)))
            off += Ci
        res = children[0].reshape(N, children[0].shape[1], H * W) if self.residual else None
        out = fused_matmul(pairs, self.layer["bias"], res, relu=True)
        return out.reshape(N, -1, H, W)


class Tree:
    def __init__(self, kg, levels, block, in_channels, out_channels, stride=1,
                 level_root=False, root_dim=0, root_kernel_size=1, dilation=1,
                 root_residual=False):
        if root_dim == 0:
            root_dim = 2 * out_channels
        if level_root:
            root_dim += in_channels
        if levels == 1:
            self.tree1 = block(kg, in_channels, out_channels, stride, dilation=dilation)
            self.tree2 = block(kg, out_channels, out_channels, 1, dilation=dilation)
        else:
            self.tree1 = Tree(kg, levels - 1, block, in_channels, out_channels, stride,
                              root_dim=0, root_kernel_size=root_kernel_size,
                              dilation=dilation, root_residual=root_residual)
            self.tree2 = Tree(kg, levels - 1, block, out_channels, out_channels,
                              root_dim=root_dim + out_channels,
                              root_kernel_size=root_kernel_size, dilation=dilation,
                              root_residual=root_residual)
        self.root = (Root(kg, root_dim, out_channels, root_kernel_size, root_residual)
                     if levels == 1 else None)
        self.level_root = level_root
        self.root_dim = root_dim
        self.levels = levels
        self.downsample = stride > 1
        if self.downsample:
            assert stride == 2      # Tree only ever uses MaxPool2d(2, 2) here
        self.project = None
        if in_channels != out_channels:
            self.project = make_conv_layer(kg, in_channels, out_channels, 1)

    def __call__(self, x, residual=None, children=None):
        children = [] if children is None else children
        bottom = maxpool2x2(x) if self.downsample else x
        residual = (conv_bn(bottom, self.project, relu=False)
                    if self.project is not None else bottom)
        if self.level_root:
            children.append(bottom)
        x1 = self.tree1(x, residual)
        if self.levels == 1:
            x2 = self.tree2(x1)
            x = self.root(x2, x1, *children)
        else:
            children.append(x1)
            x = self.tree2(x1, children=children)
        return x


def tree_forward(tree, x_nchw):
    """PyTorch-facing entry: NCHW f32 in / NCHW f32 out, bf16 activations inside."""
    x = x_nchw.astype(jnp.bfloat16)
    y = tree(x)
    return y.astype(jnp.float32)


# ------------------------------------ main -----------------------------------

if __name__ == "__main__":
    key = jax.random.PRNGKey(0)
    N, CIN, COUT, HW = 2, 8, 16, 16
    x = jax.random.normal(key, (N, CIN, HW, HW), jnp.float32)     # NCHW like PyTorch

    kg = KeyGen(seed=0)
    tree = Tree(kg, levels=2, block=BasicBlock, in_channels=CIN,
                out_channels=COUT, stride=2, level_root=True,
                root_residual=False)

    fwd = jax.jit(functools.partial(tree_forward, tree))
    out = jax.block_until_ready(fwd(x))
    assert out.shape == (N, COUT, HW // 2, HW // 2) and out.dtype == jnp.float32
    assert bool(jnp.all(jnp.isfinite(out)))
    print("KERNEL_OK")
</pallas_src>

<mosaic_0001>
module attributes {stable_mosaic.version = 11 : i64} {
  func.func @kernel(%arg0: i32, %arg1: i32, %arg2: i32, %arg3: i32, %arg4: memref<16x72xbf16, #tpu.memory_space<vmem>>, %arg5: memref<1x72x64xbf16, #tpu.memory_space<vmem>>, %arg6: memref<16x1xf32, #tpu.memory_space<vmem>>, %arg7: memref<1x16x64xbf16, #tpu.memory_space<vmem>>, %arg8: memref<16x64xf32, #tpu.memory_space<vmem>>) attributes {dimension_semantics = [#tpu.dimension_semantics<parallel>, #tpu.dimension_semantics<parallel>, #tpu.dimension_semantics<parallel>, #tpu.dimension_semantics<arbitrary>], iteration_bounds = array<i64: 2, 1, 1, 1>, scalar_prefetch = 0 : i64, scratch_operands = 1 : i64, tpu.core_type = #tpu.core_type<tc>, window_params = [{transform_indices = @transform_0, window_bounds = array<i64: 16, 72>}, {transform_indices = @transform_1, window_bounds = array<i64: 1, 72, 64>}, {transform_indices = @transform_2, window_bounds = array<i64: 16, 1>}, {transform_indices = @transform_3, window_bounds = array<i64: 1, 16, 64>}]} {
    %c0_i32 = arith.constant 0 : i32
    %0 = arith.cmpi eq, %arg3, %c0_i32 : i32
    %1 = arith.extui %0 : i1 to i32
    %c0_i32_0 = arith.constant 0 : i32
    %2 = arith.cmpi ne, %1, %c0_i32_0 : i32
    scf.if %2 {
      %cst_11 = arith.constant 0.000000e+00 : f32
      %13 = vector.broadcast %cst_11 : f32 to vector<16x64xf32>
      %c0_12 = arith.constant 0 : index
      %c0_13 = arith.constant 0 : index
      %14 = vector.load %arg8[%c0_12, %c0_13] : memref<16x64xf32, #tpu.memory_space<vmem>>, vector<16x64xf32>
      tpu.vector_store %arg8[%c0_12, %c0_13], %13 {strides = array<i32>} : memref<16x64xf32, #tpu.memory_space<vmem>>, vector<16x64xf32>,
    } else {
    }
    %c0 = arith.constant 0 : index
    %c0_1 = arith.constant 0 : index
    %3 = vector.load %arg8[%c0, %c0_1] : memref<16x64xf32, #tpu.memory_space<vmem>>, vector<16x64xf32>
    %c0_2 = arith.constant 0 : index
    %c0_3 = arith.constant 0 : index
    %4 = vector.load %arg4[%c0_2, %c0_3] : memref<16x72xbf16, #tpu.memory_space<vmem>>, vector<16x72xbf16>
    %c0_4 = arith.constant 0 : index
    %c0_5 = arith.constant 0 : index
    %c0_6 = arith.constant 0 : index
    %5 = vector.load %arg5[%c0_4, %c0_5, %c0_6] : memref<1x72x64xbf16, #tpu.memory_space<vmem>>, vector<1x72x64xbf16>
    %6 = vector.shape_cast %5 : vector<1x72x64xbf16> to vector<72x64xbf16>
    %cst = arith.constant dense<0.000000e+00> : vector<16x64xf32>
    %7 = tpu.matmul %4, %6, %cst {dimension_numbers = #tpu.dot_dimension_numbers<[1], [0], [0], [1], [0, 0, 1, 1], [], []>} : vector<16x72xbf16>, vector<72x64xbf16>, vector<16x64xf32> -> vector<16x64xf32>
    %8 = arith.addf %3, %7 : vector<16x64xf32>
    %c0_7 = arith.constant 0 : index
    %c0_8 = arith.constant 0 : index
    %9 = vector.load %arg8[%c0_7, %c0_8] : memref<16x64xf32, #tpu.memory_space<vmem>>, vector<16x64xf32>
    tpu.vector_store %arg8[%c0_7, %c0_8], %8 {strides = array<i32>} : memref<16x64xf32, #tpu.memory_space<vmem>>, vector<16x64xf32>,
    %c0_i32_9 = arith.constant 0 : i32
    %10 = arith.cmpi eq, %arg3, %c0_i32_9 : i32
    %11 = arith.extui %10 : i1 to i32
    %c0_i32_10 = arith.constant 0 : i32
    %12 = arith.cmpi ne, %11, %c0_i32_10 : i32
    scf.if %12 {
      %c0_11 = arith.constant 0 : index
      %c0_12 = arith.constant 0 : index
      %13 = vector.load %arg8[%c0_11, %c0_12] : memref<16x64xf32, #tpu.memory_space<vmem>>, vector<16x64xf32>
      %c0_13 = arith.constant 0 : index
      %c0_14 = arith.constant 0 : index
      %14 = vector.load %arg6[%c0_13, %c0_14] : memref<16x1xf32, #tpu.memory_space<vmem>>, vector<16x1xf32>
      %15 = vector.broadcast %14 : vector<16x1xf32> to vector<16x64xf32>
      %16 = arith.addf %13, %15 : vector<16x64xf32>
      %cst_15 = arith.constant 0.000000e+00 : f32
      %17 = vector.broadcast %cst_15 : f32 to vector<16x64xf32>
      %18 = arith.maximumf %16, %17 : vector<16x64xf32>
      %19 = arith.truncf %18 : vector<16x64xf32> to vector<16x64xbf16>
      %c0_16 = arith.constant 0 : index
      %c0_17 = arith.constant 0 : index
      %c0_18 = arith.constant 0 : index
      %20 = vector.load %arg7[%c0_16, %c0_17, %c0_18] : memref<1x16x64xbf16, #tpu.memory_space<vmem>>, vector<1x16x64xbf16>
      %21 = vector.shape_cast %20 : vector<1x16x64xbf16> to vector<16x64xbf16>
      %22 = vector.shape_cast %19 : vector<16x64xbf16> to vector<1x16x64xbf16>
      tpu.vector_store %arg7[%c0_16, %c0_17, %c0_18], %22 {strides = array<i32>} : memref<1x16x64xbf16, #tpu.memory_space<vmem>>, vector<1x16x64xbf16>,
    } else {
    }
    return
  }
  func.func @transform_0(%arg0: i32, %arg1: i32, %arg2: i32, %arg3: i32) -> (i32, i32) {
    %c0_i32 = arith.constant 0 : i32
    return %arg1, %arg3 : i32, i32
  }
  func.func @transform_1(%arg0: i32, %arg1: i32, %arg2: i32, %arg3: i32) -> (i32, i32, i32) {
    %c0_i32 = arith.constant 0 : i32
    return %arg0, %arg3, %arg2 : i32, i32, i32
  }
  func.func @transform_2(%arg0: i32, %arg1: i32, %arg2: i32, %arg3: i32) -> (i32, i32) {
    %c0_i32 = arith.constant 0 : i32
    %c0_i32_0 = arith.constant 0 : i32
    return %arg1, %c0_i32 : i32, i32
  }
  func.func @transform_3(%arg0: i32, %arg1: i32, %arg2: i32, %arg3: i32) -> (i32, i32, i32) {
    %c0_i32 = arith.constant 0 : i32
    return %arg0, %arg1, %arg2 : i32, i32, i32
  }
}

module attributes {stable_mosaic.version = 11 : i64} {
  func.func @kernel(%arg0: i32, %arg1: i32, %arg2: i32, %arg3: i32, %arg4: memref<16x8xbf16, #tpu.memory_space<vmem>>, %arg5: memref<1x8x64xbf16, #tpu.memory_space<vmem>>, %arg6: memref<16x1xf32, #tpu.memory_space<vmem>>, %arg7: memref<1x16x64xbf16, #tpu.memory_space<vmem>>, %arg8: memref<16x64xf32, #tpu.memory_space<vmem>>) attributes {dimension_semantics = [#tpu.dimension_semantics<parallel>, #tpu.dimension_semantics<parallel>, #tpu.dimension_semantics<parallel>, #tpu.dimension_semantics<arbitrary>], iteration_bounds = array<i64: 2, 1, 1, 1>, scalar_prefetch = 0 : i64, scratch_operands = 1 : i64, tpu.core_type = #tpu.core_type<tc>, window_params = [{transform_indices = @transform_0, window_bounds = array<i64: 16, 8>}, {transform_indices = @transform_1, window_bounds = array<i64: 1, 8, 64>}, {transform_indices = @transform_2, window_bounds = array<i64: 16, 1>}, {transform_indices = @transform_3, window_bounds = array<i64: 1, 16, 64>}]} {
    %c0_i32 = arith.constant 0 : i32
    %0 = arith.cmpi eq, %arg3, %c0_i32 : i32
    %1 = arith.extui %0 : i1 to i32
    %c0_i32_0 = arith.constant 0 : i32
    %2 = arith.cmpi ne, %1, %c0_i32_0 : i32
    scf.if %2 {
      %cst_11 = arith.constant 0.000000e+00 : f32
      %13 = vector.broadcast %cst_11 : f32 to vector<16x64xf32>
      %c0_12 = arith.constant 0 : index
      %c0_13 = arith.constant 0 : index
      %14 = vector.load %arg8[%c0_12, %c0_13] : memref<16x64xf32, #tpu.memory_space<vmem>>, vector<16x64xf32>
      tpu.vector_store %arg8[%c0_12, %c0_13], %13 {strides = array<i32>} : memref<16x64xf32, #tpu.memory_space<vmem>>, vector<16x64xf32>,
    } else {
    }
    %c0 = arith.constant 0 : index
    %c0_1 = arith.constant 0 : index
    %3 = vector.load %arg8[%c0, %c0_1] : memref<16x64xf32, #tpu.memory_space<vmem>>, vector<16x64xf32>
    %c0_2 = arith.constant 0 : index
    %c0_3 = arith.constant 0 : index
    %4 = vector.load %arg4[%c0_2, %c0_3] : memref<16x8xbf16, #tpu.memory_space<vmem>>, vector<16x8xbf16>
    %c0_4 = arith.constant 0 : index
    %c0_5 = arith.constant 0 : index
    %c0_6 = arith.constant 0 : index
    %5 = vector.load %arg5[%c0_4, %c0_5, %c0_6] : memref<1x8x64xbf16, #tpu.memory_space<vmem>>, vector<1x8x64xbf16>
    %6 = vector.shape_cast %5 : vector<1x8x64xbf16> to vector<8x64xbf16>
    %cst = arith.constant dense<0.000000e+00> : vector<16x64xf32>
    %7 = tpu.matmul %4, %6, %cst {dimension_numbers = #tpu.dot_dimension_numbers<[1], [0], [0], [1], [0, 0, 1, 1], [], []>} : vector<16x8xbf16>, vector<8x64xbf16>, vector<16x64xf32> -> vector<16x64xf32>
    %8 = arith.addf %3, %7 : vector<16x64xf32>
    %c0_7 = arith.constant 0 : index
    %c0_8 = arith.constant 0 : index
    %9 = vector.load %arg8[%c0_7, %c0_8] : memref<16x64xf32, #tpu.memory_space<vmem>>, vector<16x64xf32>
    tpu.vector_store %arg8[%c0_7, %c0_8], %8 {strides = array<i32>} : memref<16x64xf32, #tpu.memory_space<vmem>>, vector<16x64xf32>,
    %c0_i32_9 = arith.constant 0 : i32
    %10 = arith.cmpi eq, %arg3, %c0_i32_9 : i32
    %11 = arith.extui %10 : i1 to i32
    %c0_i32_10 = arith.constant 0 : i32
    %12 = arith.cmpi ne, %11, %c0_i32_10 : i32
    scf.if %12 {
      %c0_11 = arith.constant 0 : index
      %c0_12 = arith.constant 0 : index
      %13 = vector.load %arg8[%c0_11, %c0_12] : memref<16x64xf32, #tpu.memory_space<vmem>>, vector<16x64xf32>
      %c0_13 = arith.constant 0 : index
      %c0_14 = arith.constant 0 : index
      %14 = vector.load %arg6[%c0_13, %c0_14] : memref<16x1xf32, #tpu.memory_space<vmem>>, vector<16x1xf32>
      %15 = vector.broadcast %14 : vector<16x1xf32> to vector<16x64xf32>
      %16 = arith.addf %13, %15 : vector<16x64xf32>
      %17 = arith.truncf %16 : vector<16x64xf32> to vector<16x64xbf16>
      %c0_15 = arith.constant 0 : index
      %c0_16 = arith.constant 0 : index
      %c0_17 = arith.constant 0 : index
      %18 = vector.load %arg7[%c0_15, %c0_16, %c0_17] : memref<1x16x64xbf16, #tpu.memory_space<vmem>>, vector<1x16x64xbf16>
      %19 = vector.shape_cast %18 : vector<1x16x64xbf16> to vector<16x64xbf16>
      %20 = vector.shape_cast %17 : vector<16x64xbf16> to vector<1x16x64xbf16>
      tpu.vector_store %arg7[%c0_15, %c0_16, %c0_17], %20 {strides = array<i32>} : memref<1x16x64xbf16, #tpu.memory_space<vmem>>, vector<1x16x64xbf16>,
    } else {
    }
    return
  }
  func.func @transform_0(%arg0: i32, %arg1: i32, %arg2: i32, %arg3: i32) -> (i32, i32) {
    %c0_i32 = arith.constant 0 : i32
    return %arg1, %arg3 : i32, i32
  }
  func.func @transform_1(%arg0: i32, %arg1: i32, %arg2: i32, %arg3: i32) -> (i32, i32, i32) {
    %c0_i32 = arith.constant 0 : i32
    return %arg0, %arg3, %arg2 : i32, i32, i32
  }
  func.func @transform_2(%arg0: i32, %arg1: i32, %arg2: i32, %arg3: i32) -> (i32, i32) {
    %c0_i32 = arith.constant 0 : i32
    %c0_i32_0 = arith.constant 0 : i32
    return %arg1, %c0_i32 : i32, i32
  }
  func.func @transform_3(%arg0: i32, %arg1: i32, %arg2: i32, %arg3: i32) -> (i32, i32, i32) {
    %c0_i32 = arith.constant 0 : i32
    return %arg0, %arg1, %arg2 : i32, i32, i32
  }
}

module attributes {stable_mosaic.version = 11 : i64} {
  func.func @_max4_kernel(%arg0: i32, %arg1: memref<16x64xbf16, #tpu.memory_space<vmem>>, %arg2: memref<16x64xbf16, #tpu.memory_space<vmem>>, %arg3: memref<16x64xbf16, #tpu.memory_space<vmem>>, %arg4: memref<16x64xbf16, #tpu.memory_space<vmem>>, %arg5: memref<16x64xbf16, #tpu.memory_space<vmem>>) attributes {dimension_semantics = [#tpu.dimension_semantics<parallel>], iteration_bounds = array<i64: 1>, scalar_prefetch = 0 : i64, scratch_operands = 0 : i64, tpu.core_type = #tpu.core_type<tc>, window_params = [{transform_indices = @transform_0, window_bounds = array<i64: 16, 64>}, {transform_indices = @transform_1, window_bounds = array<i64: 16, 64>}, {transform_indices = @transform_2, window_bounds = array<i64: 16, 64>}, {transform_indices = @transform_3, window_bounds = array<i64: 16, 64>}, {transform_indices = @transform_4, window_bounds = array<i64: 16, 64>}]} {
    %c0 = arith.constant 0 : index
    %c0_0 = arith.constant 0 : index
    %0 = vector.load %arg1[%c0, %c0_0] : memref<16x64xbf16, #tpu.memory_space<vmem>>, vector<16x64xbf16>
    %c0_1 = arith.constant 0 : index
    %c0_2 = arith.constant 0 : index
    %1 = vector.load %arg2[%c0_1, %c0_2] : memref<16x64xbf16, #tpu.memory_space<vmem>>, vector<16x64xbf16>
    %2 = arith.maximumf %0, %1 : vector<16x64xbf16>
    %c0_3 = arith.constant 0 : index
    %c0_4 = arith.constant 0 : index
    %3 = vector.load %arg3[%c0_3, %c0_4] : memref<16x64xbf16, #tpu.memory_space<vmem>>, vector<16x64xbf16>
    %c0_5 = arith.constant 0 : index
    %c0_6 = arith.constant 0 : index
    %4 = vector.load %arg4[%c0_5, %c0_6] : memref<16x64xbf16, #tpu.memory_space<vmem>>, vector<16x64xbf16>
    %5 = arith.maximumf %3, %4 : vector<16x64xbf16>
    %6 = arith.maximumf %2, %5 : vector<16x64xbf16>
    %c0_7 = arith.constant 0 : index
    %c0_8 = arith.constant 0 : index
    %7 = vector.load %arg5[%c0_7, %c0_8] : memref<16x64xbf16, #tpu.memory_space<vmem>>, vector<16x64xbf16>
    tpu.vector_store %arg5[%c0_7, %c0_8], %6 {strides = array<i32>} : memref<16x64xbf16, #tpu.memory_space<vmem>>, vector<16x64xbf16>,
    return
  }
  func.func @transform_0(%arg0: i32) -> (i32, i32) {
    %c0_i32 = arith.constant 0 : i32
    %c0_i32_0 = arith.constant 0 : i32
    return %c0_i32, %arg0 : i32, i32
  }
  func.func @transform_1(%arg0: i32) -> (i32, i32) {
    %c0_i32 = arith.constant 0 : i32
    %c0_i32_0 = arith.constant 0 : i32
    return %c0_i32, %arg0 : i32, i32
  }
  func.func @transform_2(%arg0: i32) -> (i32, i32) {
    %c0_i32 = arith.constant 0 : i32
    %c0_i32_0 = arith.constant 0 : i32
    return %c0_i32, %arg0 : i32, i32
  }
  func.func @transform_3(%arg0: i32) -> (i32, i32) {
    %c0_i32 = arith.constant 0 : i32
    %c0_i32_0 = arith.constant 0 : i32
    return %c0_i32, %arg0 : i32, i32
  }
  func.func @transform_4(%arg0: i32) -> (i32, i32) {
    %c0_i32 = arith.constant 0 : i32
    %c0_i32_0 = arith.constant 0 : i32
    return %c0_i32, %arg0 : i32, i32
  }
}

module attributes {stable_mosaic.version = 11 : i64} {
  func.func @kernel(%arg0: i32, %arg1: i32, %arg2: memref<9x16x16xbf16, #tpu.memory_space<vmem>>, %arg3: memref<1x16x120xbf16, #tpu.memory_space<vmem>>, %arg4: memref<16x1xf32, #tpu.memory_space<vmem>>, %arg5: memref<1x16x80xbf16, #tpu.memory_space<vmem>>, %arg6: memref<1x16x80xbf16, #tpu.memory_space<vmem>>) attributes {dimension_semantics = [#tpu.dimension_semantics<parallel>, #tpu.dimension_semantics<parallel>], iteration_bounds = array<i64: 2, 1>, scalar_prefetch = 0 : i64, scratch_operands = 0 : i64, tpu.core_type = #tpu.core_type<tc>, window_params = [{transform_indices = @transform_0, window_bounds = array<i64: 9, 16, 16>}, {transform_indices = @transform_1, window_bounds = array<i64: 1, 16, 120>}, {transform_indices = @transform_2, window_bounds = array<i64: 16, 1>}, {transform_indices = @transform_3, window_bounds = array<i64: 1, 16, 80>}, {transform_indices = @transform_4, window_bounds = array<i64: 1, 16, 80>}]} {
    %c0 = arith.constant 0 : index
    %c0_0 = arith.constant 0 : index
    %c0_1 = arith.constant 0 : index
    %0 = vector.load %arg3[%c0, %c0_0, %c0_1] : memref<1x16x120xbf16, #tpu.memory_space<vmem>>, vector<1x16x80xbf16>
    %1 = vector.shape_cast %0 : vector<1x16x80xbf16> to vector<16x80xbf16>
    %c0_2 = arith.constant 0 : index
    %c0_3 = arith.constant 0 : index
    %c0_4 = arith.constant 0 : index
    %2 = vector.load %arg2[%c0_2, %c0_3, %c0_4] : memref<9x16x16xbf16, #tpu.memory_space<vmem>>, vector<1x16x16xbf16>
    %3 = vector.shape_cast %2 : vector<1x16x16xbf16> to vector<16x16xbf16>
    %cst = arith.constant dense<0.000000e+00> : vector<16x80xf32>
    %4 = tpu.matmul %3, %1, %cst {dimension_numbers = #tpu.dot_dimension_numbers<[1], [0], [0], [1], [0, 0, 1, 1], [], []>} : vector<16x16xbf16>, vector<16x80xbf16>, vector<16x80xf32> -> vector<16x80xf32>
    %c0_5 = arith.constant 0 : index
    %c0_6 = arith.constant 0 : index
    %c1 = arith.constant 1 : index
    %5 = vector.load %arg3[%c0_5, %c0_6, %c1] : memref<1x16x120xbf16, #tpu.memory_space<vmem>>, vector<1x16x80xbf16>
    %6 = vector.shape_cast %5 : vector<1x16x80xbf16> to vector<16x80xbf16>
    %c1_7 = arith.constant 1 : index
    %c0_8 = arith.constant 0 : index
    %c0_9 = arith.constant 0 : index
    %7 = vector.load %arg2[%c1_7, %c0_8, %c0_9] : memref<9x16x16xbf16, #tpu.memory_space<vmem>>, vector<1x16x16xbf16>
    %8 = vector.shape_cast %7 : vector<1x16x16xbf16> to vector<16x16xbf16>
    %cst_10 = arith.constant dense<0.000000e+00> : vector<16x80xf32>
    %9 = tpu.matmul %8, %6, %cst_10 {dimension_numbers = #tpu.dot_dimension_numbers<[1], [0], [0], [1], [0, 0, 1, 1], [], []>} : vector<16x16xbf16>, vector<16x80xbf16>, vector<16x80xf32> -> vector<16x80xf32>
    %10 = arith.addf %4, %9 : vector<16x80xf32>
    %c0_11 = arith.constant 0 : index
    %c0_12 = arith.constant 0 : index
    %c2 = arith.constant 2 : index
    %11 = vector.load %arg3[%c0_11, %c0_12, %c2] : memref<1x16x120xbf16, #tpu.memory_space<vmem>>, vector<1x16x80xbf16>
    %12 = vector.shape_cast %11 : vector<1x16x80xbf16> to vector<16x80xbf16>
    %c2_13 = arith.constant 2 : index
    %c0_14 = arith.constant 0 : index
    %c0_15 = arith.constant 0 : index
    %13 = vector.load %arg2[%c2_13, %c0_14, %c0_15] : memref<9x16x16xbf16, #tpu.memory_space<vmem>>, vector<1x16x16xbf16>
    %14 = vector.shape_cast %13 : vector<1x16x16xbf16> to vector<16x16xbf16>
    %cst_16 = arith.constant dense<0.000000e+00> : vector<16x80xf32>
    %15 = tpu.matmul %14, %12, %cst_16 {dimension_numbers = #tpu.dot_dimension_numbers<[1], [0], [0], [1], [0, 0, 1, 1], [], []>} : vector<16x16xbf16>, vector<16x80xbf16>, vector<16x80xf32> -> vector<16x80xf32>
    %16 = arith.addf %10, %15 : vector<16x80xf32>
    %c0_17 = arith.constant 0 : index
    %c0_18 = arith.constant 0 : index
    %c10 = arith.constant 10 : index
    %17 = vector.load %arg3[%c0_17, %c0_18, %c10] : memref<1x16x120xbf16, #tpu.memory_space<vmem>>, vector<1x16x80xbf16>
    %18 = vector.shape_cast %17 : vector<1x16x80xbf16> to vector<16x80xbf16>
    %c3 = arith.constant 3 : index
    %c0_19 = arith.constant 0 : index
    %c0_20 = arith.constant 0 : index
    %19 = vector.load %arg2[%c3, %c0_19, %c0_20] : memref<9x16x16xbf16, #tpu.memory_space<vmem>>, vector<1x16x16xbf16>
    %20 = vector.shape_cast %19 : vector<1x16x16xbf16> to vector<16x16xbf16>
    %cst_21 = arith.constant dense<0.000000e+00> : vector<16x80xf32>
    %21 = tpu.matmul %20, %18, %cst_21 {dimension_numbers = #tpu.dot_dimension_numbers<[1], [0], [0], [1], [0, 0, 1, 1], [], []>} : vector<16x16xbf16>, vector<16x80xbf16>, vector<16x80xf32> -> vector<16x80xf32>
    %22 = arith.addf %16, %21 : vector<16x80xf32>
    %c0_22 = arith.constant 0 : index
    %c0_23 = arith.constant 0 : index
    %c11 = arith.constant 11 : index
    %23 = vector.load %arg3[%c0_22, %c0_23, %c11] : memref<1x16x120xbf16, #tpu.memory_space<vmem>>, vector<1x16x80xbf16>
    %24 = vector.shape_cast %23 : vector<1x16x80xbf16> to vector<16x80xbf16>
    %c4 = arith.constant 4 : index
    %c0_24 = arith.constant 0 : index
    %c0_25 = arith.constant 0 : index
    %25 = vector.load %arg2[%c4, %c0_24, %c0_25] : memref<9x16x16xbf16, #tpu.memory_space<vmem>>, vector<1x16x16xbf16>
    %26 = vector.shape_cast %25 : vector<1x16x16xbf16> to vector<16x16xbf16>
    %cst_26 = arith.constant dense<0.000000e+00> : vector<16x80xf32>
    %27 = tpu.matmul %26, %24, %cst_26 {dimension_numbers = #tpu.dot_dimension_numbers<[1], [0], [0], [1], [0, 0, 1, 1], [], []>} : vector<16x16xbf16>, vector<16x80xbf16>, vector<16x80xf32> -> vector<16x80xf32>
    %28 = arith.addf %22, %27 : vector<16x80xf32>
    %c0_27 = arith.constant 0 : index
    %c0_28 = arith.constant 0 : index
    %c12 = arith.constant 12 : index
    %29 = vector.load %arg3[%c0_27, %c0_28, %c12] : memref<1x16x120xbf16, #tpu.memory_space<vmem>>, vector<1x16x80xbf16>
    %30 = vector.shape_cast %29 : vector<1x16x80xbf16> to vector<16x80xbf16>
    %c5 = arith.constant 5 : index
    %c0_29 = arith.constant 0 : index
    %c0_30 = arith.constant 0 : index
    %31 = vector.load %arg2[%c5, %c0_29, %c0_30] : memref<9x16x16xbf16, #tpu.memory_space<vmem>>, vector<1x16x16xbf16>
    %32 = vector.shape_cast %31 : vector<1x16x16xbf16> to vector<16x16xbf16>
    %cst_31 = arith.constant dense<0.000000e+00> : vector<16x80xf32>
    %33 = tpu.matmul %32, %30, %cst_31 {dimension_numbers = #tpu.dot_dimension_numbers<[1], [0], [0], [1], [0, 0, 1, 1], [], []>} : vector<16x16xbf16>, vector<16x80xbf16>, vector<16x80xf32> -> vector<16x80xf32>
    %34 = arith.addf %28, %33 : vector<16x80xf32>
    %c0_32 = arith.constant 0 : index
    %c0_33 = arith.constant 0 : index
    %c20 = arith.constant 20 : index
    %35 = vector.load %arg3[%c0_32, %c0_33, %c20] : memref<1x16x120xbf16, #tpu.memory_space<vmem>>, vector<1x16x80xbf16>
    %36 = vector.shape_cast %35 : vector<1x16x80xbf16> to vector<16x80xbf16>
    %c6 = arith.constant 6 : index
    %c0_34 = arith.constant 0 : index
    %c0_35 = arith.constant 0 : index
    %37 = vector.load %arg2[%c6, %c0_34, %c0_35] : memref<9x16x16xbf16, #tpu.memory_space<vmem>>, vector<1x16x16xbf16>
    %38 = vector.shape_cast %37 : vector<1x16x16xbf16> to vector<16x16xbf16>
    %cst_36 = arith.constant dense<0.000000e+00> : vector<16x80xf32>
    %39 = tpu.matmul %38, %36, %cst_36 {dimension_numbers = #tpu.dot_dimension_numbers<[1], [0], [0], [1], [0, 0, 1, 1], [], []>} : vector<16x16xbf16>, vector<16x80xbf16>, vector<16x80xf32> -> vector<16x80xf32>
    %40 = arith.addf %34, %39 : vector<16x80xf32>
    %c0_37 = arith.constant 0 : index
    %c0_38 = arith.constant 0 : index
    %c21 = arith.constant 21 : index
    %41 = vector.load %arg3[%c0_37, %c0_38, %c21] : memref<1x16x120xbf16, #tpu.memory_space<vmem>>, vector<1x16x80xbf16>
    %42 = vector.shape_cast %41 : vector<1x16x80xbf16> to vector<16x80xbf16>
    %c7 = arith.constant 7 : index
    %c0_39 = arith.constant 0 : index
    %c0_40 = arith.constant 0 : index
    %43 = vector.load %arg2[%c7, %c0_39, %c0_40] : memref<9x16x16xbf16, #tpu.memory_space<vmem>>, vector<1x16x16xbf16>
    %44 = vector.shape_cast %43 : vector<1x16x16xbf16> to vector<16x16xbf16>
    %cst_41 = arith.constant dense<0.000000e+00> : vector<16x80xf32>
    %45 = tpu.matmul %44, %42, %cst_41 {dimension_numbers = #tpu.dot_dimension_numbers<[1], [0], [0], [1], [0, 0, 1, 1], [], []>} : vector<16x16xbf16>, vector<16x80xbf16>, vector<16x80xf32> -> vector<16x80xf32>
    %46 = arith.addf %40, %45 : vector<16x80xf32>
    %c0_42 = arith.constant 0 : index
    %c0_43 = arith.constant 0 : index
    %c22 = arith.constant 22 : index
    %47 = vector.load %arg3[%c0_42, %c0_43, %c22] : memref<1x16x120xbf16, #tpu.memory_space<vmem>>, vector<1x16x80xbf16>
    %48 = vector.shape_cast %47 : vector<1x16x80xbf16> to vector<16x80xbf16>
    %c8 = arith.constant 8 : index
    %c0_44 = arith.constant 0 : index
    %c0_45 = arith.constant 0 : index
    %49 = vector.load %arg2[%c8, %c0_44, %c0_45] : memref<9x16x16xbf16, #tpu.memory_space<vmem>>, vector<1x16x16xbf16>
    %50 = vector.shape_cast %49 : vector<1x16x16xbf16> to vector<16x16xbf16>
    %cst_46 = arith.constant dense<0.000000e+00> : vector<16x80xf32>
    %51 = tpu.matmul %50, %48, %cst_46 {dimension_numbers = #tpu.dot_dimension_numbers<[1], [0], [0], [1], [0, 0, 1, 1], [], []>} : vector<16x16xbf16>, vector<16x80xbf16>, vector<16x80xf32> -> vector<16x80xf32>
    %52 = arith.addf %46, %51 : vector<16x80xf32>
    %c0_47 = arith.constant 0 : index
    %c0_48 = arith.constant 0 : index
    %53 = vector.load %arg4[%c0_47, %c0_48] : memref<16x1xf32, #tpu.memory_space<vmem>>, vector<16x1xf32>
    %54 = vector.broadcast %53 : vector<16x1xf32> to vector<16x80xf32>
    %55 = arith.addf %52, %54 : vector<16x80xf32>
    %c0_49 = arith.constant 0 : index
    %c0_50 = arith.constant 0 : index
    %c0_51 = arith.constant 0 : index
    %56 = vector.load %arg5[%c0_49, %c0_50, %c0_51] : memref<1x16x80xbf16, #tpu.memory_space<vmem>>, vector<1x16x80xbf16>
    %57 = vector.shape_cast %56 : vector<1x16x80xbf16> to vector<16x80xbf16>
    %58 = arith.extf %57 : vector<16x80xbf16> to vector<16x80xf32>
    %59 = arith.addf %55, %58 : vector<16x80xf32>
    %cst_52 = arith.constant 0.000000e+00 : f32
    %60 = vector.broadcast %cst_52 : f32 to vector<16x80xf32>
    %61 = arith.maximumf %59, %60 : vector<16x80xf32>
    %62 = arith.truncf %61 : vector<16x80xf32> to vector<16x80xbf16>
    %c0_53 = arith.constant 0 : index
    %c0_54 = arith.constant 0 : index
    %c0_55 = arith.constant 0 : index
    %63 = vector.load %arg6[%c0_53, %c0_54, %c0_55] : memref<1x16x80xbf16, #tpu.memory_space<vmem>>, vector<1x16x80xbf16>
    %64 = vector.shape_cast %63 : vector<1x16x80xbf16> to vector<16x80xbf16>
    %65 = vector.shape_cast %62 : vector<16x80xbf16> to vector<1x16x80xbf16>
    tpu.vector_store %arg6[%c0_53, %c0_54, %c0_55], %65 {strides = array<i32>} : memref<1x16x80xbf16, #tpu.memory_space<vmem>>, vector<1x16x80xbf16>,
    return
  }
  func.func @transform_0(%arg0: i32, %arg1: i32) -> (i32, i32, i32) {
    %c0_i32 = arith.constant 0 : i32
    %c0_i32_0 = arith.constant 0 : i32
    %c0_i32_1 = arith.constant 0 : i32
    return %c0_i32, %arg1, %c0_i32_0 : i32, i32, i32
  }
  func.func @transform_1(%arg0: i32, %arg1: i32) -> (i32, i32, i32) {
    %c0_i32 = arith.constant 0 : i32
    %c0_i32_0 = arith.constant 0 : i32
    %c0_i32_1 = arith.constant 0 : i32
    return %arg0, %c0_i32, %c0_i32_0 : i32, i32, i32
  }
  func.func @transform_2(%arg0: i32, %arg1: i32) -> (i32, i32) {
    %c0_i32 = arith.constant 0 : i32
    %c0_i32_0 = arith.constant 0 : i32
    return %arg1, %c0_i32 : i32, i32
  }
  func.func @transform_3(%arg0: i32, %arg1: i32) -> (i32, i32, i32) {
    %c0_i32 = arith.constant 0 : i32
    %c0_i32_0 = arith.constant 0 : i32
    return %arg0, %arg1, %c0_i32 : i32, i32, i32
  }
  func.func @transform_4(%arg0: i32, %arg1: i32) -> (i32, i32, i32) {
    %c0_i32 = arith.constant 0 : i32
    %c0_i32_0 = arith.constant 0 : i32
    return %arg0, %arg1, %c0_i32 : i32, i32, i32
  }
}

module attributes {stable_mosaic.version = 11 : i64} {
  func.func @kernel(%arg0: i32, %arg1: i32, %arg2: memref<9x16x16xbf16, #tpu.memory_space<vmem>>, %arg3: memref<1x16x120xbf16, #tpu.memory_space<vmem>>, %arg4: memref<16x1xf32, #tpu.memory_space<vmem>>, %arg5: memref<1x16x80xbf16, #tpu.memory_space<vmem>>) attributes {dimension_semantics = [#tpu.dimension_semantics<parallel>, #tpu.dimension_semantics<parallel>], iteration_bounds = array<i64: 2, 1>, scalar_prefetch = 0 : i64, scratch_operands = 0 : i64, tpu.core_type = #tpu.core_type<tc>, window_params = [{transform_indices = @transform_0, window_bounds = array<i64: 9, 16, 16>}, {transform_indices = @transform_1, window_bounds = array<i64: 1, 16, 120>}, {transform_indices = @transform_2, window_bounds = array<i64: 16, 1>}, {transform_indices = @transform_3, window_bounds = array<i64: 1, 16, 80>}]} {
    %c0 = arith.constant 0 : index
    %c0_0 = arith.constant 0 : index
    %c0_1 = arith.constant 0 : index
    %0 = vector.load %arg3[%c0, %c0_0, %c0_1] : memref<1x16x120xbf16, #tpu.memory_space<vmem>>, vector<1x16x80xbf16>
    %1 = vector.shape_cast %0 : vector<1x16x80xbf16> to vector<16x80xbf16>
    %c0_2 = arith.constant 0 : index
    %c0_3 = arith.constant 0 : index
    %c0_4 = arith.constant 0 : index
    %2 = vector.load %arg2[%c0_2, %c0_3, %c0_4] : memref<9x16x16xbf16, #tpu.memory_space<vmem>>, vector<1x16x16xbf16>
    %3 = vector.shape_cast %2 : vector<1x16x16xbf16> to vector<16x16xbf16>
    %cst = arith.constant dense<0.000000e+00> : vector<16x80xf32>
    %4 = tpu.matmul %3, %1, %cst {dimension_numbers = #tpu.dot_dimension_numbers<[1], [0], [0], [1], [0, 0, 1, 1], [], []>} : vector<16x16xbf16>, vector<16x80xbf16>, vector<16x80xf32> -> vector<16x80xf32>
    %c0_5 = arith.constant 0 : index
    %c0_6 = arith.constant 0 : index
    %c1 = arith.constant 1 : index
    %5 = vector.load %arg3[%c0_5, %c0_6, %c1] : memref<1x16x120xbf16, #tpu.memory_space<vmem>>, vector<1x16x80xbf16>
    %6 = vector.shape_cast %5 : vector<1x16x80xbf16> to vector<16x80xbf16>
    %c1_7 = arith.constant 1 : index
    %c0_8 = arith.constant 0 : index
    %c0_9 = arith.constant 0 : index
    %7 = vector.load %arg2[%c1_7, %c0_8, %c0_9] : memref<9x16x16xbf16, #tpu.memory_space<vmem>>, vector<1x16x16xbf16>
    %8 = vector.shape_cast %7 : vector<1x16x16xbf16> to vector<16x16xbf16>
    %cst_10 = arith.constant dense<0.000000e+00> : vector<16x80xf32>
    %9 = tpu.matmul %8, %6, %cst_10 {dimension_numbers = #tpu.dot_dimension_numbers<[1], [0], [0], [1], [0, 0, 1, 1], [], []>} : vector<16x16xbf16>, vector<16x80xbf16>, vector<16x80xf32> -> vector<16x80xf32>
    %10 = arith.addf %4, %9 : vector<16x80xf32>
    %c0_11 = arith.constant 0 : index
    %c0_12 = arith.constant 0 : index
    %c2 = arith.constant 2 : index
    %11 = vector.load %arg3[%c0_11, %c0_12, %c2] : memref<1x16x120xbf16, #tpu.memory_space<vmem>>, vector<1x16x80xbf16>
    %12 = vector.shape_cast %11 : vector<1x16x80xbf16> to vector<16x80xbf16>
    %c2_13 = arith.constant 2 : index
    %c0_14 = arith.constant 0 : index
    %c0_15 = arith.constant 0 : index
    %13 = vector.load %arg2[%c2_13, %c0_14, %c0_15] : memref<9x16x16xbf16, #tpu.memory_space<vmem>>, vector<1x16x16xbf16>
    %14 = vector.shape_cast %13 : vector<1x16x16xbf16> to vector<16x16xbf16>
    %cst_16 = arith.constant dense<0.000000e+00> : vector<16x80xf32>
    %15 = tpu.matmul %14, %12, %cst_16 {dimension_numbers = #tpu.dot_dimension_numbers<[1], [0], [0], [1], [0, 0, 1, 1], [], []>} : vector<16x16xbf16>, vector<16x80xbf16>, vector<16x80xf32> -> vector<16x80xf32>
    %16 = arith.addf %10, %15 : vector<16x80xf32>
    %c0_17 = arith.constant 0 : index
    %c0_18 = arith.constant 0 : index
    %c10 = arith.constant 10 : index
    %17 = vector.load %arg3[%c0_17, %c0_18, %c10] : memref<1x16x120xbf16, #tpu.memory_space<vmem>>, vector<1x16x80xbf16>
    %18 = vector.shape_cast %17 : vector<1x16x80xbf16> to vector<16x80xbf16>
    %c3 = arith.constant 3 : index
    %c0_19 = arith.constant 0 : index
    %c0_20 = arith.constant 0 : index
    %19 = vector.load %arg2[%c3, %c0_19, %c0_20] : memref<9x16x16xbf16, #tpu.memory_space<vmem>>, vector<1x16x16xbf16>
    %20 = vector.shape_cast %19 : vector<1x16x16xbf16> to vector<16x16xbf16>
    %cst_21 = arith.constant dense<0.000000e+00> : vector<16x80xf32>
    %21 = tpu.matmul %20, %18, %cst_21 {dimension_numbers = #tpu.dot_dimension_numbers<[1], [0], [0], [1], [0, 0, 1, 1], [], []>} : vector<16x16xbf16>, vector<16x80xbf16>, vector<16x80xf32> -> vector<16x80xf32>
    %22 = arith.addf %16, %21 : vector<16x80xf32>
    %c0_22 = arith.constant 0 : index
    %c0_23 = arith.constant 0 : index
    %c11 = arith.constant 11 : index
    %23 = vector.load %arg3[%c0_22, %c0_23, %c11] : memref<1x16x120xbf16, #tpu.memory_space<vmem>>, vector<1x16x80xbf16>
    %24 = vector.shape_cast %23 : vector<1x16x80xbf16> to vector<16x80xbf16>
    %c4 = arith.constant 4 : index
    %c0_24 = arith.constant 0 : index
    %c0_25 = arith.constant 0 : index
    %25 = vector.load %arg2[%c4, %c0_24, %c0_25] : memref<9x16x16xbf16, #tpu.memory_space<vmem>>, vector<1x16x16xbf16>
    %26 = vector.shape_cast %25 : vector<1x16x16xbf16> to vector<16x16xbf16>
    %cst_26 = arith.constant dense<0.000000e+00> : vector<16x80xf32>
    %27 = tpu.matmul %26, %24, %cst_26 {dimension_numbers = #tpu.dot_dimension_numbers<[1], [0], [0], [1], [0, 0, 1, 1], [], []>} : vector<16x16xbf16>, vector<16x80xbf16>, vector<16x80xf32> -> vector<16x80xf32>
    %28 = arith.addf %22, %27 : vector<16x80xf32>
    %c0_27 = arith.constant 0 : index
    %c0_28 = arith.constant 0 : index
    %c12 = arith.constant 12 : index
    %29 = vector.load %arg3[%c0_27, %c0_28, %c12] : memref<1x16x120xbf16, #tpu.memory_space<vmem>>, vector<1x16x80xbf16>
    %30 = vector.shape_cast %29 : vector<1x16x80xbf16> to vector<16x80xbf16>
    %c5 = arith.constant 5 : index
    %c0_29 = arith.constant 0 : index
    %c0_30 = arith.constant 0 : index
    %31 = vector.load %arg2[%c5, %c0_29, %c0_30] : memref<9x16x16xbf16, #tpu.memory_space<vmem>>, vector<1x16x16xbf16>
    %32 = vector.shape_cast %31 : vector<1x16x16xbf16> to vector<16x16xbf16>
    %cst_31 = arith.constant dense<0.000000e+00> : vector<16x80xf32>
    %33 = tpu.matmul %32, %30, %cst_31 {dimension_numbers = #tpu.dot_dimension_numbers<[1], [0], [0], [1], [0, 0, 1, 1], [], []>} : vector<16x16xbf16>, vector<16x80xbf16>, vector<16x80xf32> -> vector<16x80xf32>
    %34 = arith.addf %28, %33 : vector<16x80xf32>
    %c0_32 = arith.constant 0 : index
    %c0_33 = arith.constant 0 : index
    %c20 = arith.constant 20 : index
    %35 = vector.load %arg3[%c0_32, %c0_33, %c20] : memref<1x16x120xbf16, #tpu.memory_space<vmem>>, vector<1x16x80xbf16>
    %36 = vector.shape_cast %35 : vector<1x16x80xbf16> to vector<16x80xbf16>
    %c6 = arith.constant 6 : index
    %c0_34 = arith.constant 0 : index
    %c0_35 = arith.constant 0 : index
    %37 = vector.load %arg2[%c6, %c0_34, %c0_35] : memref<9x16x16xbf16, #tpu.memory_space<vmem>>, vector<1x16x16xbf16>
    %38 = vector.shape_cast %37 : vector<1x16x16xbf16> to vector<16x16xbf16>
    %cst_36 = arith.constant dense<0.000000e+00> : vector<16x80xf32>
    %39 = tpu.matmul %38, %36, %cst_36 {dimension_numbers = #tpu.dot_dimension_numbers<[1], [0], [0], [1], [0, 0, 1, 1], [], []>} : vector<16x16xbf16>, vector<16x80xbf16>, vector<16x80xf32> -> vector<16x80xf32>
    %40 = arith.addf %34, %39 : vector<16x80xf32>
    %c0_37 = arith.constant 0 : index
    %c0_38 = arith.constant 0 : index
    %c21 = arith.constant 21 : index
    %41 = vector.load %arg3[%c0_37, %c0_38, %c21] : memref<1x16x120xbf16, #tpu.memory_space<vmem>>, vector<1x16x80xbf16>
    %42 = vector.shape_cast %41 : vector<1x16x80xbf16> to vector<16x80xbf16>
    %c7 = arith.constant 7 : index
    %c0_39 = arith.constant 0 : index
    %c0_40 = arith.constant 0 : index
    %43 = vector.load %arg2[%c7, %c0_39, %c0_40] : memref<9x16x16xbf16, #tpu.memory_space<vmem>>, vector<1x16x16xbf16>
    %44 = vector.shape_cast %43 : vector<1x16x16xbf16> to vector<16x16xbf16>
    %cst_41 = arith.constant dense<0.000000e+00> : vector<16x80xf32>
    %45 = tpu.matmul %44, %42, %cst_41 {dimension_numbers = #tpu.dot_dimension_numbers<[1], [0], [0], [1], [0, 0, 1, 1], [], []>} : vector<16x16xbf16>, vector<16x80xbf16>, vector<16x80xf32> -> vector<16x80xf32>
    %46 = arith.addf %40, %45 : vector<16x80xf32>
    %c0_42 = arith.constant 0 : index
    %c0_43 = arith.constant 0 : index
    %c22 = arith.constant 22 : index
    %47 = vector.load %arg3[%c0_42, %c0_43, %c22] : memref<1x16x120xbf16, #tpu.memory_space<vmem>>, vector<1x16x80xbf16>
    %48 = vector.shape_cast %47 : vector<1x16x80xbf16> to vector<16x80xbf16>
    %c8 = arith.constant 8 : index
    %c0_44 = arith.constant 0 : index
    %c0_45 = arith.constant 0 : index
    %49 = vector.load %arg2[%c8, %c0_44, %c0_45] : memref<9x16x16xbf16, #tpu.memory_space<vmem>>, vector<1x16x16xbf16>
    %50 = vector.shape_cast %49 : vector<1x16x16xbf16> to vector<16x16xbf16>
    %cst_46 = arith.constant dense<0.000000e+00> : vector<16x80xf32>
    %51 = tpu.matmul %50, %48, %cst_46 {dimension_numbers = #tpu.dot_dimension_numbers<[1], [0], [0], [1], [0, 0, 1, 1], [], []>} : vector<16x16xbf16>, vector<16x80xbf16>, vector<16x80xf32> -> vector<16x80xf32>
    %52 = arith.addf %46, %51 : vector<16x80xf32>
    %c0_47 = arith.constant 0 : index
    %c0_48 = arith.constant 0 : index
    %53 = vector.load %arg4[%c0_47, %c0_48] : memref<16x1xf32, #tpu.memory_space<vmem>>, vector<16x1xf32>
    %54 = vector.broadcast %53 : vector<16x1xf32> to vector<16x80xf32>
    %55 = arith.addf %52, %54 : vector<16x80xf32>
    %cst_49 = arith.constant 0.000000e+00 : f32
    %56 = vector.broadcast %cst_49 : f32 to vector<16x80xf32>
    %57 = arith.maximumf %55, %56 : vector<16x80xf32>
    %58 = arith.truncf %57 : vector<16x80xf32> to vector<16x80xbf16>
    %c0_50 = arith.constant 0 : index
    %c0_51 = arith.constant 0 : index
    %c0_52 = arith.constant 0 : index
    %59 = vector.load %arg5[%c0_50, %c0_51, %c0_52] : memref<1x16x80xbf16, #tpu.memory_space<vmem>>, vector<1x16x80xbf16>
    %60 = vector.shape_cast %59 : vector<1x16x80xbf16> to vector<16x80xbf16>
    %61 = vector.shape_cast %58 : vector<16x80xbf16> to vector<1x16x80xbf16>
    tpu.vector_store %arg5[%c0_50, %c0_51, %c0_52], %61 {strides = array<i32>} : memref<1x16x80xbf16, #tpu.memory_space<vmem>>, vector<1x16x80xbf16>,
    return
  }
  func.func @transform_0(%arg0: i32, %arg1: i32) -> (i32, i32, i32) {
    %c0_i32 = arith.constant 0 : i32
    %c0_i32_0 = arith.constant 0 : i32
    %c0_i32_1 = arith.constant 0 : i32
    return %c0_i32, %arg1, %c0_i32_0 : i32, i32, i32
  }
  func.func @transform_1(%arg0: i32, %arg1: i32) -> (i32, i32, i32) {
    %c0_i32 = arith.constant 0 : i32
    %c0_i32_0 = arith.constant 0 : i32
    %c0_i32_1 = arith.constant 0 : i32
    return %arg0, %c0_i32, %c0_i32_0 : i32, i32, i32
  }
  func.func @transform_2(%arg0: i32, %arg1: i32) -> (i32, i32) {
    %c0_i32 = arith.constant 0 : i32
    %c0_i32_0 = arith.constant 0 : i32
    return %arg1, %c0_i32 : i32, i32
  }
  func.func @transform_3(%arg0: i32, %arg1: i32) -> (i32, i32, i32) {
    %c0_i32 = arith.constant 0 : i32
    %c0_i32_0 = arith.constant 0 : i32
    return %arg0, %arg1, %c0_i32 : i32, i32, i32
  }
}

module attributes {stable_mosaic.version = 11 : i64} {
  func.func @kernel(%arg0: i32, %arg1: i32, %arg2: i32, %arg3: i32, %arg4: memref<16x16xbf16, #tpu.memory_space<vmem>>, %arg5: memref<1x16x64xbf16, #tpu.memory_space<vmem>>, %arg6: memref<16x16xbf16, #tpu.memory_space<vmem>>, %arg7: memref<1x16x64xbf16, #tpu.memory_space<vmem>>, %arg8: memref<16x1xf32, #tpu.memory_space<vmem>>, %arg9: memref<1x16x64xbf16, #tpu.memory_space<vmem>>, %arg10: memref<16x64xf32, #tpu.memory_space<vmem>>) attributes {dimension_semantics = [#tpu.dimension_semantics<parallel>, #tpu.dimension_semantics<parallel>, #tpu.dimension_semantics<parallel>, #tpu.dimension_semantics<arbitrary>], iteration_bounds = array<i64: 2, 1, 1, 1>, scalar_prefetch = 0 : i64, scratch_operands = 1 : i64, tpu.core_type = #tpu.core_type<tc>, window_params = [{transform_indices = @transform_0, window_bounds = array<i64: 16, 16>}, {transform_indices = @transform_1, window_bounds = array<i64: 1, 16, 64>}, {transform_indices = @transform_2, window_bounds = array<i64: 16, 16>}, {transform_indices = @transform_3, window_bounds = array<i64: 1, 16, 64>}, {transform_indices = @transform_4, window_bounds = array<i64: 16, 1>}, {transform_indices = @transform_5, window_bounds = array<i64: 1, 16, 64>}]} {
    %c0_i32 = arith.constant 0 : i32
    %0 = arith.cmpi eq, %arg3, %c0_i32 : i32
    %1 = arith.extui %0 : i1 to i32
    %c0_i32_0 = arith.constant 0 : i32
    %2 = arith.cmpi ne, %1, %c0_i32_0 : i32
    scf.if %2 {
      %cst_21 = arith.constant 0.000000e+00 : f32
      %20 = vector.broadcast %cst_21 : f32 to vector<16x64xf32>
      %c0_22 = arith.constant 0 : index
      %c0_23 = arith.constant 0 : index
      %21 = vector.load %arg10[%c0_22, %c0_23] : memref<16x64xf32, #tpu.memory_space<vmem>>, vector<16x64xf32>
      tpu.vector_store %arg10[%c0_22, %c0_23], %20 {strides = array<i32>} : memref<16x64xf32, #tpu.memory_space<vmem>>, vector<16x64xf32>,
    } else {
    }
    %c0 = arith.constant 0 : index
    %c0_1 = arith.constant 0 : index
    %3 = vector.load %arg10[%c0, %c0_1] : memref<16x64xf32, #tpu.memory_space<vmem>>, vector<16x64xf32>
    %c0_2 = arith.constant 0 : index
    %c0_3 = arith.constant 0 : index
    %4 = vector.load %arg4[%c0_2, %c0_3] : memref<16x16xbf16, #tpu.memory_space<vmem>>, vector<16x16xbf16>
    %c0_4 = arith.constant 0 : index
    %c0_5 = arith.constant 0 : index
    %c0_6 = arith.constant 0 : index
    %5 = vector.load %arg5[%c0_4, %c0_5, %c0_6] : memref<1x16x64xbf16, #tpu.memory_space<vmem>>, vector<1x16x64xbf16>
    %6 = vector.shape_cast %5 : vector<1x16x64xbf16> to vector<16x64xbf16>
    %cst = arith.constant dense<0.000000e+00> : vector<16x64xf32>
    %7 = tpu.matmul %4, %6, %cst {dimension_numbers = #tpu.dot_dimension_numbers<[1], [0], [0], [1], [0, 0, 1, 1], [], []>} : vector<16x16xbf16>, vector<16x64xbf16>, vector<16x64xf32> -> vector<16x64xf32>
    %8 = arith.addf %3, %7 : vector<16x64xf32>
    %c0_7 = arith.constant 0 : index
    %c0_8 = arith.constant 0 : index
    %9 = vector.load %arg10[%c0_7, %c0_8] : memref<16x64xf32, #tpu.memory_space<vmem>>, vector<16x64xf32>
    tpu.vector_store %arg10[%c0_7, %c0_8], %8 {strides = array<i32>} : memref<16x64xf32, #tpu.memory_space<vmem>>, vector<16x64xf32>,
    %c0_9 = arith.constant 0 : index
    %c0_10 = arith.constant 0 : index
    %10 = vector.load %arg10[%c0_9, %c0_10] : memref<16x64xf32, #tpu.memory_space<vmem>>, vector<16x64xf32>
    %c0_11 = arith.constant 0 : index
    %c0_12 = arith.constant 0 : index
    %11 = vector.load %arg6[%c0_11, %c0_12] : memref<16x16xbf16, #tpu.memory_space<vmem>>, vector<16x16xbf16>
    %c0_13 = arith.constant 0 : index
    %c0_14 = arith.constant 0 : index
    %c0_15 = arith.constant 0 : index
    %12 = vector.load %arg7[%c0_13, %c0_14, %c0_15] : memref<1x16x64xbf16, #tpu.memory_space<vmem>>, vector<1x16x64xbf16>
    %13 = vector.shape_cast %12 : vector<1x16x64xbf16> to vector<16x64xbf16>
    %cst_16 = arith.constant dense<0.000000e+00> : vector<16x64xf32>
    %14 = tpu.matmul %11, %13, %cst_16 {dimension_numbers = #tpu.dot_dimension_numbers<[1], [0], [0], [1], [0, 0, 1, 1], [], []>} : vector<16x16xbf16>, vector<16x64xbf16>, vector<16x64xf32> -> vector<16x64xf32>
    %15 = arith.addf %10, %14 : vector<16x64xf32>
    %c0_17 = arith.constant 0 : index
    %c0_18 = arith.constant 0 : index
    %16 = vector.load %arg10[%c0_17, %c0_18] : memref<16x64xf32, #tpu.memory_space<vmem>>, vector<16x64xf32>
    tpu.vector_store %arg10[%c0_17, %c0_18], %15 {strides = array<i32>} : memref<16x64xf32, #tpu.memory_space<vmem>>, vector<16x64xf32>,
    %c0_i32_19 = arith.constant 0 : i32
    %17 = arith.cmpi eq, %arg3, %c0_i32_19 : i32
    %18 = arith.extui %17 : i1 to i32
    %c0_i32_20 = arith.constant 0 : i32
    %19 = arith.cmpi ne, %18, %c0_i32_20 : i32
    scf.if %19 {
      %c0_21 = arith.constant 0 : index
      %c0_22 = arith.constant 0 : index
      %20 = vector.load %arg10[%c0_21, %c0_22] : memref<16x64xf32, #tpu.memory_space<vmem>>, vector<16x64xf32>
      %c0_23 = arith.constant 0 : index
      %c0_24 = arith.constant 0 : index
      %21 = vector.load %arg8[%c0_23, %c0_24] : memref<16x1xf32, #tpu.memory_space<vmem>>, vector<16x1xf32>
      %22 = vector.broadcast %21 : vector<16x1xf32> to vector<16x64xf32>
      %23 = arith.addf %20, %22 : vector<16x64xf32>
      %cst_25 = arith.constant 0.000000e+00 : f32
      %24 = vector.broadcast %cst_25 : f32 to vector<16x64xf32>
      %25 = arith.maximumf %23, %24 : vector<16x64xf32>
      %26 = arith.truncf %25 : vector<16x64xf32> to vector<16x64xbf16>
      %c0_26 = arith.constant 0 : index
      %c0_27 = arith.constant 0 : index
      %c0_28 = arith.constant 0 : index
      %27 = vector.load %arg9[%c0_26, %c0_27, %c0_28] : memref<1x16x64xbf16, #tpu.memory_space<vmem>>, vector<1x16x64xbf16>
      %28 = vector.shape_cast %27 : vector<1x16x64xbf16> to vector<16x64xbf16>
      %29 = vector.shape_cast %26 : vector<16x64xbf16> to vector<1x16x64xbf16>
      tpu.vector_store %arg9[%c0_26, %c0_27, %c0_28], %29 {strides = array<i32>} : memref<1x16x64xbf16, #tpu.memory_space<vmem>>, vector<1x16x64xbf16>,
    } else {
    }
    return
  }
  func.func @transform_0(%arg0: i32, %arg1: i32, %arg2: i32, %arg3: i32) -> (i32, i32) {
    %c0_i32 = arith.constant 0 : i32
    return %arg1, %arg3 : i32, i32
  }
  func.func @transform_1(%arg0: i32, %arg1: i32, %arg2: i32, %arg3: i32) -> (i32, i32, i32) {
    %c0_i32 = arith.constant 0 : i32
    return %arg0, %arg3, %arg2 : i32, i32, i32
  }
  func.func @transform_2(%arg0: i32, %arg1: i32, %arg2: i32, %arg3: i32) -> (i32, i32) {
    %c0_i32 = arith.constant 0 : i32
    return %arg1, %arg3 : i32, i32
  }
  func.func @transform_3(%arg0: i32, %arg1: i32, %arg2: i32, %arg3: i32) -> (i32, i32, i32) {
    %c0_i32 = arith.constant 0 : i32
    return %arg0, %arg3, %arg2 : i32, i32, i32
  }
  func.func @transform_4(%arg0: i32, %arg1: i32, %arg2: i32, %arg3: i32) -> (i32, i32) {
    %c0_i32 = arith.constant 0 : i32
    %c0_i32_0 = arith.constant 0 : i32
    return %arg1, %c0_i32 : i32, i32
  }
  func.func @transform_5(%arg0: i32, %arg1: i32, %arg2: i32, %arg3: i32) -> (i32, i32, i32) {
    %c0_i32 = arith.constant 0 : i32
    return %arg0, %arg1, %arg2 : i32, i32, i32
  }
}

module attributes {stable_mosaic.version = 11 : i64} {
  func.func @kernel(%arg0: i32, %arg1: i32, %arg2: i32, %arg3: i32, %arg4: memref<16x16xbf16, #tpu.memory_space<vmem>>, %arg5: memref<1x16x64xbf16, #tpu.memory_space<vmem>>, %arg6: memref<16x16xbf16, #tpu.memory_space<vmem>>, %arg7: memref<1x16x64xbf16, #tpu.memory_space<vmem>>, %arg8: memref<16x8xbf16, #tpu.memory_space<vmem>>, %arg9: memref<1x8x64xbf16, #tpu.memory_space<vmem>>, %arg10: memref<16x16xbf16, #tpu.memory_space<vmem>>, %arg11: memref<1x16x64xbf16, #tpu.memory_space<vmem>>, %arg12: memref<16x1xf32, #tpu.memory_space<vmem>>, %arg13: memref<1x16x64xbf16, #tpu.memory_space<vmem>>, %arg14: memref<16x64xf32, #tpu.memory_space<vmem>>) attributes {dimension_semantics = [#tpu.dimension_semantics<parallel>, #tpu.dimension_semantics<parallel>, #tpu.dimension_semantics<parallel>, #tpu.dimension_semantics<arbitrary>], iteration_bounds = array<i64: 2, 1, 1, 1>, scalar_prefetch = 0 : i64, scratch_operands = 1 : i64, tpu.core_type = #tpu.core_type<tc>, window_params = [{transform_indices = @transform_0, window_bounds = array<i64: 16, 16>}, {transform_indices = @transform_1, window_bounds = array<i64: 1, 16, 64>}, {transform_indices = @transform_2, window_bounds = array<i64: 16, 16>}, {transform_indices = @transform_3, window_bounds = array<i64: 1, 16, 64>}, {transform_indices = @transform_4, window_bounds = array<i64: 16, 8>}, {transform_indices = @transform_5, window_bounds = array<i64: 1, 8, 64>}, {transform_indices = @transform_6, window_bounds = array<i64: 16, 16>}, {transform_indices = @transform_7, window_bounds = array<i64: 1, 16, 64>}, {transform_indices = @transform_8, window_bounds = array<i64: 16, 1>}, {transform_indices = @transform_9, window_bounds = array<i64: 1, 16, 64>}]} {
    %c0_i32 = arith.constant 0 : i32
    %0 = arith.cmpi eq, %arg3, %c0_i32 : i32
    %1 = arith.extui %0 : i1 to i32
    %c0_i32_0 = arith.constant 0 : i32
    %2 = arith.cmpi ne, %1, %c0_i32_0 : i32
    scf.if %2 {
      %cst_41 = arith.constant 0.000000e+00 : f32
      %34 = vector.broadcast %cst_41 : f32 to vector<16x64xf32>
      %c0_42 = arith.constant 0 : index
      %c0_43 = arith.constant 0 : index
      %35 = vector.load %arg14[%c0_42, %c0_43] : memref<16x64xf32, #tpu.memory_space<vmem>>, vector<16x64xf32>
      tpu.vector_store %arg14[%c0_42, %c0_43], %34 {strides = array<i32>} : memref<16x64xf32, #tpu.memory_space<vmem>>, vector<16x64xf32>,
    } else {
    }
    %c0 = arith.constant 0 : index
    %c0_1 = arith.constant 0 : index
    %3 = vector.load %arg14[%c0, %c0_1] : memref<16x64xf32, #tpu.memory_space<vmem>>, vector<16x64xf32>
    %c0_2 = arith.constant 0 : index
    %c0_3 = arith.constant 0 : index
    %4 = vector.load %arg4[%c0_2, %c0_3] : memref<16x16xbf16, #tpu.memory_space<vmem>>, vector<16x16xbf16>
    %c0_4 = arith.constant 0 : index
    %c0_5 = arith.constant 0 : index
    %c0_6 = arith.constant 0 : index
    %5 = vector.load %arg5[%c0_4, %c0_5, %c0_6] : memref<1x16x64xbf16, #tpu.memory_space<vmem>>, vector<1x16x64xbf16>
    %6 = vector.shape_cast %5 : vector<1x16x64xbf16> to vector<16x64xbf16>
    %cst = arith.constant dense<0.000000e+00> : vector<16x64xf32>
    %7 = tpu.matmul %4, %6, %cst {dimension_numbers = #tpu.dot_dimension_numbers<[1], [0], [0], [1], [0, 0, 1, 1], [], []>} : vector<16x16xbf16>, vector<16x64xbf16>, vector<16x64xf32> -> vector<16x64xf32>
    %8 = arith.addf %3, %7 : vector<16x64xf32>
    %c0_7 = arith.constant 0 : index
    %c0_8 = arith.constant 0 : index
    %9 = vector.load %arg14[%c0_7, %c0_8] : memref<16x64xf32, #tpu.memory_space<vmem>>, vector<16x64xf32>
    tpu.vector_store %arg14[%c0_7, %c0_8], %8 {strides = array<i32>} : memref<16x64xf32, #tpu.memory_space<vmem>>, vector<16x64xf32>,
    %c0_9 = arith.constant 0 : index
    %c0_10 = arith.constant 0 : index
    %10 = vector.load %arg14[%c0_9, %c0_10] : memref<16x64xf32, #tpu.memory_space<vmem>>, vector<16x64xf32>
    %c0_11 = arith.constant 0 : index
    %c0_12 = arith.constant 0 : index
    %11 = vector.load %arg6[%c0_11, %c0_12] : memref<16x16xbf16, #tpu.memory_space<vmem>>, vector<16x16xbf16>
    %c0_13 = arith.constant 0 : index
    %c0_14 = arith.constant 0 : index
    %c0_15 = arith.constant 0 : index
    %12 = vector.load %arg7[%c0_13, %c0_14, %c0_15] : memref<1x16x64xbf16, #tpu.memory_space<vmem>>, vector<1x16x64xbf16>
    %13 = vector.shape_cast %12 : vector<1x16x64xbf16> to vector<16x64xbf16>
    %cst_16 = arith.constant dense<0.000000e+00> : vector<16x64xf32>
    %14 = tpu.matmul %11, %13, %cst_16 {dimension_numbers = #tpu.dot_dimension_numbers<[1], [0], [0], [1], [0, 0, 1, 1], [], []>} : vector<16x16xbf16>, vector<16x64xbf16>, vector<16x64xf32> -> vector<16x64xf32>
    %15 = arith.addf %10, %14 : vector<16x64xf32>
    %c0_17 = arith.constant 0 : index
    %c0_18 = arith.constant 0 : index
    %16 = vector.load %arg14[%c0_17, %c0_18] : memref<16x64xf32, #tpu.memory_space<vmem>>, vector<16x64xf32>
    tpu.vector_store %arg14[%c0_17, %c0_18], %15 {strides = array<i32>} : memref<16x64xf32, #tpu.memory_space<vmem>>, vector<16x64xf32>,
    %c0_19 = arith.constant 0 : index
    %c0_20 = arith.constant 0 : index
    %17 = vector.load %arg14[%c0_19, %c0_20] : memref<16x64xf32, #tpu.memory_space<vmem>>, vector<16x64xf32>
    %c0_21 = arith.constant 0 : index
    %c0_22 = arith.constant 0 : index
    %18 = vector.load %arg8[%c0_21, %c0_22] : memref<16x8xbf16, #tpu.memory_space<vmem>>, vector<16x8xbf16>
    %c0_23 = arith.constant 0 : index
    %c0_24 = arith.constant 0 : index
    %c0_25 = arith.constant 0 : index
    %19 = vector.load %arg9[%c0_23, %c0_24, %c0_25] : memref<1x8x64xbf16, #tpu.memory_space<vmem>>, vector<1x8x64xbf16>
    %20 = vector.shape_cast %19 : vector<1x8x64xbf16> to vector<8x64xbf16>
    %cst_26 = arith.constant dense<0.000000e+00> : vector<16x64xf32>
    %21 = tpu.matmul %18, %20, %cst_26 {dimension_numbers = #tpu.dot_dimension_numbers<[1], [0], [0], [1], [0, 0, 1, 1], [], []>} : vector<16x8xbf16>, vector<8x64xbf16>, vector<16x64xf32> -> vector<16x64xf32>
    %22 = arith.addf %17, %21 : vector<16x64xf32>
    %c0_27 = arith.constant 0 : index
    %c0_28 = arith.constant 0 : index
    %23 = vector.load %arg14[%c0_27, %c0_28] : memref<16x64xf32, #tpu.memory_space<vmem>>, vector<16x64xf32>
    tpu.vector_store %arg14[%c0_27, %c0_28], %22 {strides = array<i32>} : memref<16x64xf32, #tpu.memory_space<vmem>>, vector<16x64xf32>,
    %c0_29 = arith.constant 0 : index
    %c0_30 = arith.constant 0 : index
    %24 = vector.load %arg14[%c0_29, %c0_30] : memref<16x64xf32, #tpu.memory_space<vmem>>, vector<16x64xf32>
    %c0_31 = arith.constant 0 : index
    %c0_32 = arith.constant 0 : index
    %25 = vector.load %arg10[%c0_31, %c0_32] : memref<16x16xbf16, #tpu.memory_space<vmem>>, vector<16x16xbf16>
    %c0_33 = arith.constant 0 : index
    %c0_34 = arith.constant 0 : index
    %c0_35 = arith.constant 0 : index
    %26 = vector.load %arg11[%c0_33, %c0_34, %c0_35] : memref<1x16x64xbf16, #tpu.memory_space<vmem>>, vector<1x16x64xbf16>
    %27 = vector.shape_cast %26 : vector<1x16x64xbf16> to vector<16x64xbf16>
    %cst_36 = arith.constant dense<0.000000e+00> : vector<16x64xf32>
    %28 = tpu.matmul %25, %27, %cst_36 {dimension_numbers = #tpu.dot_dimension_numbers<[1], [0], [0], [1], [0, 0, 1, 1], [], []>} : vector<16x16xbf16>, vector<16x64xbf16>, vector<16x64xf32> -> vector<16x64xf32>
    %29 = arith.addf %24, %28 : vector<16x64xf32>
    %c0_37 = arith.constant 0 : index
    %c0_38 = arith.constant 0 : index
    %30 = vector.load %arg14[%c0_37, %c0_38] : memref<16x64xf32, #tpu.memory_space<vmem>>, vector<16x64xf32>
    tpu.vector_store %arg14[%c0_37, %c0_38], %29 {strides = array<i32>} : memref<16x64xf32, #tpu.memory_space<vmem>>, vector<16x64xf32>,
    %c0_i32_39 = arith.constant 0 : i32
    %31 = arith.cmpi eq, %arg3, %c0_i32_39 : i32
    %32 = arith.extui %31 : i1 to i32
    %c0_i32_40 = arith.constant 0 : i32
    %33 = arith.cmpi ne, %32, %c0_i32_40 : i32
    scf.if %33 {
      %c0_41 = arith.constant 0 : index
      %c0_42 = arith.constant 0 : index
      %34 = vector.load %arg14[%c0_41, %c0_42] : memref<16x64xf32, #tpu.memory_space<vmem>>, vector<16x64xf32>
      %c0_43 = arith.constant 0 : index
      %c0_44 = arith.constant 0 : index
      %35 = vector.load %arg12[%c0_43, %c0_44] : memref<16x1xf32, #tpu.memory_space<vmem>>, vector<16x1xf32>
      %36 = vector.broadcast %35 : vector<16x1xf32> to vector<16x64xf32>
      %37 = arith.addf %34, %36 : vector<16x64xf32>
      %cst_45 = arith.constant 0.000000e+00 : f32
      %38 = vector.broadcast %cst_45 : f32 to vector<16x64xf32>
      %39 = arith.maximumf %37, %38 : vector<16x64xf32>
      %40 = arith.truncf %39 : vector<16x64xf32> to vector<16x64xbf16>
      %c0_46 = arith.constant 0 : index
      %c0_47 = arith.constant 0 : index
      %c0_48 = arith.constant 0 : index
      %41 = vector.load %arg13[%c0_46, %c0_47, %c0_48] : memref<1x16x64xbf16, #tpu.memory_space<vmem>>, vector<1x16x64xbf16>
      %42 = vector.shape_cast %41 : vector<1x16x64xbf16> to vector<16x64xbf16>
      %43 = vector.shape_cast %40 : vector<16x64xbf16> to vector<1x16x64xbf16>
      tpu.vector_store %arg13[%c0_46, %c0_47, %c0_48], %43 {strides = array<i32>} : memref<1x16x64xbf16, #tpu.memory_space<vmem>>, vector<1x16x64xbf16>,
    } else {
    }
    return
  }
  func.func @transform_0(%arg0: i32, %arg1: i32, %arg2: i32, %arg3: i32) -> (i32, i32) {
    %c0_i32 = arith.constant 0 : i32
    return %arg1, %arg3 : i32, i32
  }
  func.func @transform_1(%arg0: i32, %arg1: i32, %arg2: i32, %arg3: i32) -> (i32, i32, i32) {
    %c0_i32 = arith.constant 0 : i32
    return %arg0, %arg3, %arg2 : i32, i32, i32
  }
  func.func @transform_2(%arg0: i32, %arg1: i32, %arg2: i32, %arg3: i32) -> (i32, i32) {
    %c0_i32 = arith.constant 0 : i32
    return %arg1, %arg3 : i32, i32
  }
  func.func @transform_3(%arg0: i32, %arg1: i32, %arg2: i32, %arg3: i32) -> (i32, i32, i32) {
    %c0_i32 = arith.constant 0 : i32
    return %arg0, %arg3, %arg2 : i32, i32, i32
  }
  func.func @transform_4(%arg0: i32, %arg1: i32, %arg2: i32, %arg3: i32) -> (i32, i32) {
    %c0_i32 = arith.constant 0 : i32
    return %arg1, %arg3 : i32, i32
  }
  func.func @transform_5(%arg0: i32, %arg1: i32, %arg2: i32, %arg3: i32) -> (i32, i32, i32) {
    %c0_i32 = arith.constant 0 : i32
    return %arg0, %arg3, %arg2 : i32, i32, i32
  }
  func.func @transform_6(%arg0: i32, %arg1: i32, %arg2: i32, %arg3: i32) -> (i32, i32) {
    %c0_i32 = arith.constant 0 : i32
    return %arg1, %arg3 : i32, i32
  }
  func.func @transform_7(%arg0: i32, %arg1: i32, %arg2: i32, %arg3: i32) -> (i32, i32, i32) {
    %c0_i32 = arith.constant 0 : i32
    return %arg0, %arg3, %arg2 : i32, i32, i32
  }
  func.func @transform_8(%arg0: i32, %arg1: i32, %arg2: i32, %arg3: i32) -> (i32, i32) {
    %c0_i32 = arith.constant 0 : i32
    %c0_i32_0 = arith.constant 0 : i32
    return %arg1, %c0_i32 : i32, i32
  }
  func.func @transform_9(%arg0: i32, %arg1: i32, %arg2: i32, %arg3: i32) -> (i32, i32, i32) {
    %c0_i32 = arith.constant 0 : i32
    return %arg0, %arg1, %arg2 : i32, i32, i32
  }
}

</mosaic_0001>

<llo_original>
// kernel: tree_forward.15
$region0: #{tree_forward.15}
  #allocation0 [shape = 'u32[]', space=smem, size = 0x4, offset = 0x4, fixed_abs, tag = 'smem constant byte address 0x4 - core index']
  #allocation1 [shape = 'u32[144,128]{1,0:T(1,128)}', space=vmem, size = 0x12000, scoped, tag = 'internal scratch']
  #allocation2 [shape = 'f32[16,64]{1,0:T(8,128)}', space=vmem, size = 0x2000, scoped, tag = 'scratch operand']
  %s0 = inlined_call_operand.vmem [shape: bf16[16,72], index: 0, kind: input, shape index: {}]
  %s1 = inlined_call_operand.vmem [shape: bf16[2,72,64], index: 1, kind: input, shape index: {}]
  %s2 = inlined_call_operand.vmem [shape: f32[16,1], index: 2, kind: input, shape index: {}]
  %s3 = inlined_call_operand.vmem [shape: bf16[2,16,64], index: 3, kind: output, shape index: {}]
  %s4 = sld [smem:[#allocation0]]
  $region53: #{tree_forward.15} parent=0
    _
  %s6 = ssub.s32 1, %s4
  %s7 = scalar_select 0, %s6, %s4
  loop: start=0, step=1, limit=4
  $region2: #{tree_forward.15} parent=0 // loop_pre_header
    _
  $region3: #{tree_forward.15} parent=0 // loop_header
    %s9 = sphi 0, %s13
    %p10 = scmp.ge.s32.totalorder %s9, 4
    %s16 = sphi 0, %s42
    %s17 = sphi 0, %s38
    %s18 = sphi 0, %s34
    %s19 = sphi 0, %s30
    %s20 = sphi 0, %s16
    %s21 = sphi 0, %s17
    %s22 = sphi 0, %s18
    %s23 = sphi 0, %s19
    %s24 = sphi 0, %s20
    %s25 = sphi 0, %s21
    %s26 = sphi 0, %s22
    %s27 = sphi 0, %s23
    %s47 = sphi 0, %s49
    %s50 = sphi 0, %s47
    %s51 = sphi 0, %s50
    %s67 = sphi 0, %s51
    %s77 = sphi 0, %s79
    %s80 = sphi 0, %s77
    %s81 = sphi 0, %s80
    %s97 = sphi 0, %s81
    %s103 = sphi 0, %s105
    %s106 = sphi 0, %s103
    %s107 = sphi 0, %s106
    %s123 = sphi 0, %s107
    %s133 = sphi 0, %s135
    %s136 = sphi 0, %s133
    %s137 = sphi 0, %s136
    %s153 = sphi 0, %s137
  $region4: #{tree_forward.15} parent=0 // loop_header_branch
    %12 = sbr.rel (%p10) target = $region8
  $region5: #{tree_forward.15} parent=0 // loop_body
    %s14 = ssub.s32 %s9, 1
    %s15 = ssub.s32 %s9, 2
    %s28 = sadd.s32 1, %s19
    %p29 = scmp.ge.s32.totalorder %s28, 1
    %s30 = scalar_select %p29, 0, %s28
    %s31 = sadd.s32 1, %s18
    %s32 = scalar_select %p29, %s31, %s18
    %p33 = scmp.ge.s32.totalorder %s32, 1
    %s34 = scalar_select %p33, 0, %s32
    %s35 = sadd.s32 1, %s17
    %s36 = scalar_select %p33, %s35, %s17
    %p37 = scmp.ge.s32.totalorder %s36, 1
    %s38 = scalar_select %p37, 0, %s36
    %s39 = sadd.s32 1, %s16
    %s40 = scalar_select %p37, %s39, %s16
    %p41 = scmp.ge.s32.totalorder %s40, 2
    %s42 = scalar_select %p41, 0, %s40
    %s43 = ssub.s32 %s17, %s38
    %s44 = ssub.s32 %s19, %s30
    %s45 = sor.u32 %s43, %s44
    %p46 = scmp.eq.s32.totalorder %s45, 0
    %s48 = sadd.s32 %s47, 1
    %s49 = scalar_select %p46, %s47, %s48
    %p52 = pneg %p46
    %p53 = scmp.eq.s32.totalorder %s9, 1
    %p54 = por %p52, %p53
    %p55 = scmp.ne.s32.totalorder %s47, %s50
    %p56 = scmp.eq.s32.totalorder %s9, 0
    %p57 = por %p55, %p56
    %p58 = scmp.ne.s32.totalorder %s47, %s50
    %p59 = scmp.eq.s32.totalorder %s14, 1
    %p60 = por %p58, %p59
    %p61 = scmp.ne.s32.totalorder %s50, %s51
    %p62 = scmp.eq.s32.totalorder %s14, 0
    %p63 = por %p61, %p62
    %p64 = scmp.ne.s32.totalorder %s50, %s51
    %p65 = scmp.eq.s32.totalorder %s15, 1
    %p66 = por %p64, %p65
    %p68 = scmp.ne.s32.totalorder %s51, %s67
    %p69 = scmp.eq.s32.totalorder %s15, 0
    %p70 = por %p68, %p69
    %s71 = ssub.s32 %s16, %s42
    %s72 = ssub.s32 %s19, %s30
    %s73 = sor.u32 %s71, %s72
    %s74 = ssub.s32 %s18, %s34
    %s75 = sor.u32 %s73, %s74
    %p76 = scmp.eq.s32.totalorder %s75, 0
    %s78 = sadd.s32 %s77, 1
    %s79 = scalar_select %p76, %s77, %s78
    %p82 = pneg %p76
    %p83 = scmp.eq.s32.totalorder %s9, 1
    %p84 = por %p82, %p83
    %p85 = scmp.ne.s32.totalorder %s77, %s80
    %p86 = scmp.eq.s32.totalorder %s9, 0
    %p87 = por %p85, %p86
    %p88 = scmp.ne.s32.totalorder %s77, %s80
    %p89 = scmp.eq.s32.totalorder %s14, 1
    %p90 = por %p88, %p89
    %p91 = scmp.ne.s32.totalorder %s80, %s81
    %p92 = scmp.eq.s32.totalorder %s14, 0
    %p93 = por %p91, %p92
    %p94 = scmp.ne.s32.totalorder %s80, %s81
    %p95 = scmp.eq.s32.totalorder %s15, 1
    %p96 = por %p94, %p95
    %p98 = scmp.ne.s32.totalorder %s81, %s97
    %p99 = scmp.eq.s32.totalorder %s15, 0
    %p100 = por %p98, %p99
    %s101 = ssub.s32 %s17, %s38
    %p102 = scmp.eq.s32.totalorder %s101, 0
    %s104 = sadd.s32 %s103, 1
    %s105 = scalar_select %p102, %s103, %s104
    %p108 = pneg %p102
    %p109 = scmp.eq.s32.totalorder %s9, 1
    %p110 = por %p108, %p109
    %p111 = scmp.ne.s32.totalorder %s103, %s106
    %p112 = scmp.eq.s32.totalorder %s9, 0
    %p113 = por %p111, %p112
    %p114 = scmp.ne.s32.totalorder %s103, %s106
    %p115 = scmp.eq.s32.totalorder %s14, 1
    %p116 = por %p114, %p115
    %p117 = scmp.ne.s32.totalorder %s106, %s107
    %p118 = scmp.eq.s32.totalorder %s14, 0
    %p119 = por %p117, %p118
    %p120 = scmp.ne.s32.totalorder %s106, %s107
    %p121 = scmp.eq.s32.totalorder %s15, 1
    %p122 = por %p120, %p121
    %p124 = scmp.ne.s32.totalorder %s107, %s123
    %p125 = scmp.eq.s32.totalorder %s15, 0
    %p126 = por %p124, %p125
    %s127 = ssub.s32 %s16, %s42
    %s128 = ssub.s32 %s17, %s38
    %s129 = sor.u32 %s127, %s128
    %s130 = ssub.s32 %s18, %s34
    %s131 = sor.u32 %s129, %s130
    %p132 = scmp.eq.s32.totalorder %s131, 0
    %s134 = sadd.s32 %s133, 1
    %s135 = scalar_select %p132, %s133, %s134
    %p138 = pneg %p132
    %p139 = scmp.eq.s32.totalorder %s9, 1
    %p140 = por %p138, %p139
    %p141 = scmp.ne.s32.totalorder %s133, %s136
    %p142 = scmp.eq.s32.totalorder %s9, 0
    %p143 = por %p141, %p142
    %p144 = scmp.ne.s32.totalorder %s133, %s136
    %p145 = scmp.eq.s32.totalorder %s14, 1
    %p146 = por %p144, %p145
    %p147 = scmp.ne.s32.totalorder %s136, %s137
    %p148 = scmp.eq.s32.totalorder %s14, 0
    %p149 = por %p147, %p148
    %p150 = scmp.ne.s32.totalorder %s136, %s137
    %p151 = scmp.eq.s32.totalorder %s15, 1
    %p152 = por %p150, %p151
    %p154 = scmp.ne.s32.totalorder %s137, %s153
    %p155 = scmp.eq.s32.totalorder %s15, 0
    %p156 = por %p154, %p155
    %p157 = scmp.le.s32.totalorder 1, %s9
    %p158 = scmp.lt.s32.totalorder %s9, 3
    %p159 = pnand %p157, %p158
    %p160 = pneg %p159
    // Predicated region
    $region9: #{tree_forward.15} parent=5 // pred_check
      _
    $region10: #{tree_forward.15} parent=5 // pred_check_branch
      %162 = sbr.rel (%p159) target = $region12
    $region11: #{tree_forward.15} parent=5 // pred_region
      %s163 = ssub.s32 %s9, 1
      // Predicated region
      $region13: #{tree_forward.15} parent=11 // pred_check
        %p164 = pneg %p63
      $region14: #{tree_forward.15} parent=11 // pred_check_branch
        %166 = sbr.rel (%p164) target = $region16
      $region15: #{tree_forward.15} parent=11 // pred_region
        %s167 = smul.u32 2, %s21
        %p168 = scmp.lt.s32.totalorder %s167, 1
        %s169 = scalar_select %p168, %s167, 1
        %p170 = scmp.lt.s32.totalorder %s23, 0
        %s171 = scalar_select %p170, %s23, 0
        %s172 = sadd.s32 %s171, %s169
        %s173 = smul.addr %s172, 4
        %s174 = scalar_lea.vmem %s0, %s173
        %s175 = smul.u32 2, %s21
      $region16: #{tree_forward.15} parent=11 // pred_fallthru
        _
      // Predicated region
      $region17: #{tree_forward.15} parent=11 // pred_check
        %p176 = pneg %p119
      $region18: #{tree_forward.15} parent=11 // pred_check_branch
        %178 = sbr.rel (%p176) target = $region20
      $region19: #{tree_forward.15} parent=11 // pred_region
        %s179 = smul.u32 2, %s21
        %p180 = scmp.lt.s32.totalorder %s179, 1
        %s181 = scalar_select %p180, %s179, 1
        %s182 = smul.addr %s181, 8
        %s183 = scalar_lea.vmem %s2, %s182
        %s184 = smul.u32 2, %s21
      $region20: #{tree_forward.15} parent=11 // pred_fallthru
        _
    $region12: #{tree_forward.15} parent=5 // pred_fallthru
      _
    %p185 = scmp.lt.s32.totalorder %s9, 2
    // Predicated region
    $region21: #{tree_forward.15} parent=5 // pred_check
      %p186 = pneg %p185
    $region22: #{tree_forward.15} parent=5 // pred_check_branch
      %188 = sbr.rel (%p186) target = $region24
    $region23: #{tree_forward.15} parent=5 // pred_region
      // Predicated region
      $region25: #{tree_forward.15} parent=23 // pred_check
        %p189 = pneg %p87
      $region26: #{tree_forward.15} parent=23 // pred_check_branch
        %191 = sbr.rel (%p189) target = $region28
      $region27: #{tree_forward.15} parent=23 // pred_region
        %s192 = smul.u32 9, %s19
        %p193 = scmp.lt.s32.totalorder %s16, 1
        %s194 = scalar_select %p193, %s16, 1
        %p195 = scmp.lt.s32.totalorder %s192, 8
        %s196 = scalar_select %p195, %s192, 8
        %p197 = scmp.lt.s32.totalorder %s18, 0
        %s198 = scalar_select %p197, %s18, 0
        %s199 = sadd.s32 %s198, %s196
        %s200 = smul.addr %s194, 9
        %s201 = sadd.s32 %s199, %s200
        %s202 = smul.addr %s201, 4
        %s203 = scalar_lea.vmem %s1, %s202
        %s204 = smul.u32 9, %s19
      $region28: #{tree_forward.15} parent=23 // pred_fallthru
        _
    $region24: #{tree_forward.15} parent=5 // pred_fallthru
      _
    %p205 = scmp.le.s32.totalorder 1, %s9
    %p206 = scmp.lt.s32.totalorder %s9, 3
    %p207 = pnand %p205, %p206
    %p208 = pneg %p207
    // Predicated region
    $region29: #{tree_forward.15} parent=5 // pred_check
      _
    $region30: #{tree_forward.15} parent=5 // pred_check_branch
      %210 = sbr.rel (%p207) target = $region32
    $region31: #{tree_forward.15} parent=5 // pred_region
      %s211 = ssub.s32 %s9, 1
      %s212 = smul.u32 2, %s21
      %p213 = scmp.lt.s32.totalorder %s212, 1
      %s214 = scalar_select %p213, %s212, 1
      %p215 = scmp.lt.s32.totalorder %s23, 0
      %s216 = scalar_select %p215, %s23, 0
      %s217 = sadd.s32 %s216, %s214
      %s218 = smul.addr %s217, 4
      %s219 = scalar_lea.vmem %s0, %s218
      %p220 = pneg %p63
      %p221 = pneg %p60
      %s222 = smul.u32 9, %s23
      %p223 = scmp.lt.s32.totalorder %s20, 1
      %s224 = scalar_select %p223, %s20, 1
      %p225 = scmp.lt.s32.totalorder %s222, 8
      %s226 = scalar_select %p225, %s222, 8
      %p227 = scmp.lt.s32.totalorder %s22, 0
      %s228 = scalar_select %p227, %s22, 0
      %s229 = sadd.s32 %s228, %s226
      %s230 = smul.addr %s224, 9
      %s231 = sadd.s32 %s229, %s230
      %s232 = smul.addr %s231, 4
      %s233 = scalar_lea.vmem %s1, %s232
      %p234 = pneg %p93
      %p235 = pneg %p90
      %s236 = smul.u32 2, %s21
      %p237 = scmp.lt.s32.totalorder %s236, 1
      %s238 = scalar_select %p237, %s236, 1
      %s239 = smul.addr %s238, 8
      %s240 = scalar_lea.vmem %s2, %s239
      %p241 = pneg %p119
      %p242 = pneg %p116
      %p243 = pneg %p149
      %p244 = pneg %p146
      %s245 = smul.u32 2, %s21
      %p246 = scmp.lt.s32.totalorder %s20, 1
      %s247 = scalar_select %p246, %s20, 1
      %p248 = scmp.lt.s32.totalorder %s245, 1
      %s249 = scalar_select %p248, %s245, 1
      %p250 = scmp.lt.s32.totalorder %s22, 0
      %s251 = scalar_select %p250, %s22, 0
      %s252 = sadd.s32 %s251, %s249
      %s253 = smul.addr %s247, 2
      %s254 = sadd.s32 %s252, %s253
      %s255 = smul.addr %s254, 4
      %s256 = scalar_lea.vmem %s3, %s255
      %s257 = smul.u32 2, %s21
      %p258 = scmp.lt.s32.totalorder %s257, 1
      %s259 = scalar_select %p258, %s257, 1
      %p260 = scmp.lt.s32.totalorder %s23, 0
      %s261 = scalar_select %p260, %s23, 0
      %s262 = sadd.s32 %s261, %s259
      %s263 = smul.addr %s262, 4
      %s264 = scalar_lea.vmem %s0, %s263
      %s265 = smul.u32 2, %s21
      %s266 = smul.u32 9, %s23
      %p267 = scmp.lt.s32.totalorder %s20, 1
      %s268 = scalar_select %p267, %s20, 1
      %p269 = scmp.lt.s32.totalorder %s266, 8
      %s270 = scalar_select %p269, %s266, 8
      %p271 = scmp.lt.s32.totalorder %s22, 0
      %s272 = scalar_select %p271, %s22, 0
      %s273 = sadd.s32 %s272, %s270
      %s274 = smul.addr %s268, 9
      %s275 = sadd.s32 %s273, %s274
      %s276 = smul.addr %s275, 4
      %s277 = scalar_lea.vmem %s1, %s276
      %s278 = smul.u32 9, %s23
      %s279 = smul.u32 2, %s21
      %p280 = scmp.lt.s32.totalorder %s279, 1
      %s281 = scalar_select %p280, %s279, 1
      %s282 = smul.addr %s281, 8
      %s283 = scalar_lea.vmem %s2, %s282
      %s284 = smul.u32 2, %s21
      %s285 = smul.u32 2, %s21
      %p286 = scmp.lt.s32.totalorder %s20, 1
      %s287 = scalar_select %p286, %s20, 1
      %p288 = scmp.lt.s32.totalorder %s285, 1
      %s289 = scalar_select %p288, %s285, 1
      %p290 = scmp.lt.s32.totalorder %s22, 0
      %s291 = scalar_select %p290, %s22, 0
      %s292 = sadd.s32 %s291, %s289
      %s293 = smul.addr %s287, 2
      %s294 = sadd.s32 %s292, %s293
      %s295 = smul.addr %s294, 4
      %s296 = scalar_lea.vmem %s3, %s295
      %s297 = smul.u32 2, %s21
      %p299 = scmp.eq.s32.totalorder %s23, 0
      // Predicated region
      $region33: #{tree_forward.15} parent=31 // pred_check
        %p300 = pneg %p299
      $region34: #{tree_forward.15} parent=31 // pred_check_branch
        %302 = sbr.rel (%p300) target = $region36
      $region35: #{tree_forward.15} parent=31 // pred_region
        %vm303 = vcmask 523264
        %304 = vst.msk [vmem:[#allocation2] sm:$0xff] %vm303, 0.0
        %305 = vst.msk [vmem:[#allocation2 + $0x8] sm:$0xff] %vm303, 0.0
      $region36: #{tree_forward.15} parent=31 // pred_fallthru
        _
      %v306 = vld [vmem:[#allocation2] sm:$0xff]
      %v307 = vld [vmem:[#allocation2 + $0x8] sm:$0xff]
      %v308 = vld [vmem:[%s264] sm:$0xf]
      %v309 = vld [vmem:[%s264 + $0x4] sm:$0xf]
      %v310 = vld [vmem:[%s277] sm:$0xf]
      %v311 = vld [vmem:[%s277 + $0x4] sm:$0xf]
      %v312 = vld [vmem:[%s277 + $0x8] sm:$0xf]
      %v313 = vld [vmem:[%s277 + $0xc] sm:$0xf]
      %v314 = vld [vmem:[%s277 + $0x10] sm:$0xf]
      %v315 = vld [vmem:[%s277 + $0x14] sm:$0xf]
      %v316 = vld [vmem:[%s277 + $0x18] sm:$0xf]
      %v317 = vld [vmem:[%s277 + $0x1c] sm:$0xf]
      %v318 = vld [vmem:[%s277 + $0x20] sm:$0xf]
      %v321 = vunpack.c.l.b16 %v308
      %v322 = vunpack.c.l.b16 %v309
      %v323 = vpack.c.b16 %v322, %v321
      %v333 = vunpack.c.l.b16 %v310
      %v334 = vunpack.c.l.b16 %v311
      %v335 = vunpack.c.l.b16 %v312
      %v336 = vunpack.c.l.b16 %v313
      %v337 = vunpack.c.l.b16 %v314
      %v338 = vunpack.c.l.b16 %v315
      %v339 = vunpack.c.l.b16 %v316
      %v340 = vunpack.c.l.b16 %v317
      %v341 = vunpack.c.l.b16 %v318
      %v342 = vpack.c.b16 %v334, %v333
      %v343 = vpack.c.b16 %v336, %v335
      %v344 = vpack.c.b16 %v338, %v337
      %v345 = vpack.c.b16 %v340, %v339
      %v346 = vpack.c.b16 %v341, %v341
      %vm351 = vcmask 588800
      %v353 = vsel %vm351, %v323, 0
      %vm355 = vcmask 1043456
      %v357 = vsel %vm355, %v346, 0
      %359 = vmatprep.subr.bf16.mxu0 0
      %360 = vmatpush1.bf16.msra.mxu0 %v342
      %361 = vmatprep.subr.bf16.mxu0 0
      %362 = vmatpush1.bf16.msra.mxu0 %v343
      %363 = vmatprep.subr.bf16.mxu0 0
      %364 = vmatpush1.bf16.msra.mxu0 %v344
      %365 = vmatprep.subr.bf16.mxu0 0
      %366 = vmatpush1.bf16.msra.mxu0 %v345
      %367 = vmatprep.subr.bf16.mxu0 0
      %368 = vmatpush1.bf16.msra.mxu0 %v357
      %369 = vmatprep.subr.bf16.mxu0 0
      %370 = vmatpush1.bf16.msra.mxu0 0
      %371 = vmatprep.subr.bf16.mxu0 0
      %372 = vmatpush1.bf16.msra.mxu0 0
      %373 = vmatprep.subr.bf16.mxu0 0
      %374 = vmatpush1.bf16.msra.mxu0 0
      %375 = vmatprep.subr.bf16.mxu0 0
      %376 = vmatpush1.bf16.msra.mxu0 0
      %377 = vmatprep.subr.bf16.mxu0 0
      %378 = vmatpush1.bf16.msra.mxu0 0
      %379 = vmatprep.subr.bf16.mxu0 0
      %380 = vmatpush1.bf16.msra.mxu0 0
      %381 = vmatprep.subr.bf16.mxu0 0
      %382 = vmatpush1.bf16.msra.mxu0 0
      %383 = vmatprep.subr.bf16.mxu0 0
      %384 = vmatpush1.bf16.msra.mxu0 0
      %385 = vmatprep.subr.bf16.mxu0 0
      %386 = vmatpush1.bf16.msra.mxu0 0
      %387 = vmatprep.subr.bf16.mxu0 0
      %388 = vmatpush1.bf16.msra.mxu0 0
      %389 = vmatprep.subr.bf16.mxu0 0
      %390 = vmatpush1.bf16.msra.mxu0 0
      %391 = vmatprep.mubr.bf16.mxu0 0
      %392 = vmatmul.mubr.bf16.gmra.mrb[0].mxu0 %v353
      %v393 = vpop.f32.mrb[0].mxu0
      %v394 = vadd.f32 0.0, %v393
      %v395 = vpop.f32.mrb[0].mxu0
      %v396 = vpop.f32.mrb[0].mxu0
      %v397 = vadd.f32 0.0, %v396
      %v398 = vpop.f32.mrb[0].mxu0
      %399 = vdwg.mxu0
      %v400 = vadd.f32 %v306, %v394
      %v401 = vadd.f32 %v307, %v397
      %vm402 = vcmask 523264
      %403 = vst.msk [vmem:[#allocation2] sm:$0xff] %vm402, %v400
      %404 = vst.msk [vmem:[#allocation2 + $0x8] sm:$0xff] %vm402, %v401
      // Predicated region
      $region37: #{tree_forward.15} parent=31 // pred_check
        %p405 = pneg %p299
      $region38: #{tree_forward.15} parent=31 // pred_check_branch
        %407 = sbr.rel (%p405) target = $region40
      $region39: #{tree_forward.15} parent=31 // pred_region
        %v408 = vld [vmem:[#allocation2] sm:$0xff]
        %v409 = vld [vmem:[#allocation2 + $0x8] sm:$0xff]
        %v410 = vld [vmem:[%s283] sm:$0xff]
        %v411 = vld [vmem:[%s283 + $0x8] sm:$0xff]
        %413 = vset.pattern.permute.xlu0 0
        %414 = vperm.xlu0 %413, %v410
        %v415 = vpop.permute.xlu0 %414
        %418 = vset.pattern.permute.xlu0 0
        %419 = vperm.xlu0 %418, %v411
        %v420 = vpop.permute.xlu0 %419
        %v422 = vadd.f32 %v408, %v415
        %v423 = vadd.f32 %v409, %v420
        %v424 = vmax.f32 %v422, 0.0
        %v425 = vmax.f32 %v423, 0.0
        %v426 = vpack.c.bf16 %v425, %v424
        %v428 = vunpack.c.l.b16 %v426
        %v429 = vunpack.c.h.b16 %v426
        %v430 = vpack.c.b16 %v428, %v428
        %v431 = vpack.c.b16 %v429, %v429
        %vm434 = vcmask 519168
        %435 = vst.msk [vmem:[%s296] sm:$0xf] %vm434, %v430
        %436 = vst.msk [vmem:[%s296 + $0x4] sm:$0xf] %vm434, %v431
      $region40: #{tree_forward.15} parent=31 // pred_fallthru
        _
      %s437 = smul.u32 2, %s21
      %p438 = scmp.lt.s32.totalorder %s20, 1
      %s439 = scalar_select %p438, %s20, 1
      %p440 = scmp.lt.s32.totalorder %s437, 1
      %s441 = scalar_select %p440, %s437, 1
      %p442 = scmp.lt.s32.totalorder %s22, 0
      %s443 = scalar_select %p442, %s22, 0
      %s444 = sadd.s32 %s443, %s441
      %s445 = smul.addr %s439, 2
      %s446 = sadd.s32 %s444, %s445
      %s447 = smul.addr %s446, 4
      %s448 = scalar_lea.vmem %s3, %s447
      // Predicated region
      $region41: #{tree_forward.15} parent=31 // pred_check
        %p449 = pneg %p146
      $region42: #{tree_forward.15} parent=31 // pred_check_branch
        %451 = sbr.rel (%p449) target = $region44
      $region43: #{tree_forward.15} parent=31 // pred_region
        %s452 = smul.u32 2, %s21
      $region44: #{tree_forward.15} parent=31 // pred_fallthru
        _
    $region32: #{tree_forward.15} parent=5 // pred_fallthru
      _
    %p453 = scmp.le.s32.totalorder 2, %s9
    // Predicated region
    $region45: #{tree_forward.15} parent=5 // pred_check
      %p454 = pneg %p453
    $region46: #{tree_forward.15} parent=5 // pred_check_branch
      %456 = sbr.rel (%p454) target = $region48
    $region47: #{tree_forward.15} parent=5 // pred_region
      %s457 = ssub.s32 %s9, 2
      // Predicated region
      $region49: #{tree_forward.15} parent=47 // pred_check
        %p458 = pneg %p152
      $region50: #{tree_forward.15} parent=47 // pred_check_branch
        %460 = sbr.rel (%p458) target = $region52
      $region51: #{tree_forward.15} parent=47 // pred_region
        %s461 = smul.u32 2, %s25
        %p462 = scmp.lt.s32.totalorder %s24, 1
        %s463 = scalar_select %p462, %s24, 1
        %p464 = scmp.lt.s32.totalorder %s461, 1
        %s465 = scalar_select %p464, %s461, 1
        %p466 = scmp.lt.s32.totalorder %s26, 0
        %s467 = scalar_select %p466, %s26, 0
        %s468 = sadd.s32 %s467, %s465
        %s469 = smul.addr %s463, 2
        %s470 = sadd.s32 %s468, %s469
        %s471 = smul.addr %s470, 4
        %s472 = scalar_lea.vmem %s3, %s471
      $region52: #{tree_forward.15} parent=47 // pred_fallthru
        _
    $region48: #{tree_forward.15} parent=5 // pred_fallthru
      _
  $region6: #{tree_forward.15} parent=0 // loop_footer
    %s13 = sadd.s32 1, %s9
  $region7: #{tree_forward.15} parent=0 // loop_footer_branch
    %8 = sbr.rel target = $region3
  $region8: #{tree_forward.15} parent=0 // loop_exit
    _

// kernel: tree_forward.13
$region0: #{tree_forward.13}
  #allocation0 [shape = 'u32[]', space=smem, size = 0x4, offset = 0x4, fixed_abs, tag = 'smem constant byte address 0x4 - core index']
  #allocation1 [shape = 'u32[144,128]{1,0:T(1,128)}', space=vmem, size = 0x12000, scoped, tag = 'internal scratch']
  %s0 = inlined_call_operand.vmem [shape: bf16[16,64], index: 0, kind: input, shape index: {}]
  %s1 = inlined_call_operand.vmem [shape: bf16[16,64], index: 1, kind: input, shape index: {}]
  %s2 = inlined_call_operand.vmem [shape: bf16[16,64], index: 2, kind: input, shape index: {}]
  %s3 = inlined_call_operand.vmem [shape: bf16[16,64], index: 3, kind: input, shape index: {}]
  %s4 = inlined_call_operand.vmem [shape: bf16[16,64], index: 4, kind: output, shape index: {}]
  %s5 = sld [smem:[#allocation0]]
  $region26: #{tree_forward.13} parent=0
    _
  %s7 = ssub.s32 1, %s5
  %s8 = scalar_select 0, %s7, %s5
  // Predicated region
  $region2: #{tree_forward.13} parent=0 // pred_check
    _
  $region3: #{tree_forward.13} parent=0 // pred_check_branch
    %10 = sbr.rel (0) target = $region5
  $region4: #{tree_forward.13} parent=0 // pred_region
    _
  $region5: #{tree_forward.13} parent=0 // pred_fallthru
    _
  // Predicated region
  $region6: #{tree_forward.13} parent=0 // pred_check
    _
  $region7: #{tree_forward.13} parent=0 // pred_check_branch
    %12 = sbr.rel (0) target = $region9
  $region8: #{tree_forward.13} parent=0 // pred_region
    _
  $region9: #{tree_forward.13} parent=0 // pred_fallthru
    _
  // Predicated region
  $region10: #{tree_forward.13} parent=0 // pred_check
    _
  $region11: #{tree_forward.13} parent=0 // pred_check_branch
    %14 = sbr.rel (0) target = $region13
  $region12: #{tree_forward.13} parent=0 // pred_region
    _
  $region13: #{tree_forward.13} parent=0 // pred_fallthru
    _
  // Predicated region
  $region14: #{tree_forward.13} parent=0 // pred_check
    _
  $region15: #{tree_forward.13} parent=0 // pred_check_branch
    %16 = sbr.rel (0) target = $region17
  $region16: #{tree_forward.13} parent=0 // pred_region
    _
  $region17: #{tree_forward.13} parent=0 // pred_fallthru
    _
  %v17 = vld [vmem:[%s0] sm:$0xf]
  %v18 = vld [vmem:[%s0 + $0x4] sm:$0xf]
  %v19 = vld [vmem:[%s1] sm:$0xf]
  %v20 = vld [vmem:[%s1 + $0x4] sm:$0xf]
  %v21 = vmax.bf16 %v17, %v19
  %v22 = vmax.bf16 %v18, %v20
  %v23 = vld [vmem:[%s2] sm:$0xf]
  %v24 = vld [vmem:[%s2 + $0x4] sm:$0xf]
  %v25 = vld [vmem:[%s3] sm:$0xf]
  %v26 = vld [vmem:[%s3 + $0x4] sm:$0xf]
  %v27 = vmax.bf16 %v23, %v25
  %v28 = vmax.bf16 %v24, %v26
  %v29 = vmax.bf16 %v21, %v27
  %v30 = vmax.bf16 %v22, %v28
  %vm31 = vcmask 519168
  %32 = vst.msk [vmem:[%s4] sm:$0xf] %vm31, %v29
  %33 = vst.msk [vmem:[%s4 + $0x4] sm:$0xf] %vm31, %v30
  // Predicated region
  $region18: #{tree_forward.13} parent=0 // pred_check
    _
  $region19: #{tree_forward.13} parent=0 // pred_check_branch
    %35 = sbr.rel (0) target = $region21
  $region20: #{tree_forward.13} parent=0 // pred_region
    _
  $region21: #{tree_forward.13} parent=0 // pred_fallthru
    _
  // Predicated region
  $region22: #{tree_forward.13} parent=0 // pred_check
    _
  $region23: #{tree_forward.13} parent=0 // pred_check_branch
    %37 = sbr.rel (0) target = $region25
  $region24: #{tree_forward.13} parent=0 // pred_region
    _
  $region25: #{tree_forward.13} parent=0 // pred_fallthru
    _

// kernel: tree_forward.14
$region0: #{tree_forward.14}
  #allocation0 [shape = 'u32[]', space=smem, size = 0x4, offset = 0x4, fixed_abs, tag = 'smem constant byte address 0x4 - core index']
  #allocation1 [shape = 'u32[144,128]{1,0:T(1,128)}', space=vmem, size = 0x12000, scoped, tag = 'internal scratch']
  #allocation2 [shape = 'f32[16,64]{1,0:T(8,128)}', space=vmem, size = 0x2000, scoped, tag = 'scratch operand']
  %s0 = inlined_call_operand.vmem [shape: bf16[16,8], index: 0, kind: input, shape index: {}]
  %s1 = inlined_call_operand.vmem [shape: bf16[2,8,64], index: 1, kind: input, shape index: {}]
  %s2 = inlined_call_operand.vmem [shape: f32[16,1], index: 2, kind: input, shape index: {}]
  %s3 = inlined_call_operand.vmem [shape: bf16[2,16,64], index: 3, kind: output, shape index: {}]
  %s4 = sld [smem:[#allocation0]]
  $region53: #{tree_forward.14} parent=0
    _
  %s6 = ssub.s32 1, %s4
  %s7 = scalar_select 0, %s6, %s4
  loop: start=0, step=1, limit=4
  $region2: #{tree_forward.14} parent=0 // loop_pre_header
    _
  $region3: #{tree_forward.14} parent=0 // loop_header
    %s9 = sphi 0, %s13
    %p10 = scmp.ge.s32.totalorder %s9, 4
    %s16 = sphi 0, %s42
    %s17 = sphi 0, %s38
    %s18 = sphi 0, %s34
    %s19 = sphi 0, %s30
    %s20 = sphi 0, %s16
    %s21 = sphi 0, %s17
    %s22 = sphi 0, %s18
    %s23 = sphi 0, %s19
    %s24 = sphi 0, %s20
    %s25 = sphi 0, %s21
    %s26 = sphi 0, %s22
    %s27 = sphi 0, %s23
    %s47 = sphi 0, %s49
    %s50 = sphi 0, %s47
    %s51 = sphi 0, %s50
    %s67 = sphi 0, %s51
    %s77 = sphi 0, %s79
    %s80 = sphi 0, %s77
    %s81 = sphi 0, %s80
    %s97 = sphi 0, %s81
    %s103 = sphi 0, %s105
    %s106 = sphi 0, %s103
    %s107 = sphi 0, %s106
    %s123 = sphi 0, %s107
    %s133 = sphi 0, %s135
    %s136 = sphi 0, %s133
    %s137 = sphi 0, %s136
    %s153 = sphi 0, %s137
  $region4: #{tree_forward.14} parent=0 // loop_header_branch
    %12 = sbr.rel (%p10) target = $region8
  $region5: #{tree_forward.14} parent=0 // loop_body
    %s14 = ssub.s32 %s9, 1
    %s15 = ssub.s32 %s9, 2
    %s28 = sadd.s32 1, %s19
    %p29 = scmp.ge.s32.totalorder %s28, 1
    %s30 = scalar_select %p29, 0, %s28
    %s31 = sadd.s32 1, %s18
    %s32 = scalar_select %p29, %s31, %s18
    %p33 = scmp.ge.s32.totalorder %s32, 1
    %s34 = scalar_select %p33, 0, %s32
    %s35 = sadd.s32 1, %s17
    %s36 = scalar_select %p33, %s35, %s17
    %p37 = scmp.ge.s32.totalorder %s36, 1
    %s38 = scalar_select %p37, 0, %s36
    %s39 = sadd.s32 1, %s16
    %s40 = scalar_select %p37, %s39, %s16
    %p41 = scmp.ge.s32.totalorder %s40, 2
    %s42 = scalar_select %p41, 0, %s40
    %s43 = ssub.s32 %s17, %s38
    %s44 = ssub.s32 %s19, %s30
    %s45 = sor.u32 %s43, %s44
    %p46 = scmp.eq.s32.totalorder %s45, 0
    %s48 = sadd.s32 %s47, 1
    %s49 = scalar_select %p46, %s47, %s48
    %p52 = pneg %p46
    %p53 = scmp.eq.s32.totalorder %s9, 1
    %p54 = por %p52, %p53
    %p55 = scmp.ne.s32.totalorder %s47, %s50
    %p56 = scmp.eq.s32.totalorder %s9, 0
    %p57 = por %p55, %p56
    %p58 = scmp.ne.s32.totalorder %s47, %s50
    %p59 = scmp.eq.s32.totalorder %s14, 1
    %p60 = por %p58, %p59
    %p61 = scmp.ne.s32.totalorder %s50, %s51
    %p62 = scmp.eq.s32.totalorder %s14, 0
    %p63 = por %p61, %p62
    %p64 = scmp.ne.s32.totalorder %s50, %s51
    %p65 = scmp.eq.s32.totalorder %s15, 1
    %p66 = por %p64, %p65
    %p68 = scmp.ne.s32.totalorder %s51, %s67
    %p69 = scmp.eq.s32.totalorder %s15, 0
    %p70 = por %p68, %p69
    %s71 = ssub.s32 %s16, %s42
    %s72 = ssub.s32 %s19, %s30
    %s73 = sor.u32 %s71, %s72
    %s74 = ssub.s32 %s18, %s34
    %s75 = sor.u32 %s73, %s74
    %p76 = scmp.eq.s32.totalorder %s75, 0
    %s78 = sadd.s32 %s77, 1
    %s79 = scalar_select %p76, %s77, %s78
    %p82 = pneg %p76
    %p83 = scmp.eq.s32.totalorder %s9, 1
    %p84 = por %p82, %p83
    %p85 = scmp.ne.s32.totalorder %s77, %s80
    %p86 = scmp.eq.s32.totalorder %s9, 0
    %p87 = por %p85, %p86
    %p88 = scmp.ne.s32.totalorder %s77, %s80
    %p89 = scmp.eq.s32.totalorder %s14, 1
    %p90 = por %p88, %p89
    %p91 = scmp.ne.s32.totalorder %s80, %s81
    %p92 = scmp.eq.s32.totalorder %s14, 0
    %p93 = por %p91, %p92
    %p94 = scmp.ne.s32.totalorder %s80, %s81
    %p95 = scmp.eq.s32.totalorder %s15, 1
    %p96 = por %p94, %p95
    %p98 = scmp.ne.s32.totalorder %s81, %s97
    %p99 = scmp.eq.s32.totalorder %s15, 0
    %p100 = por %p98, %p99
    %s101 = ssub.s32 %s17, %s38
    %p102 = scmp.eq.s32.totalorder %s101, 0
    %s104 = sadd.s32 %s103, 1
    %s105 = scalar_select %p102, %s103, %s104
    %p108 = pneg %p102
    %p109 = scmp.eq.s32.totalorder %s9, 1
    %p110 = por %p108, %p109
    %p111 = scmp.ne.s32.totalorder %s103, %s106
    %p112 = scmp.eq.s32.totalorder %s9, 0
    %p113 = por %p111, %p112
    %p114 = scmp.ne.s32.totalorder %s103, %s106
    %p115 = scmp.eq.s32.totalorder %s14, 1
    %p116 = por %p114, %p115
    %p117 = scmp.ne.s32.totalorder %s106, %s107
    %p118 = scmp.eq.s32.totalorder %s14, 0
    %p119 = por %p117, %p118
    %p120 = scmp.ne.s32.totalorder %s106, %s107
    %p121 = scmp.eq.s32.totalorder %s15, 1
    %p122 = por %p120, %p121
    %p124 = scmp.ne.s32.totalorder %s107, %s123
    %p125 = scmp.eq.s32.totalorder %s15, 0
    %p126 = por %p124, %p125
    %s127 = ssub.s32 %s16, %s42
    %s128 = ssub.s32 %s17, %s38
    %s129 = sor.u32 %s127, %s128
    %s130 = ssub.s32 %s18, %s34
    %s131 = sor.u32 %s129, %s130
    %p132 = scmp.eq.s32.totalorder %s131, 0
    %s134 = sadd.s32 %s133, 1
    %s135 = scalar_select %p132, %s133, %s134
    %p138 = pneg %p132
    %p139 = scmp.eq.s32.totalorder %s9, 1
    %p140 = por %p138, %p139
    %p141 = scmp.ne.s32.totalorder %s133, %s136
    %p142 = scmp.eq.s32.totalorder %s9, 0
    %p143 = por %p141, %p142
    %p144 = scmp.ne.s32.totalorder %s133, %s136
    %p145 = scmp.eq.s32.totalorder %s14, 1
    %p146 = por %p144, %p145
    %p147 = scmp.ne.s32.totalorder %s136, %s137
    %p148 = scmp.eq.s32.totalorder %s14, 0
    %p149 = por %p147, %p148
    %p150 = scmp.ne.s32.totalorder %s136, %s137
    %p151 = scmp.eq.s32.totalorder %s15, 1
    %p152 = por %p150, %p151
    %p154 = scmp.ne.s32.totalorder %s137, %s153
    %p155 = scmp.eq.s32.totalorder %s15, 0
    %p156 = por %p154, %p155
    %p157 = scmp.le.s32.totalorder 1, %s9
    %p158 = scmp.lt.s32.totalorder %s9, 3
    %p159 = pnand %p157, %p158
    %p160 = pneg %p159
    // Predicated region
    $region9: #{tree_forward.14} parent=5 // pred_check
      _
    $region10: #{tree_forward.14} parent=5 // pred_check_branch
      %162 = sbr.rel (%p159) target = $region12
    $region11: #{tree_forward.14} parent=5 // pred_region
      %s163 = ssub.s32 %s9, 1
      // Predicated region
      $region13: #{tree_forward.14} parent=11 // pred_check
        %p164 = pneg %p63
      $region14: #{tree_forward.14} parent=11 // pred_check_branch
        %166 = sbr.rel (%p164) target = $region16
      $region15: #{tree_forward.14} parent=11 // pred_region
        %s167 = smul.u32 2, %s21
        %p168 = scmp.lt.s32.totalorder %s167, 1
        %s169 = scalar_select %p168, %s167, 1
        %p170 = scmp.lt.s32.totalorder %s23, 0
        %s171 = scalar_select %p170, %s23, 0
        %s172 = sadd.s32 %s171, %s169
        %s173 = smul.addr %s172, 4
        %s174 = scalar_lea.vmem %s0, %s173
        %s175 = smul.u32 2, %s21
      $region16: #{tree_forward.14} parent=11 // pred_fallthru
        _
      // Predicated region
      $region17: #{tree_forward.14} parent=11 // pred_check
        %p176 = pneg %p119
      $region18: #{tree_forward.14} parent=11 // pred_check_branch
        %178 = sbr.rel (%p176) target = $region20
      $region19: #{tree_forward.14} parent=11 // pred_region
        %s179 = smul.u32 2, %s21
        %p180 = scmp.lt.s32.totalorder %s179, 1
        %s181 = scalar_select %p180, %s179, 1
        %s182 = smul.addr %s181, 8
        %s183 = scalar_lea.vmem %s2, %s182
        %s184 = smul.u32 2, %s21
      $region20: #{tree_forward.14} parent=11 // pred_fallthru
        _
    $region12: #{tree_forward.14} parent=5 // pred_fallthru
      _
    %p185 = scmp.lt.s32.totalorder %s9, 2
    // Predicated region
    $region21: #{tree_forward.14} parent=5 // pred_check
      %p186 = pneg %p185
    $region22: #{tree_forward.14} parent=5 // pred_check_branch
      %188 = sbr.rel (%p186) target = $region24
    $region23: #{tree_forward.14} parent=5 // pred_region
      // Predicated region
      $region25: #{tree_forward.14} parent=23 // pred_check
        %p189 = pneg %p87
      $region26: #{tree_forward.14} parent=23 // pred_check_branch
        %191 = sbr.rel (%p189) target = $region28
      $region27: #{tree_forward.14} parent=23 // pred_region
        %p192 = scmp.lt.s32.totalorder %s16, 1
        %s193 = scalar_select %p192, %s16, 1
        %p194 = scmp.lt.s32.totalorder %s19, 0
        %s195 = scalar_select %p194, %s19, 0
        %p196 = scmp.lt.s32.totalorder %s18, 0
        %s197 = scalar_select %p196, %s18, 0
        %s198 = sadd.s32 %s197, %s195
        %s199 = sadd.s32 %s198, %s193
        %s200 = smul.addr %s199, 4
        %s201 = scalar_lea.vmem %s1, %s200
      $region28: #{tree_forward.14} parent=23 // pred_fallthru
        _
    $region24: #{tree_forward.14} parent=5 // pred_fallthru
      _
    %p202 = scmp.le.s32.totalorder 1, %s9
    %p203 = scmp.lt.s32.totalorder %s9, 3
    %p204 = pnand %p202, %p203
    %p205 = pneg %p204
    // Predicated region
    $region29: #{tree_forward.14} parent=5 // pred_check
      _
    $region30: #{tree_forward.14} parent=5 // pred_check_branch
      %207 = sbr.rel (%p204) target = $region32
    $region31: #{tree_forward.14} parent=5 // pred_region
      %s208 = ssub.s32 %s9, 1
      %s209 = smul.u32 2, %s21
      %p210 = scmp.lt.s32.totalorder %s209, 1
      %s211 = scalar_select %p210, %s209, 1
      %p212 = scmp.lt.s32.totalorder %s23, 0
      %s213 = scalar_select %p212, %s23, 0
      %s214 = sadd.s32 %s213, %s211
      %s215 = smul.addr %s214, 4
      %s216 = scalar_lea.vmem %s0, %s215
      %p217 = pneg %p63
      %p218 = pneg %p60
      %p219 = scmp.lt.s32.totalorder %s20, 1
      %s220 = scalar_select %p219, %s20, 1
      %p221 = scmp.lt.s32.totalorder %s23, 0
      %s222 = scalar_select %p221, %s23, 0
      %p223 = scmp.lt.s32.totalorder %s22, 0
      %s224 = scalar_select %p223, %s22, 0
      %s225 = sadd.s32 %s224, %s222
      %s226 = sadd.s32 %s225, %s220
      %s227 = smul.addr %s226, 4
      %s228 = scalar_lea.vmem %s1, %s227
      %p229 = pneg %p93
      %p230 = pneg %p90
      %s231 = smul.u32 2, %s21
      %p232 = scmp.lt.s32.totalorder %s231, 1
      %s233 = scalar_select %p232, %s231, 1
      %s234 = smul.addr %s233, 8
      %s235 = scalar_lea.vmem %s2, %s234
      %p236 = pneg %p119
      %p237 = pneg %p116
      %p238 = pneg %p149
      %p239 = pneg %p146
      %s240 = smul.u32 2, %s21
      %p241 = scmp.lt.s32.totalorder %s20, 1
      %s242 = scalar_select %p241, %s20, 1
      %p243 = scmp.lt.s32.totalorder %s240, 1
      %s244 = scalar_select %p243, %s240, 1
      %p245 = scmp.lt.s32.totalorder %s22, 0
      %s246 = scalar_select %p245, %s22, 0
      %s247 = sadd.s32 %s246, %s244
      %s248 = smul.addr %s242, 2
      %s249 = sadd.s32 %s247, %s248
      %s250 = smul.addr %s249, 4
      %s251 = scalar_lea.vmem %s3, %s250
      %s252 = smul.u32 2, %s21
      %p253 = scmp.lt.s32.totalorder %s252, 1
      %s254 = scalar_select %p253, %s252, 1
      %p255 = scmp.lt.s32.totalorder %s23, 0
      %s256 = scalar_select %p255, %s23, 0
      %s257 = sadd.s32 %s256, %s254
      %s258 = smul.addr %s257, 4
      %s259 = scalar_lea.vmem %s0, %s258
      %s260 = smul.u32 2, %s21
      %p261 = scmp.lt.s32.totalorder %s20, 1
      %s262 = scalar_select %p261, %s20, 1
      %p263 = scmp.lt.s32.totalorder %s23, 0
      %s264 = scalar_select %p263, %s23, 0
      %p265 = scmp.lt.s32.totalorder %s22, 0
      %s266 = scalar_select %p265, %s22, 0
      %s267 = sadd.s32 %s266, %s264
      %s268 = sadd.s32 %s267, %s262
      %s269 = smul.addr %s268, 4
      %s270 = scalar_lea.vmem %s1, %s269
      %s271 = smul.u32 2, %s21
      %p272 = scmp.lt.s32.totalorder %s271, 1
      %s273 = scalar_select %p272, %s271, 1
      %s274 = smul.addr %s273, 8
      %s275 = scalar_lea.vmem %s2, %s274
      %s276 = smul.u32 2, %s21
      %s277 = smul.u32 2, %s21
      %p278 = scmp.lt.s32.totalorder %s20, 1
      %s279 = scalar_select %p278, %s20, 1
      %p280 = scmp.lt.s32.totalorder %s277, 1
      %s281 = scalar_select %p280, %s277, 1
      %p282 = scmp.lt.s32.totalorder %s22, 0
      %s283 = scalar_select %p282, %s22, 0
      %s284 = sadd.s32 %s283, %s281
      %s285 = smul.addr %s279, 2
      %s286 = sadd.s32 %s284, %s285
      %s287 = smul.addr %s286, 4
      %s288 = scalar_lea.vmem %s3, %s287
      %s289 = smul.u32 2, %s21
      %p291 = scmp.eq.s32.totalorder %s23, 0
      // Predicated region
      $region33: #{tree_forward.14} parent=31 // pred_check
        %p292 = pneg %p291
      $region34: #{tree_forward.14} parent=31 // pred_check_branch
        %294 = sbr.rel (%p292) target = $region36
      $region35: #{tree_forward.14} parent=31 // pred_region
        %vm295 = vcmask 523264
        %296 = vst.msk [vmem:[#allocation2] sm:$0xff] %vm295, 0.0
        %297 = vst.msk [vmem:[#allocation2 + $0x8] sm:$0xff] %vm295, 0.0
      $region36: #{tree_forward.14} parent=31 // pred_fallthru
        _
      %v298 = vld [vmem:[#allocation2] sm:$0xff]
      %v299 = vld [vmem:[#allocation2 + $0x8] sm:$0xff]
      %v300 = vld [vmem:[%s259] sm:$0xf]
      %v301 = vld [vmem:[%s259 + $0x4] sm:$0xf]
      %v302 = vld [vmem:[%s270] sm:$0xf]
      %v305 = vunpack.c.l.b16 %v300
      %v306 = vunpack.c.l.b16 %v301
      %v307 = vpack.c.b16 %v306, %v305
      %vm308 = vcmask 64512
      %v310 = vsel %vm308, %v307, 0
      %vm312 = vcmask 1043456
      %v314 = vsel %vm312, %v302, 0
      %316 = vmatprep.subr.bf16.mxu0 0
      %317 = vmatpush1.bf16.msra.mxu0 %v314
      %318 = vmatprep.subr.bf16.mxu0 0
      %319 = vmatpush1.bf16.msra.mxu0 0
      %320 = vmatprep.subr.bf16.mxu0 0
      %321 = vmatpush1.bf16.msra.mxu0 0
      %322 = vmatprep.subr.bf16.mxu0 0
      %323 = vmatpush1.bf16.msra.mxu0 0
      %324 = vmatprep.subr.bf16.mxu0 0
      %325 = vmatpush1.bf16.msra.mxu0 0
      %326 = vmatprep.subr.bf16.mxu0 0
      %327 = vmatpush1.bf16.msra.mxu0 0
      %328 = vmatprep.subr.bf16.mxu0 0
      %329 = vmatpush1.bf16.msra.mxu0 0
      %330 = vmatprep.subr.bf16.mxu0 0
      %331 = vmatpush1.bf16.msra.mxu0 0
      %332 = vmatprep.subr.bf16.mxu0 0
      %333 = vmatpush1.bf16.msra.mxu0 0
      %334 = vmatprep.subr.bf16.mxu0 0
      %335 = vmatpush1.bf16.msra.mxu0 0
      %336 = vmatprep.subr.bf16.mxu0 0
      %337 = vmatpush1.bf16.msra.mxu0 0
      %338 = vmatprep.subr.bf16.mxu0 0
      %339 = vmatpush1.bf16.msra.mxu0 0
      %340 = vmatprep.subr.bf16.mxu0 0
      %341 = vmatpush1.bf16.msra.mxu0 0
      %342 = vmatprep.subr.bf16.mxu0 0
      %343 = vmatpush1.bf16.msra.mxu0 0
      %344 = vmatprep.subr.bf16.mxu0 0
      %345 = vmatpush1.bf16.msra.mxu0 0
      %346 = vmatprep.subr.bf16.mxu0 0
      %347 = vmatpush1.bf16.msra.mxu0 0
      %348 = vmatprep.mubr.bf16.mxu0 0
      %349 = vmatmul.mubr.bf16.gmra.mrb[0].mxu0 %v310
      %v350 = vpop.f32.mrb[0].mxu0
      %v351 = vadd.f32 0.0, %v350
      %v352 = vpop.f32.mrb[0].mxu0
      %v353 = vpop.f32.mrb[0].mxu0
      %v354 = vadd.f32 0.0, %v353
      %v355 = vpop.f32.mrb[0].mxu0
      %356 = vdwg.mxu0
      %v357 = vadd.f32 %v298, %v351
      %v358 = vadd.f32 %v299, %v354
      %vm359 = vcmask 523264
      %360 = vst.msk [vmem:[#allocation2] sm:$0xff] %vm359, %v357
      %361 = vst.msk [vmem:[#allocation2 + $0x8] sm:$0xff] %vm359, %v358
      // Predicated region
      $region37: #{tree_forward.14} parent=31 // pred_check
        %p362 = pneg %p291
      $region38: #{tree_forward.14} parent=31 // pred_check_branch
        %364 = sbr.rel (%p362) target = $region40
      $region39: #{tree_forward.14} parent=31 // pred_region
        %v365 = vld [vmem:[#allocation2] sm:$0xff]
        %v366 = vld [vmem:[#allocation2 + $0x8] sm:$0xff]
        %v367 = vld [vmem:[%s275] sm:$0xff]
        %v368 = vld [vmem:[%s275 + $0x8] sm:$0xff]
        %370 = vset.pattern.permute.xlu0 0
        %371 = vperm.xlu0 %370, %v367
        %v372 = vpop.permute.xlu0 %371
        %375 = vset.pattern.permute.xlu0 0
        %376 = vperm.xlu0 %375, %v368
        %v377 = vpop.permute.xlu0 %376
        %v379 = vadd.f32 %v365, %v372
        %v380 = vadd.f32 %v366, %v377
        %v381 = vpack.c.bf16 %v380, %v379
        %v383 = vunpack.c.l.b16 %v381
        %v384 = vunpack.c.h.b16 %v381
        %v385 = vpack.c.b16 %v383, %v383
        %v386 = vpack.c.b16 %v384, %v384
        %vm389 = vcmask 519168
        %390 = vst.msk [vmem:[%s288] sm:$0xf] %vm389, %v385
        %391 = vst.msk [vmem:[%s288 + $0x4] sm:$0xf] %vm389, %v386
      $region40: #{tree_forward.14} parent=31 // pred_fallthru
        _
      %s392 = smul.u32 2, %s21
      %p393 = scmp.lt.s32.totalorder %s20, 1
      %s394 = scalar_select %p393, %s20, 1
      %p395 = scmp.lt.s32.totalorder %s392, 1
      %s396 = scalar_select %p395, %s392, 1
      %p397 = scmp.lt.s32.totalorder %s22, 0
      %s398 = scalar_select %p397, %s22, 0
      %s399 = sadd.s32 %s398, %s396
      %s400 = smul.addr %s394, 2
      %s401 = sadd.s32 %s399, %s400
      %s402 = smul.addr %s401, 4
      %s403 = scalar_lea.vmem %s3, %s402
      // Predicated region
      $region41: #{tree_forward.14} parent=31 // pred_check
        %p404 = pneg %p146
      $region42: #{tree_forward.14} parent=31 // pred_check_branch
        %406 = sbr.rel (%p404) target = $region44
      $region43: #{tree_forward.14} parent=31 // pred_region
        %s407 = smul.u32 2, %s21
      $region44: #{tree_forward.14} parent=31 // pred_fallthru
        _
    $region32: #{tree_forward.14} parent=5 // pred_fallthru
      _
    %p408 = scmp.le.s32.totalorder 2, %s9
    // Predicated region
    $region45: #{tree_forward.14} parent=5 // pred_check
      %p409 = pneg %p408
    $region46: #{tree_forward.14} parent=5 // pred_check_branch
      %411 = sbr.rel (%p409) target = $region48
    $region47: #{tree_forward.14} parent=5 // pred_region
      %s412 = ssub.s32 %s9, 2
      // Predicated region
      $region49: #{tree_forward.14} parent=47 // pred_check
        %p413 = pneg %p152
      $region50: #{tree_forward.14} parent=47 // pred_check_branch
        %415 = sbr.rel (%p413) target = $region52
      $region51: #{tree_forward.14} parent=47 // pred_region
        %s416 = smul.u32 2, %s25
        %p417 = scmp.lt.s32.totalorder %s24, 1
        %s418 = scalar_select %p417, %s24, 1
        %p419 = scmp.lt.s32.totalorder %s416, 1
        %s420 = scalar_select %p419, %s416, 1
        %p421 = scmp.lt.s32.totalorder %s26, 0
        %s422 = scalar_select %p421, %s26, 0
        %s423 = sadd.s32 %s422, %s420
        %s424 = smul.addr %s418, 2
        %s425 = sadd.s32 %s423, %s424
        %s426 = smul.addr %s425, 4
        %s427 = scalar_lea.vmem %s3, %s426
      $region52: #{tree_forward.14} parent=47 // pred_fallthru
        _
    $region48: #{tree_forward.14} parent=5 // pred_fallthru
      _
  $region6: #{tree_forward.14} parent=0 // loop_footer
    %s13 = sadd.s32 1, %s9
  $region7: #{tree_forward.14} parent=0 // loop_footer_branch
    %8 = sbr.rel target = $region3
  $region8: #{tree_forward.14} parent=0 // loop_exit
    _

// kernel: tree_forward.17
$region0: #{tree_forward.17}
  #allocation0 [shape = 'u32[]', space=smem, size = 0x4, offset = 0x4, fixed_abs, tag = 'smem constant byte address 0x4 - core index']
  #allocation1 [shape = 'u32[144,128]{1,0:T(1,128)}', space=vmem, size = 0x12000, scoped, tag = 'internal scratch']
  %s0 = inlined_call_operand.vmem [shape: bf16[9,16,16], index: 0, kind: input, shape index: {}]
  %s1 = inlined_call_operand.vmem [shape: bf16[2,16,120], index: 1, kind: input, shape index: {}]
  %s2 = inlined_call_operand.vmem [shape: f32[16,1], index: 2, kind: input, shape index: {}]
  %s3 = inlined_call_operand.vmem [shape: bf16[2,16,80], index: 3, kind: output, shape index: {}]
  %s4 = sld [smem:[#allocation0]]
  $region45: #{tree_forward.17} parent=0
    _
  %s6 = ssub.s32 1, %s4
  %s7 = scalar_select 0, %s6, %s4
  loop: start=0, step=1, limit=4
  $region2: #{tree_forward.17} parent=0 // loop_pre_header
    _
  $region3: #{tree_forward.17} parent=0 // loop_header
    %s9 = sphi 0, %s13
    %p10 = scmp.ge.s32.totalorder %s9, 4
    %s16 = sphi 0, %s28
    %s17 = sphi 0, %s24
    %s18 = sphi 0, %s16
    %s19 = sphi 0, %s17
    %s20 = sphi 0, %s18
    %s21 = sphi 0, %s19
    %s31 = sphi 0, %s33
    %s34 = sphi 0, %s31
    %s35 = sphi 0, %s34
    %s51 = sphi 0, %s35
    %s57 = sphi 0, %s59
    %s60 = sphi 0, %s57
    %s61 = sphi 0, %s60
    %s77 = sphi 0, %s61
    %s83 = sphi 0, %s85
    %s86 = sphi 0, %s83
    %s87 = sphi 0, %s86
    %s103 = sphi 0, %s87
    %s111 = sphi 0, %s113
    %s114 = sphi 0, %s111
    %s115 = sphi 0, %s114
    %s131 = sphi 0, %s115
  $region4: #{tree_forward.17} parent=0 // loop_header_branch
    %12 = sbr.rel (%p10) target = $region8
  $region5: #{tree_forward.17} parent=0 // loop_body
    %s14 = ssub.s32 %s9, 1
    %s15 = ssub.s32 %s9, 2
    %s22 = sadd.s32 1, %s17
    %p23 = scmp.ge.s32.totalorder %s22, 1
    %s24 = scalar_select %p23, 0, %s22
    %s25 = sadd.s32 1, %s16
    %s26 = scalar_select %p23, %s25, %s16
    %p27 = scmp.ge.s32.totalorder %s26, 2
    %s28 = scalar_select %p27, 0, %s26
    %s29 = ssub.s32 %s17, %s24
    %p30 = scmp.eq.s32.totalorder %s29, 0
    %s32 = sadd.s32 %s31, 1
    %s33 = scalar_select %p30, %s31, %s32
    %p36 = pneg %p30
    %p37 = scmp.eq.s32.totalorder %s9, 1
    %p38 = por %p36, %p37
    %p39 = scmp.ne.s32.totalorder %s31, %s34
    %p40 = scmp.eq.s32.totalorder %s9, 0
    %p41 = por %p39, %p40
    %p42 = scmp.ne.s32.totalorder %s31, %s34
    %p43 = scmp.eq.s32.totalorder %s14, 1
    %p44 = por %p42, %p43
    %p45 = scmp.ne.s32.totalorder %s34, %s35
    %p46 = scmp.eq.s32.totalorder %s14, 0
    %p47 = por %p45, %p46
    %p48 = scmp.ne.s32.totalorder %s34, %s35
    %p49 = scmp.eq.s32.totalorder %s15, 1
    %p50 = por %p48, %p49
    %p52 = scmp.ne.s32.totalorder %s35, %s51
    %p53 = scmp.eq.s32.totalorder %s15, 0
    %p54 = por %p52, %p53
    %s55 = ssub.s32 %s16, %s28
    %p56 = scmp.eq.s32.totalorder %s55, 0
    %s58 = sadd.s32 %s57, 1
    %s59 = scalar_select %p56, %s57, %s58
    %p62 = pneg %p56
    %p63 = scmp.eq.s32.totalorder %s9, 1
    %p64 = por %p62, %p63
    %p65 = scmp.ne.s32.totalorder %s57, %s60
    %p66 = scmp.eq.s32.totalorder %s9, 0
    %p67 = por %p65, %p66
    %p68 = scmp.ne.s32.totalorder %s57, %s60
    %p69 = scmp.eq.s32.totalorder %s14, 1
    %p70 = por %p68, %p69
    %p71 = scmp.ne.s32.totalorder %s60, %s61
    %p72 = scmp.eq.s32.totalorder %s14, 0
    %p73 = por %p71, %p72
    %p74 = scmp.ne.s32.totalorder %s60, %s61
    %p75 = scmp.eq.s32.totalorder %s15, 1
    %p76 = por %p74, %p75
    %p78 = scmp.ne.s32.totalorder %s61, %s77
    %p79 = scmp.eq.s32.totalorder %s15, 0
    %p80 = por %p78, %p79
    %s81 = ssub.s32 %s17, %s24
    %p82 = scmp.eq.s32.totalorder %s81, 0
    %s84 = sadd.s32 %s83, 1
    %s85 = scalar_select %p82, %s83, %s84
    %p88 = pneg %p82
    %p89 = scmp.eq.s32.totalorder %s9, 1
    %p90 = por %p88, %p89
    %p91 = scmp.ne.s32.totalorder %s83, %s86
    %p92 = scmp.eq.s32.totalorder %s9, 0
    %p93 = por %p91, %p92
    %p94 = scmp.ne.s32.totalorder %s83, %s86
    %p95 = scmp.eq.s32.totalorder %s14, 1
    %p96 = por %p94, %p95
    %p97 = scmp.ne.s32.totalorder %s86, %s87
    %p98 = scmp.eq.s32.totalorder %s14, 0
    %p99 = por %p97, %p98
    %p100 = scmp.ne.s32.totalorder %s86, %s87
    %p101 = scmp.eq.s32.totalorder %s15, 1
    %p102 = por %p100, %p101
    %p104 = scmp.ne.s32.totalorder %s87, %s103
    %p105 = scmp.eq.s32.totalorder %s15, 0
    %p106 = por %p104, %p105
    %s107 = ssub.s32 %s16, %s28
    %s108 = ssub.s32 %s17, %s24
    %s109 = sor.u32 %s107, %s108
    %p110 = scmp.eq.s32.totalorder %s109, 0
    %s112 = sadd.s32 %s111, 1
    %s113 = scalar_select %p110, %s111, %s112
    %p116 = pneg %p110
    %p117 = scmp.eq.s32.totalorder %s9, 1
    %p118 = por %p116, %p117
    %p119 = scmp.ne.s32.totalorder %s111, %s114
    %p120 = scmp.eq.s32.totalorder %s9, 0
    %p121 = por %p119, %p120
    %p122 = scmp.ne.s32.totalorder %s111, %s114
    %p123 = scmp.eq.s32.totalorder %s14, 1
    %p124 = por %p122, %p123
    %p125 = scmp.ne.s32.totalorder %s114, %s115
    %p126 = scmp.eq.s32.totalorder %s14, 0
    %p127 = por %p125, %p126
    %p128 = scmp.ne.s32.totalorder %s114, %s115
    %p129 = scmp.eq.s32.totalorder %s15, 1
    %p130 = por %p128, %p129
    %p132 = scmp.ne.s32.totalorder %s115, %s131
    %p133 = scmp.eq.s32.totalorder %s15, 0
    %p134 = por %p132, %p133
    %p135 = scmp.le.s32.totalorder 1, %s9
    %p136 = scmp.lt.s32.totalorder %s9, 3
    %p137 = pnand %p135, %p136
    %p138 = pneg %p137
    // Predicated region
    $region9: #{tree_forward.17} parent=5 // pred_check
      _
    $region10: #{tree_forward.17} parent=5 // pred_check_branch
      %140 = sbr.rel (%p137) target = $region12
    $region11: #{tree_forward.17} parent=5 // pred_region
      %s141 = ssub.s32 %s9, 1
      // Predicated region
      $region13: #{tree_forward.17} parent=11 // pred_check
        %p142 = pneg %p47
      $region14: #{tree_forward.17} parent=11 // pred_check_branch
        %144 = sbr.rel (%p142) target = $region16
      $region15: #{tree_forward.17} parent=11 // pred_region
        %s145 = smul.u32 2, %s19
        %p146 = scmp.lt.s32.totalorder %s145, 1
        %s147 = scalar_select %p146, %s145, 1
        %s148 = smul.addr %s147, 4
        %s149 = scalar_lea.vmem %s0, %s148
        %s150 = smul.u32 2, %s19
      $region16: #{tree_forward.17} parent=11 // pred_fallthru
        _
      // Predicated region
      $region17: #{tree_forward.17} parent=11 // pred_check
        %p151 = pneg %p99
      $region18: #{tree_forward.17} parent=11 // pred_check_branch
        %153 = sbr.rel (%p151) target = $region20
      $region19: #{tree_forward.17} parent=11 // pred_region
        %s154 = smul.u32 2, %s19
        %p155 = scmp.lt.s32.totalorder %s154, 1
        %s156 = scalar_select %p155, %s154, 1
        %s157 = smul.addr %s156, 8
        %s158 = scalar_lea.vmem %s2, %s157
        %s159 = smul.u32 2, %s19
      $region20: #{tree_forward.17} parent=11 // pred_fallthru
        _
    $region12: #{tree_forward.17} parent=5 // pred_fallthru
      _
    %p160 = scmp.lt.s32.totalorder %s9, 2
    // Predicated region
    $region21: #{tree_forward.17} parent=5 // pred_check
      %p161 = pneg %p160
    $region22: #{tree_forward.17} parent=5 // pred_check_branch
      %163 = sbr.rel (%p161) target = $region24
    $region23: #{tree_forward.17} parent=5 // pred_region
      // Predicated region
      $region25: #{tree_forward.17} parent=23 // pred_check
        %p164 = pneg %p67
      $region26: #{tree_forward.17} parent=23 // pred_check_branch
        %166 = sbr.rel (%p164) target = $region28
      $region27: #{tree_forward.17} parent=23 // pred_region
        %p167 = scmp.lt.s32.totalorder %s16, 1
        %s168 = scalar_select %p167, %s16, 1
        %s169 = smul.addr %s168, 2
        %s170 = smul.addr %s169, 4
        %s171 = scalar_lea.vmem %s1, %s170
      $region28: #{tree_forward.17} parent=23 // pred_fallthru
        _
    $region24: #{tree_forward.17} parent=5 // pred_fallthru
      _
    %p172 = scmp.le.s32.totalorder 1, %s9
    %p173 = scmp.lt.s32.totalorder %s9, 3
    %p174 = pnand %p172, %p173
    %p175 = pneg %p174
    // Predicated region
    $region29: #{tree_forward.17} parent=5 // pred_check
      _
    $region30: #{tree_forward.17} parent=5 // pred_check_branch
      %177 = sbr.rel (%p174) target = $region32
    $region31: #{tree_forward.17} parent=5 // pred_region
      %s178 = ssub.s32 %s9, 1
      %s179 = smul.u32 2, %s19
      %p180 = scmp.lt.s32.totalorder %s179, 1
      %s181 = scalar_select %p180, %s179, 1
      %s182 = smul.addr %s181, 4
      %s183 = scalar_lea.vmem %s0, %s182
      %p184 = pneg %p47
      %p185 = pneg %p44
      %p186 = scmp.lt.s32.totalorder %s18, 1
      %s187 = scalar_select %p186, %s18, 1
      %s188 = smul.addr %s187, 2
      %s189 = smul.addr %s188, 4
      %s190 = scalar_lea.vmem %s1, %s189
      %p191 = pneg %p73
      %p192 = pneg %p70
      %s193 = smul.u32 2, %s19
      %p194 = scmp.lt.s32.totalorder %s193, 1
      %s195 = scalar_select %p194, %s193, 1
      %s196 = smul.addr %s195, 8
      %s197 = scalar_lea.vmem %s2, %s196
      %p198 = pneg %p99
      %p199 = pneg %p96
      %p200 = pneg %p127
      %p201 = pneg %p124
      %s202 = smul.u32 2, %s19
      %p203 = scmp.lt.s32.totalorder %s18, 1
      %s204 = scalar_select %p203, %s18, 1
      %p205 = scmp.lt.s32.totalorder %s202, 1
      %s206 = scalar_select %p205, %s202, 1
      %s207 = smul.addr %s204, 2
      %s208 = sadd.s32 %s206, %s207
      %s209 = smul.addr %s208, 4
      %s210 = scalar_lea.vmem %s3, %s209
      %s211 = smul.u32 2, %s19
      %p212 = scmp.lt.s32.totalorder %s211, 1
      %s213 = scalar_select %p212, %s211, 1
      %s214 = smul.addr %s213, 4
      %s215 = scalar_lea.vmem %s0, %s214
      %s216 = smul.u32 2, %s19
      %p217 = scmp.lt.s32.totalorder %s18, 1
      %s218 = scalar_select %p217, %s18, 1
      %s219 = smul.addr %s218, 2
      %s220 = smul.addr %s219, 4
      %s221 = scalar_lea.vmem %s1, %s220
      %s222 = smul.u32 2, %s19
      %p223 = scmp.lt.s32.totalorder %s222, 1
      %s224 = scalar_select %p223, %s222, 1
      %s225 = smul.addr %s224, 8
      %s226 = scalar_lea.vmem %s2, %s225
      %s227 = smul.u32 2, %s19
      %s228 = smul.u32 2, %s19
      %p229 = scmp.lt.s32.totalorder %s18, 1
      %s230 = scalar_select %p229, %s18, 1
      %p231 = scmp.lt.s32.totalorder %s228, 1
      %s232 = scalar_select %p231, %s228, 1
      %s233 = smul.addr %s230, 2
      %s234 = sadd.s32 %s232, %s233
      %s235 = smul.addr %s234, 4
      %s236 = scalar_lea.vmem %s3, %s235
      %s237 = smul.u32 2, %s19
      %v239 = vld [vmem:[%s221] sm:$0xf]
      %v240 = vld [vmem:[%s221 + $0x4] sm:$0xf]
      %v241 = vld [vmem:[%s215] sm:$0xf]
      %v242 = vld [vmem:[%s215 + $0x4] sm:$0xf]
      %s243 = scalar_lea.vmem %s215, 8
      %v244 = vld [vmem:[%s243] sm:$0xf]
      %v245 = vld [vmem:[%s243 + $0x4] sm:$0xf]
      %v248 = vunpack.c.l.b16 %v244
      %v249 = vunpack.c.l.b16 %v245
      %v250 = vpack.c.b16 %v249, %v248
      %v253 = vunpack.c.l.b16 %v239
      %v254 = vunpack.c.l.b16 %v240
      %v255 = vpack.c.b16 %v254, %v253
      %256 = vrot.lane.b32.xlu0 %v255, 127
      %v257 = vpop.permute.xlu0 %256
      %vm259 = vcmask 130048
      %v261 = vsel %vm259, %v250, 0
      %263 = vmatprep.subr.bf16.mxu0 0
      %264 = vmatpush1.bf16.msra.mxu0 %v257
      %265 = vmatprep.subr.bf16.mxu0 0
      %266 = vmatpush1.bf16.msra.mxu0 0
      %267 = vmatprep.subr.bf16.mxu0 0
      %268 = vmatpush1.bf16.msra.mxu0 0
      %269 = vmatprep.subr.bf16.mxu0 0
      %270 = vmatpush1.bf16.msra.mxu0 0
      %271 = vmatprep.subr.bf16.mxu0 0
      %272 = vmatpush1.bf16.msra.mxu0 0
      %273 = vmatprep.subr.bf16.mxu0 0
      %274 = vmatpush1.bf16.msra.mxu0 0
      %275 = vmatprep.subr.bf16.mxu0 0
      %276 = vmatpush1.bf16.msra.mxu0 0
      %277 = vmatprep.subr.bf16.mxu0 0
      %278 = vmatpush1.bf16.msra.mxu0 0
      %279 = vmatprep.subr.bf16.mxu0 0
      %280 = vmatpush1.bf16.msra.mxu0 0
      %281 = vmatprep.subr.bf16.mxu0 0
      %282 = vmatpush1.bf16.msra.mxu0 0
      %283 = vmatprep.subr.bf16.mxu0 0
      %284 = vmatpush1.bf16.msra.mxu0 0
      %285 = vmatprep.subr.bf16.mxu0 0
      %286 = vmatpush1.bf16.msra.mxu0 0
      %287 = vmatprep.subr.bf16.mxu0 0
      %288 = vmatpush1.bf16.msra.mxu0 0
      %289 = vmatprep.subr.bf16.mxu0 0
      %290 = vmatpush1.bf16.msra.mxu0 0
      %291 = vmatprep.subr.bf16.mxu0 0
      %292 = vmatpush1.bf16.msra.mxu0 0
      %293 = vmatprep.subr.bf16.mxu0 0
      %294 = vmatpush1.bf16.msra.mxu0 0
      %295 = vmatprep.mubr.bf16.mxu0 0
      %296 = vmatmul.mubr.bf16.gmra.mrb[0].mxu0 %v261
      %v297 = vpop.f32.mrb[0].mxu0
      %v298 = vadd.f32 0.0, %v297
      %v299 = vpop.f32.mrb[0].mxu0
      %v300 = vpop.f32.mrb[0].mxu0
      %v301 = vadd.f32 0.0, %v300
      %v302 = vpop.f32.mrb[0].mxu0
      %303 = vdwg.mxu0
      %v306 = vunpack.c.l.b16 %v241
      %v307 = vunpack.c.l.b16 %v242
      %v308 = vpack.c.b16 %v307, %v306
      %v311 = vsel %vm259, %v308, 0
      %313 = vmatprep.subr.bf16.mxu0 0
      %314 = vmatpush1.bf16.msra.mxu0 %v255
      %315 = vmatprep.subr.bf16.mxu0 0
      %316 = vmatpush1.bf16.msra.mxu0 0
      %317 = vmatprep.subr.bf16.mxu0 0
      %318 = vmatpush1.bf16.msra.mxu0 0
      %319 = vmatprep.subr.bf16.mxu0 0
      %320 = vmatpush1.bf16.msra.mxu0 0
      %321 = vmatprep.subr.bf16.mxu0 0
      %322 = vmatpush1.bf16.msra.mxu0 0
      %323 = vmatprep.subr.bf16.mxu0 0
      %324 = vmatpush1.bf16.msra.mxu0 0
      %325 = vmatprep.subr.bf16.mxu0 0
      %326 = vmatpush1.bf16.msra.mxu0 0
      %327 = vmatprep.subr.bf16.mxu0 0
      %328 = vmatpush1.bf16.msra.mxu0 0
      %329 = vmatprep.subr.bf16.mxu0 0
      %330 = vmatpush1.bf16.msra.mxu0 0
      %331 = vmatprep.subr.bf16.mxu0 0
      %332 = vmatpush1.bf16.msra.mxu0 0
      %333 = vmatprep.subr.bf16.mxu0 0
      %334 = vmatpush1.bf16.msra.mxu0 0
      %335 = vmatprep.subr.bf16.mxu0 0
      %336 = vmatpush1.bf16.msra.mxu0 0
      %337 = vmatprep.subr.bf16.mxu0 0
      %338 = vmatpush1.bf16.msra.mxu0 0
      %339 = vmatprep.subr.bf16.mxu0 0
      %340 = vmatpush1.bf16.msra.mxu0 0
      %341 = vmatprep.subr.bf16.mxu0 0
      %342 = vmatpush1.bf16.msra.mxu0 0
      %343 = vmatprep.subr.bf16.mxu0 0
      %344 = vmatpush1.bf16.msra.mxu0 0
      %345 = vmatprep.mubr.bf16.mxu0 0
      %346 = vmatmul.mubr.bf16.gmra.mrb[0].mxu0 %v311
      %v347 = vpop.f32.mrb[0].mxu0
      %v348 = vadd.f32 %v298, %v347
      %v349 = vpop.f32.mrb[0].mxu0
      %v350 = vpop.f32.mrb[0].mxu0
      %v351 = vadd.f32 %v301, %v350
      %v352 = vpop.f32.mrb[0].mxu0
      %353 = vdwg.mxu0
      %s354 = scalar_lea.vmem %s215, 16
      %v355 = vld [vmem:[%s354] sm:$0xf]
      %v356 = vld [vmem:[%s354 + $0x4] sm:$0xf]
      %v359 = vunpack.c.l.b16 %v355
      %v360 = vunpack.c.l.b16 %v356
      %v361 = vpack.c.b16 %v360, %v359
      %362 = vrot.lane.b32.xlu0 %v255, 126
      %v363 = vpop.permute.xlu0 %362
      %v366 = vsel %vm259, %v361, 0
      %368 = vmatprep.subr.bf16.mxu0 0
      %369 = vmatpush1.bf16.msra.mxu0 %v363
      %370 = vmatprep.subr.bf16.mxu0 0
      %371 = vmatpush1.bf16.msra.mxu0 0
      %372 = vmatprep.subr.bf16.mxu0 0
      %373 = vmatpush1.bf16.msra.mxu0 0
      %374 = vmatprep.subr.bf16.mxu0 0
      %375 = vmatpush1.bf16.msra.mxu0 0
      %376 = vmatprep.subr.bf16.mxu0 0
      %377 = vmatpush1.bf16.msra.mxu0 0
      %378 = vmatprep.subr.bf16.mxu0 0
      %379 = vmatpush1.bf16.msra.mxu0 0
      %380 = vmatprep.subr.bf16.mxu0 0
      %381 = vmatpush1.bf16.msra.mxu0 0
      %382 = vmatprep.subr.bf16.mxu0 0
      %383 = vmatpush1.bf16.msra.mxu0 0
      %384 = vmatprep.subr.bf16.mxu0 0
      %385 = vmatpush1.bf16.msra.mxu0 0
      %386 = vmatprep.subr.bf16.mxu0 0
      %387 = vmatpush1.bf16.msra.mxu0 0
      %388 = vmatprep.subr.bf16.mxu0 0
      %389 = vmatpush1.bf16.msra.mxu0 0
      %390 = vmatprep.subr.bf16.mxu0 0
      %391 = vmatpush1.bf16.msra.mxu0 0
      %392 = vmatprep.subr.bf16.mxu0 0
      %393 = vmatpush1.bf16.msra.mxu0 0
      %394 = vmatprep.subr.bf16.mxu0 0
      %395 = vmatpush1.bf16.msra.mxu0 0
      %396 = vmatprep.subr.bf16.mxu0 0
      %397 = vmatpush1.bf16.msra.mxu0 0
      %398 = vmatprep.subr.bf16.mxu0 0
      %399 = vmatpush1.bf16.msra.mxu0 0
      %400 = vmatprep.mubr.bf16.mxu0 0
      %401 = vmatmul.mubr.bf16.gmra.mrb[0].mxu0 %v366
      %v402 = vpop.f32.mrb[0].mxu0
      %v403 = vadd.f32 0.0, %v402
      %v404 = vpop.f32.mrb[0].mxu0
      %v405 = vpop.f32.mrb[0].mxu0
      %v406 = vadd.f32 0.0, %v405
      %v407 = vpop.f32.mrb[0].mxu0
      %408 = vdwg.mxu0
      %v409 = vadd.f32 %v348, %v403
      %v410 = vadd.f32 %v351, %v406
      %s411 = scalar_lea.vmem %s215, 24
      %v412 = vld [vmem:[%s411] sm:$0xf]
      %v413 = vld [vmem:[%s411 + $0x4] sm:$0xf]
      %v416 = vunpack.c.l.b16 %v412
      %v417 = vunpack.c.l.b16 %v413
      %v418 = vpack.c.b16 %v417, %v416
      %419 = vrot.lane.b32.xlu0 %v255, 118
      %v420 = vpop.permute.xlu0 %419
      %v423 = vsel %vm259, %v418, 0
      %425 = vmatprep.subr.bf16.mxu0 0
      %426 = vmatpush1.bf16.msra.mxu0 %v420
      %427 = vmatprep.subr.bf16.mxu0 0
      %428 = vmatpush1.bf16.msra.mxu0 0
      %429 = vmatprep.subr.bf16.mxu0 0
      %430 = vmatpush1.bf16.msra.mxu0 0
      %431 = vmatprep.subr.bf16.mxu0 0
      %432 = vmatpush1.bf16.msra.mxu0 0
      %433 = vmatprep.subr.bf16.mxu0 0
      %434 = vmatpush1.bf16.msra.mxu0 0
      %435 = vmatprep.subr.bf16.mxu0 0
      %436 = vmatpush1.bf16.msra.mxu0 0
      %437 = vmatprep.subr.bf16.mxu0 0
      %438 = vmatpush1.bf16.msra.mxu0 0
      %439 = vmatprep.subr.bf16.mxu0 0
      %440 = vmatpush1.bf16.msra.mxu0 0
      %441 = vmatprep.subr.bf16.mxu0 0
      %442 = vmatpush1.bf16.msra.mxu0 0
      %443 = vmatprep.subr.bf16.mxu0 0
      %444 = vmatpush1.bf16.msra.mxu0 0
      %445 = vmatprep.subr.bf16.mxu0 0
      %446 = vmatpush1.bf16.msra.mxu0 0
      %447 = vmatprep.subr.bf16.mxu0 0
      %448 = vmatpush1.bf16.msra.mxu0 0
      %449 = vmatprep.subr.bf16.mxu0 0
      %450 = vmatpush1.bf16.msra.mxu0 0
      %451 = vmatprep.subr.bf16.mxu0 0
      %452 = vmatpush1.bf16.msra.mxu0 0
      %453 = vmatprep.subr.bf16.mxu0 0
      %454 = vmatpush1.bf16.msra.mxu0 0
      %455 = vmatprep.subr.bf16.mxu0 0
      %456 = vmatpush1.bf16.msra.mxu0 0
      %457 = vmatprep.mubr.bf16.mxu0 0
      %458 = vmatmul.mubr.bf16.gmra.mrb[0].mxu0 %v423
      %v459 = vpop.f32.mrb[0].mxu0
      %v460 = vadd.f32 0.0, %v459
      %v461 = vpop.f32.mrb[0].mxu0
      %v462 = vpop.f32.mrb[0].mxu0
      %v463 = vadd.f32 0.0, %v462
      %v464 = vpop.f32.mrb[0].mxu0
      %465 = vdwg.mxu0
      %v466 = vadd.f32 %v409, %v460
      %v467 = vadd.f32 %v410, %v463
      %s468 = scalar_lea.vmem %s215, 32
      %v469 = vld [vmem:[%s468] sm:$0xf]
      %v470 = vld [vmem:[%s468 + $0x4] sm:$0xf]
      %v473 = vunpack.c.l.b16 %v469
      %v474 = vunpack.c.l.b16 %v470
      %v475 = vpack.c.b16 %v474, %v473
      %476 = vrot.lane.b32.xlu0 %v255, 117
      %v477 = vpop.permute.xlu0 %476
      %v480 = vsel %vm259, %v475, 0
      %482 = vmatprep.subr.bf16.mxu0 0
      %483 = vmatpush1.bf16.msra.mxu0 %v477
      %484 = vmatprep.subr.bf16.mxu0 0
      %485 = vmatpush1.bf16.msra.mxu0 0
      %486 = vmatprep.subr.bf16.mxu0 0
      %487 = vmatpush1.bf16.msra.mxu0 0
      %488 = vmatprep.subr.bf16.mxu0 0
      %489 = vmatpush1.bf16.msra.mxu0 0
      %490 = vmatprep.subr.bf16.mxu0 0
      %491 = vmatpush1.bf16.msra.mxu0 0
      %492 = vmatprep.subr.bf16.mxu0 0
      %493 = vmatpush1.bf16.msra.mxu0 0
      %494 = vmatprep.subr.bf16.mxu0 0
      %495 = vmatpush1.bf16.msra.mxu0 0
      %496 = vmatprep.subr.bf16.mxu0 0
      %497 = vmatpush1.bf16.msra.mxu0 0
      %498 = vmatprep.subr.bf16.mxu0 0
      %499 = vmatpush1.bf16.msra.mxu0 0
      %500 = vmatprep.subr.bf16.mxu0 0
      %501 = vmatpush1.bf16.msra.mxu0 0
      %502 = vmatprep.subr.bf16.mxu0 0
      %503 = vmatpush1.bf16.msra.mxu0 0
      %504 = vmatprep.subr.bf16.mxu0 0
      %505 = vmatpush1.bf16.msra.mxu0 0
      %506 = vmatprep.subr.bf16.mxu0 0
      %507 = vmatpush1.bf16.msra.mxu0 0
      %508 = vmatprep.subr.bf16.mxu0 0
      %509 = vmatpush1.bf16.msra.mxu0 0
      %510 = vmatprep.subr.bf16.mxu0 0
      %511 = vmatpush1.bf16.msra.mxu0 0
      %512 = vmatprep.subr.bf16.mxu0 0
      %513 = vmatpush1.bf16.msra.mxu0 0
      %514 = vmatprep.mubr.bf16.mxu0 0
      %515 = vmatmul.mubr.bf16.gmra.mrb[0].mxu0 %v480
      %v516 = vpop.f32.mrb[0].mxu0
      %v517 = vadd.f32 0.0, %v516
      %v518 = vpop.f32.mrb[0].mxu0
      %v519 = vpop.f32.mrb[0].mxu0
      %v520 = vadd.f32 0.0, %v519
      %v521 = vpop.f32.mrb[0].mxu0
      %522 = vdwg.mxu0
      %v523 = vadd.f32 %v466, %v517
      %v524 = vadd.f32 %v467, %v520
      %s525 = scalar_lea.vmem %s215, 40
      %v526 = vld [vmem:[%s525] sm:$0xf]
      %v527 = vld [vmem:[%s525 + $0x4] sm:$0xf]
      %v530 = vunpack.c.l.b16 %v526
      %v531 = vunpack.c.l.b16 %v527
      %v532 = vpack.c.b16 %v531, %v530
      %533 = vrot.lane.b32.xlu0 %v255, 116
      %v534 = vpop.permute.xlu0 %533
      %v537 = vsel %vm259, %v532, 0
      %539 = vmatprep.subr.bf16.mxu0 0
      %540 = vmatpush1.bf16.msra.mxu0 %v534
      %541 = vmatprep.subr.bf16.mxu0 0
      %542 = vmatpush1.bf16.msra.mxu0 0
      %543 = vmatprep.subr.bf16.mxu0 0
      %544 = vmatpush1.bf16.msra.mxu0 0
      %545 = vmatprep.subr.bf16.mxu0 0
      %546 = vmatpush1.bf16.msra.mxu0 0
      %547 = vmatprep.subr.bf16.mxu0 0
      %548 = vmatpush1.bf16.msra.mxu0 0
      %549 = vmatprep.subr.bf16.mxu0 0
      %550 = vmatpush1.bf16.msra.mxu0 0
      %551 = vmatprep.subr.bf16.mxu0 0
      %552 = vmatpush1.bf16.msra.mxu0 0
      %553 = vmatprep.subr.bf16.mxu0 0
      %554 = vmatpush1.bf16.msra.mxu0 0
      %555 = vmatprep.subr.bf16.mxu0 0
      %556 = vmatpush1.bf16.msra.mxu0 0
      %557 = vmatprep.subr.bf16.mxu0 0
      %558 = vmatpush1.bf16.msra.mxu0 0
      %559 = vmatprep.subr.bf16.mxu0 0
      %560 = vmatpush1.bf16.msra.mxu0 0
      %561 = vmatprep.subr.bf16.mxu0 0
      %562 = vmatpush1.bf16.msra.mxu0 0
      %563 = vmatprep.subr.bf16.mxu0 0
      %564 = vmatpush1.bf16.msra.mxu0 0
      %565 = vmatprep.subr.bf16.mxu0 0
      %566 = vmatpush1.bf16.msra.mxu0 0
      %567 = vmatprep.subr.bf16.mxu0 0
      %568 = vmatpush1.bf16.msra.mxu0 0
      %569 = vmatprep.subr.bf16.mxu0 0
      %570 = vmatpush1.bf16.msra.mxu0 0
      %571 = vmatprep.mubr.bf16.mxu0 0
      %572 = vmatmul.mubr.bf16.gmra.mrb[0].mxu0 %v537
      %v573 = vpop.f32.mrb[0].mxu0
      %v574 = vadd.f32 0.0, %v573
      %v575 = vpop.f32.mrb[0].mxu0
      %v576 = vpop.f32.mrb[0].mxu0
      %v577 = vadd.f32 0.0, %v576
      %v578 = vpop.f32.mrb[0].mxu0
      %579 = vdwg.mxu0
      %v580 = vadd.f32 %v523, %v574
      %v581 = vadd.f32 %v524, %v577
      %s582 = scalar_lea.vmem %s215, 48
      %v583 = vld [vmem:[%s582] sm:$0xf]
      %v584 = vld [vmem:[%s582 + $0x4] sm:$0xf]
      %v587 = vunpack.c.l.b16 %v583
      %v588 = vunpack.c.l.b16 %v584
      %v589 = vpack.c.b16 %v588, %v587
      %590 = vrot.lane.b32.xlu0 %v255, 108
      %v591 = vpop.permute.xlu0 %590
      %v594 = vsel %vm259, %v589, 0
      %596 = vmatprep.subr.bf16.mxu0 0
      %597 = vmatpush1.bf16.msra.mxu0 %v591
      %598 = vmatprep.subr.bf16.mxu0 0
      %599 = vmatpush1.bf16.msra.mxu0 0
      %600 = vmatprep.subr.bf16.mxu0 0
      %601 = vmatpush1.bf16.msra.mxu0 0
      %602 = vmatprep.subr.bf16.mxu0 0
      %603 = vmatpush1.bf16.msra.mxu0 0
      %604 = vmatprep.subr.bf16.mxu0 0
      %605 = vmatpush1.bf16.msra.mxu0 0
      %606 = vmatprep.subr.bf16.mxu0 0
      %607 = vmatpush1.bf16.msra.mxu0 0
      %608 = vmatprep.subr.bf16.mxu0 0
      %609 = vmatpush1.bf16.msra.mxu0 0
      %610 = vmatprep.subr.bf16.mxu0 0
      %611 = vmatpush1.bf16.msra.mxu0 0
      %612 = vmatprep.subr.bf16.mxu0 0
      %613 = vmatpush1.bf16.msra.mxu0 0
      %614 = vmatprep.subr.bf16.mxu0 0
      %615 = vmatpush1.bf16.msra.mxu0 0
      %616 = vmatprep.subr.bf16.mxu0 0
      %617 = vmatpush1.bf16.msra.mxu0 0
      %618 = vmatprep.subr.bf16.mxu0 0
      %619 = vmatpush1.bf16.msra.mxu0 0
      %620 = vmatprep.subr.bf16.mxu0 0
      %621 = vmatpush1.bf16.msra.mxu0 0
      %622 = vmatprep.subr.bf16.mxu0 0
      %623 = vmatpush1.bf16.msra.mxu0 0
      %624 = vmatprep.subr.bf16.mxu0 0
      %625 = vmatpush1.bf16.msra.mxu0 0
      %626 = vmatprep.subr.bf16.mxu0 0
      %627 = vmatpush1.bf16.msra.mxu0 0
      %628 = vmatprep.mubr.bf16.mxu0 0
      %629 = vmatmul.mubr.bf16.gmra.mrb[0].mxu0 %v594
      %v630 = vpop.f32.mrb[0].mxu0
      %v631 = vadd.f32 0.0, %v630
      %v632 = vpop.f32.mrb[0].mxu0
      %v633 = vpop.f32.mrb[0].mxu0
      %v634 = vadd.f32 0.0, %v633
      %v635 = vpop.f32.mrb[0].mxu0
      %636 = vdwg.mxu0
      %v637 = vadd.f32 %v580, %v631
      %v638 = vadd.f32 %v581, %v634
      %s639 = scalar_lea.vmem %s215, 56
      %v640 = vld [vmem:[%s639] sm:$0xf]
      %v641 = vld [vmem:[%s639 + $0x4] sm:$0xf]
      %v644 = vunpack.c.l.b16 %v640
      %v645 = vunpack.c.l.b16 %v641
      %v646 = vpack.c.b16 %v645, %v644
      %647 = vrot.lane.b32.xlu0 %v255, 107
      %v648 = vpop.permute.xlu0 %647
      %v651 = vsel %vm259, %v646, 0
      %653 = vmatprep.subr.bf16.mxu0 0
      %654 = vmatpush1.bf16.msra.mxu0 %v648
      %655 = vmatprep.subr.bf16.mxu0 0
      %656 = vmatpush1.bf16.msra.mxu0 0
      %657 = vmatprep.subr.bf16.mxu0 0
      %658 = vmatpush1.bf16.msra.mxu0 0
      %659 = vmatprep.subr.bf16.mxu0 0
      %660 = vmatpush1.bf16.msra.mxu0 0
      %661 = vmatprep.subr.bf16.mxu0 0
      %662 = vmatpush1.bf16.msra.mxu0 0
      %663 = vmatprep.subr.bf16.mxu0 0
      %664 = vmatpush1.bf16.msra.mxu0 0
      %665 = vmatprep.subr.bf16.mxu0 0
      %666 = vmatpush1.bf16.msra.mxu0 0
      %667 = vmatprep.subr.bf16.mxu0 0
      %668 = vmatpush1.bf16.msra.mxu0 0
      %669 = vmatprep.subr.bf16.mxu0 0
      %670 = vmatpush1.bf16.msra.mxu0 0
      %671 = vmatprep.subr.bf16.mxu0 0
      %672 = vmatpush1.bf16.msra.mxu0 0
      %673 = vmatprep.subr.bf16.mxu0 0
      %674 = vmatpush1.bf16.msra.mxu0 0
      %675 = vmatprep.subr.bf16.mxu0 0
      %676 = vmatpush1.bf16.msra.mxu0 0
      %677 = vmatprep.subr.bf16.mxu0 0
      %678 = vmatpush1.bf16.msra.mxu0 0
      %679 = vmatprep.subr.bf16.mxu0 0
      %680 = vmatpush1.bf16.msra.mxu0 0
      %681 = vmatprep.subr.bf16.mxu0 0
      %682 = vmatpush1.bf16.msra.mxu0 0
      %683 = vmatprep.subr.bf16.mxu0 0
      %684 = vmatpush1.bf16.msra.mxu0 0
      %685 = vmatprep.mubr.bf16.mxu0 0
      %686 = vmatmul.mubr.bf16.gmra.mrb[0].mxu0 %v651
      %v687 = vpop.f32.mrb[0].mxu0
      %v688 = vadd.f32 0.0, %v687
      %v689 = vpop.f32.mrb[0].mxu0
      %v690 = vpop.f32.mrb[0].mxu0
      %v691 = vadd.f32 0.0, %v690
      %v692 = vpop.f32.mrb[0].mxu0
      %693 = vdwg.mxu0
      %v694 = vadd.f32 %v637, %v688
      %v695 = vadd.f32 %v638, %v691
      %s696 = scalar_lea.vmem %s215, 64
      %v697 = vld [vmem:[%s696] sm:$0xf]
      %v698 = vld [vmem:[%s696 + $0x4] sm:$0xf]
      %v701 = vunpack.c.l.b16 %v697
      %v702 = vunpack.c.l.b16 %v698
      %v703 = vpack.c.b16 %v702, %v701
      %704 = vrot.lane.b32.xlu0 %v255, 106
      %v705 = vpop.permute.xlu0 %704
      %v708 = vsel %vm259, %v703, 0
      %710 = vmatprep.subr.bf16.mxu0 0
      %711 = vmatpush1.bf16.msra.mxu0 %v705
      %712 = vmatprep.subr.bf16.mxu0 0
      %713 = vmatpush1.bf16.msra.mxu0 0
      %714 = vmatprep.subr.bf16.mxu0 0
      %715 = vmatpush1.bf16.msra.mxu0 0
      %716 = vmatprep.subr.bf16.mxu0 0
      %717 = vmatpush1.bf16.msra.mxu0 0
      %718 = vmatprep.subr.bf16.mxu0 0
      %719 = vmatpush1.bf16.msra.mxu0 0
      %720 = vmatprep.subr.bf16.mxu0 0
      %721 = vmatpush1.bf16.msra.mxu0 0
      %722 = vmatprep.subr.bf16.mxu0 0
      %723 = vmatpush1.bf16.msra.mxu0 0
      %724 = vmatprep.subr.bf16.mxu0 0
      %725 = vmatpush1.bf16.msra.mxu0 0
      %726 = vmatprep.subr.bf16.mxu0 0
      %727 = vmatpush1.bf16.msra.mxu0 0
      %728 = vmatprep.subr.bf16.mxu0 0
      %729 = vmatpush1.bf16.msra.mxu0 0
      %730 = vmatprep.subr.bf16.mxu0 0
      %731 = vmatpush1.bf16.msra.mxu0 0
      %732 = vmatprep.subr.bf16.mxu0 0
      %733 = vmatpush1.bf16.msra.mxu0 0
      %734 = vmatprep.subr.bf16.mxu0 0
      %735 = vmatpush1.bf16.msra.mxu0 0
      %736 = vmatprep.subr.bf16.mxu0 0
      %737 = vmatpush1.bf16.msra.mxu0 0
      %738 = vmatprep.subr.bf16.mxu0 0
      %739 = vmatpush1.bf16.msra.mxu0 0
      %740 = vmatprep.subr.bf16.mxu0 0
      %741 = vmatpush1.bf16.msra.mxu0 0
      %742 = vmatprep.mubr.bf16.mxu0 0
      %743 = vmatmul.mubr.bf16.gmra.mrb[0].mxu0 %v708
      %v744 = vpop.f32.mrb[0].mxu0
      %v745 = vadd.f32 0.0, %v744
      %v746 = vpop.f32.mrb[0].mxu0
      %v747 = vpop.f32.mrb[0].mxu0
      %v748 = vadd.f32 0.0, %v747
      %v749 = vpop.f32.mrb[0].mxu0
      %750 = vdwg.mxu0
      %v751 = vadd.f32 %v694, %v745
      %v752 = vadd.f32 %v695, %v748
      %v753 = vld [vmem:[%s226] sm:$0xff]
      %v754 = vld [vmem:[%s226 + $0x8] sm:$0xff]
      %756 = vset.pattern.permute.xlu0 0
      %757 = vperm.xlu0 %756, %v753
      %v758 = vpop.permute.xlu0 %757
      %761 = vset.pattern.permute.xlu0 0
      %762 = vperm.xlu0 %761, %v754
      %v763 = vpop.permute.xlu0 %762
      %v765 = vadd.f32 %v751, %v758
      %v766 = vadd.f32 %v752, %v763
      %v767 = vmax.f32 %v765, 0.0
      %v768 = vmax.f32 %v766, 0.0
      %v769 = vpack.c.bf16 %v768, %v767
      %v771 = vunpack.c.l.b16 %v769
      %v772 = vunpack.c.h.b16 %v769
      %v773 = vpack.c.b16 %v771, %v771
      %v774 = vpack.c.b16 %v772, %v772
      %vm777 = vcmask 650240
      %778 = vst.msk [vmem:[%s236] sm:$0xf] %vm777, %v773
      %779 = vst.msk [vmem:[%s236 + $0x4] sm:$0xf] %vm777, %v774
      %s780 = smul.u32 2, %s19
      %p781 = scmp.lt.s32.totalorder %s18, 1
      %s782 = scalar_select %p781, %s18, 1
      %p783 = scmp.lt.s32.totalorder %s780, 1
      %s784 = scalar_select %p783, %s780, 1
      %s785 = smul.addr %s782, 2
      %s786 = sadd.s32 %s784, %s785
      %s787 = smul.addr %s786, 4
      %s788 = scalar_lea.vmem %s3, %s787
      // Predicated region
      $region33: #{tree_forward.17} parent=31 // pred_check
        %p789 = pneg %p124
      $region34: #{tree_forward.17} parent=31 // pred_check_branch
        %791 = sbr.rel (%p789) target = $region36
      $region35: #{tree_forward.17} parent=31 // pred_region
        %s792 = smul.u32 2, %s19
      $region36: #{tree_forward.17} parent=31 // pred_fallthru
        _
    $region32: #{tree_forward.17} parent=5 // pred_fallthru
      _
    %p793 = scmp.le.s32.totalorder 2, %s9
    // Predicated region
    $region37: #{tree_forward.17} parent=5 // pred_check
      %p794 = pneg %p793
    $region38: #{tree_forward.17} parent=5 // pred_check_branch
      %796 = sbr.rel (%p794) target = $region40
    $region39: #{tree_forward.17} parent=5 // pred_region
      %s797 = ssub.s32 %s9, 2
      // Predicated region
      $region41: #{tree_forward.17} parent=39 // pred_check
        %p798 = pneg %p130
      $region42: #{tree_forward.17} parent=39 // pred_check_branch
        %800 = sbr.rel (%p798) target = $region44
      $region43: #{tree_forward.17} parent=39 // pred_region
        %s801 = smul.u32 2, %s21
        %p802 = scmp.lt.s32.totalorder %s20, 1
        %s803 = scalar_select %p802, %s20, 1
        %p804 = scmp.lt.s32.totalorder %s801, 1
        %s805 = scalar_select %p804, %s801, 1
        %s806 = smul.addr %s803, 2
        %s807 = sadd.s32 %s805, %s806
        %s808 = smul.addr %s807, 4
        %s809 = scalar_lea.vmem %s3, %s808
      $region44: #{tree_forward.17} parent=39 // pred_fallthru
        _
    $region40: #{tree_forward.17} parent=5 // pred_fallthru
      _
  $region6: #{tree_forward.17} parent=0 // loop_footer
    %s13 = sadd.s32 1, %s9
  $region7: #{tree_forward.17} parent=0 // loop_footer_branch
    %8 = sbr.rel target = $region3
  $region8: #{tree_forward.17} parent=0 // loop_exit
    _

// kernel: tree_forward.16
$region0: #{tree_forward.16}
  #allocation0 [shape = 'u32[]', space=smem, size = 0x4, offset = 0x4, fixed_abs, tag = 'smem constant byte address 0x4 - core index']
  #allocation1 [shape = 'u32[144,128]{1,0:T(1,128)}', space=vmem, size = 0x12000, scoped, tag = 'internal scratch']
  %s0 = inlined_call_operand.vmem [shape: bf16[9,16,16], index: 0, kind: input, shape index: {}]
  %s1 = inlined_call_operand.vmem [shape: bf16[2,16,120], index: 1, kind: input, shape index: {}]
  %s2 = inlined_call_operand.vmem [shape: f32[16,1], index: 2, kind: input, shape index: {}]
  %s3 = inlined_call_operand.vmem [shape: bf16[2,16,80], index: 3, kind: input, shape index: {}]
  %s4 = inlined_call_operand.vmem [shape: bf16[2,16,80], index: 4, kind: output, shape index: {}]
  %s5 = sld [smem:[#allocation0]]
  $region49: #{tree_forward.16} parent=0
    _
  %s7 = ssub.s32 1, %s5
  %s8 = scalar_select 0, %s7, %s5
  loop: start=0, step=1, limit=4
  $region2: #{tree_forward.16} parent=0 // loop_pre_header
    _
  $region3: #{tree_forward.16} parent=0 // loop_header
    %s10 = sphi 0, %s14
    %p11 = scmp.ge.s32.totalorder %s10, 4
    %s17 = sphi 0, %s29
    %s18 = sphi 0, %s25
    %s19 = sphi 0, %s17
    %s20 = sphi 0, %s18
    %s21 = sphi 0, %s19
    %s22 = sphi 0, %s20
    %s32 = sphi 0, %s34
    %s35 = sphi 0, %s32
    %s36 = sphi 0, %s35
    %s52 = sphi 0, %s36
    %s58 = sphi 0, %s60
    %s61 = sphi 0, %s58
    %s62 = sphi 0, %s61
    %s78 = sphi 0, %s62
    %s84 = sphi 0, %s86
    %s87 = sphi 0, %s84
    %s88 = sphi 0, %s87
    %s104 = sphi 0, %s88
    %s112 = sphi 0, %s114
    %s115 = sphi 0, %s112
    %s116 = sphi 0, %s115
    %s132 = sphi 0, %s116
    %s140 = sphi 0, %s142
    %s143 = sphi 0, %s140
    %s144 = sphi 0, %s143
    %s160 = sphi 0, %s144
  $region4: #{tree_forward.16} parent=0 // loop_header_branch
    %13 = sbr.rel (%p11) target = $region8
  $region5: #{tree_forward.16} parent=0 // loop_body
    %s15 = ssub.s32 %s10, 1
    %s16 = ssub.s32 %s10, 2
    %s23 = sadd.s32 1, %s18
    %p24 = scmp.ge.s32.totalorder %s23, 1
    %s25 = scalar_select %p24, 0, %s23
    %s26 = sadd.s32 1, %s17
    %s27 = scalar_select %p24, %s26, %s17
    %p28 = scmp.ge.s32.totalorder %s27, 2
    %s29 = scalar_select %p28, 0, %s27
    %s30 = ssub.s32 %s18, %s25
    %p31 = scmp.eq.s32.totalorder %s30, 0
    %s33 = sadd.s32 %s32, 1
    %s34 = scalar_select %p31, %s32, %s33
    %p37 = pneg %p31
    %p38 = scmp.eq.s32.totalorder %s10, 1
    %p39 = por %p37, %p38
    %p40 = scmp.ne.s32.totalorder %s32, %s35
    %p41 = scmp.eq.s32.totalorder %s10, 0
    %p42 = por %p40, %p41
    %p43 = scmp.ne.s32.totalorder %s32, %s35
    %p44 = scmp.eq.s32.totalorder %s15, 1
    %p45 = por %p43, %p44
    %p46 = scmp.ne.s32.totalorder %s35, %s36
    %p47 = scmp.eq.s32.totalorder %s15, 0
    %p48 = por %p46, %p47
    %p49 = scmp.ne.s32.totalorder %s35, %s36
    %p50 = scmp.eq.s32.totalorder %s16, 1
    %p51 = por %p49, %p50
    %p53 = scmp.ne.s32.totalorder %s36, %s52
    %p54 = scmp.eq.s32.totalorder %s16, 0
    %p55 = por %p53, %p54
    %s56 = ssub.s32 %s17, %s29
    %p57 = scmp.eq.s32.totalorder %s56, 0
    %s59 = sadd.s32 %s58, 1
    %s60 = scalar_select %p57, %s58, %s59
    %p63 = pneg %p57
    %p64 = scmp.eq.s32.totalorder %s10, 1
    %p65 = por %p63, %p64
    %p66 = scmp.ne.s32.totalorder %s58, %s61
    %p67 = scmp.eq.s32.totalorder %s10, 0
    %p68 = por %p66, %p67
    %p69 = scmp.ne.s32.totalorder %s58, %s61
    %p70 = scmp.eq.s32.totalorder %s15, 1
    %p71 = por %p69, %p70
    %p72 = scmp.ne.s32.totalorder %s61, %s62
    %p73 = scmp.eq.s32.totalorder %s15, 0
    %p74 = por %p72, %p73
    %p75 = scmp.ne.s32.totalorder %s61, %s62
    %p76 = scmp.eq.s32.totalorder %s16, 1
    %p77 = por %p75, %p76
    %p79 = scmp.ne.s32.totalorder %s62, %s78
    %p80 = scmp.eq.s32.totalorder %s16, 0
    %p81 = por %p79, %p80
    %s82 = ssub.s32 %s18, %s25
    %p83 = scmp.eq.s32.totalorder %s82, 0
    %s85 = sadd.s32 %s84, 1
    %s86 = scalar_select %p83, %s84, %s85
    %p89 = pneg %p83
    %p90 = scmp.eq.s32.totalorder %s10, 1
    %p91 = por %p89, %p90
    %p92 = scmp.ne.s32.totalorder %s84, %s87
    %p93 = scmp.eq.s32.totalorder %s10, 0
    %p94 = por %p92, %p93
    %p95 = scmp.ne.s32.totalorder %s84, %s87
    %p96 = scmp.eq.s32.totalorder %s15, 1
    %p97 = por %p95, %p96
    %p98 = scmp.ne.s32.totalorder %s87, %s88
    %p99 = scmp.eq.s32.totalorder %s15, 0
    %p100 = por %p98, %p99
    %p101 = scmp.ne.s32.totalorder %s87, %s88
    %p102 = scmp.eq.s32.totalorder %s16, 1
    %p103 = por %p101, %p102
    %p105 = scmp.ne.s32.totalorder %s88, %s104
    %p106 = scmp.eq.s32.totalorder %s16, 0
    %p107 = por %p105, %p106
    %s108 = ssub.s32 %s17, %s29
    %s109 = ssub.s32 %s18, %s25
    %s110 = sor.u32 %s108, %s109
    %p111 = scmp.eq.s32.totalorder %s110, 0
    %s113 = sadd.s32 %s112, 1
    %s114 = scalar_select %p111, %s112, %s113
    %p117 = pneg %p111
    %p118 = scmp.eq.s32.totalorder %s10, 1
    %p119 = por %p117, %p118
    %p120 = scmp.ne.s32.totalorder %s112, %s115
    %p121 = scmp.eq.s32.totalorder %s10, 0
    %p122 = por %p120, %p121
    %p123 = scmp.ne.s32.totalorder %s112, %s115
    %p124 = scmp.eq.s32.totalorder %s15, 1
    %p125 = por %p123, %p124
    %p126 = scmp.ne.s32.totalorder %s115, %s116
    %p127 = scmp.eq.s32.totalorder %s15, 0
    %p128 = por %p126, %p127
    %p129 = scmp.ne.s32.totalorder %s115, %s116
    %p130 = scmp.eq.s32.totalorder %s16, 1
    %p131 = por %p129, %p130
    %p133 = scmp.ne.s32.totalorder %s116, %s132
    %p134 = scmp.eq.s32.totalorder %s16, 0
    %p135 = por %p133, %p134
    %s136 = ssub.s32 %s17, %s29
    %s137 = ssub.s32 %s18, %s25
    %s138 = sor.u32 %s136, %s137
    %p139 = scmp.eq.s32.totalorder %s138, 0
    %s141 = sadd.s32 %s140, 1
    %s142 = scalar_select %p139, %s140, %s141
    %p145 = pneg %p139
    %p146 = scmp.eq.s32.totalorder %s10, 1
    %p147 = por %p145, %p146
    %p148 = scmp.ne.s32.totalorder %s140, %s143
    %p149 = scmp.eq.s32.totalorder %s10, 0
    %p150 = por %p148, %p149
    %p151 = scmp.ne.s32.totalorder %s140, %s143
    %p152 = scmp.eq.s32.totalorder %s15, 1
    %p153 = por %p151, %p152
    %p154 = scmp.ne.s32.totalorder %s143, %s144
    %p155 = scmp.eq.s32.totalorder %s15, 0
    %p156 = por %p154, %p155
    %p157 = scmp.ne.s32.totalorder %s143, %s144
    %p158 = scmp.eq.s32.totalorder %s16, 1
    %p159 = por %p157, %p158
    %p161 = scmp.ne.s32.totalorder %s144, %s160
    %p162 = scmp.eq.s32.totalorder %s16, 0
    %p163 = por %p161, %p162
    %p164 = scmp.le.s32.totalorder 1, %s10
    %p165 = scmp.lt.s32.totalorder %s10, 3
    %p166 = pnand %p164, %p165
    %p167 = pneg %p166
    // Predicated region
    $region9: #{tree_forward.16} parent=5 // pred_check
      _
    $region10: #{tree_forward.16} parent=5 // pred_check_branch
      %169 = sbr.rel (%p166) target = $region12
    $region11: #{tree_forward.16} parent=5 // pred_region
      %s170 = ssub.s32 %s10, 1
      // Predicated region
      $region13: #{tree_forward.16} parent=11 // pred_check
        %p171 = pneg %p48
      $region14: #{tree_forward.16} parent=11 // pred_check_branch
        %173 = sbr.rel (%p171) target = $region16
      $region15: #{tree_forward.16} parent=11 // pred_region
        %s174 = smul.u32 2, %s20
        %p175 = scmp.lt.s32.totalorder %s174, 1
        %s176 = scalar_select %p175, %s174, 1
        %s177 = smul.addr %s176, 4
        %s178 = scalar_lea.vmem %s0, %s177
        %s179 = smul.u32 2, %s20
      $region16: #{tree_forward.16} parent=11 // pred_fallthru
        _
      // Predicated region
      $region17: #{tree_forward.16} parent=11 // pred_check
        %p180 = pneg %p100
      $region18: #{tree_forward.16} parent=11 // pred_check_branch
        %182 = sbr.rel (%p180) target = $region20
      $region19: #{tree_forward.16} parent=11 // pred_region
        %s183 = smul.u32 2, %s20
        %p184 = scmp.lt.s32.totalorder %s183, 1
        %s185 = scalar_select %p184, %s183, 1
        %s186 = smul.addr %s185, 8
        %s187 = scalar_lea.vmem %s2, %s186
        %s188 = smul.u32 2, %s20
      $region20: #{tree_forward.16} parent=11 // pred_fallthru
        _
    $region12: #{tree_forward.16} parent=5 // pred_fallthru
      _
    %p189 = scmp.lt.s32.totalorder %s10, 2
    // Predicated region
    $region21: #{tree_forward.16} parent=5 // pred_check
      %p190 = pneg %p189
    $region22: #{tree_forward.16} parent=5 // pred_check_branch
      %192 = sbr.rel (%p190) target = $region24
    $region23: #{tree_forward.16} parent=5 // pred_region
      // Predicated region
      $region25: #{tree_forward.16} parent=23 // pred_check
        %p193 = pneg %p68
      $region26: #{tree_forward.16} parent=23 // pred_check_branch
        %195 = sbr.rel (%p193) target = $region28
      $region27: #{tree_forward.16} parent=23 // pred_region
        %p196 = scmp.lt.s32.totalorder %s17, 1
        %s197 = scalar_select %p196, %s17, 1
        %s198 = smul.addr %s197, 2
        %s199 = smul.addr %s198, 4
        %s200 = scalar_lea.vmem %s1, %s199
      $region28: #{tree_forward.16} parent=23 // pred_fallthru
        _
      // Predicated region
      $region29: #{tree_forward.16} parent=23 // pred_check
        %p201 = pneg %p122
      $region30: #{tree_forward.16} parent=23 // pred_check_branch
        %203 = sbr.rel (%p201) target = $region32
      $region31: #{tree_forward.16} parent=23 // pred_region
        %s204 = smul.u32 2, %s18
        %p205 = scmp.lt.s32.totalorder %s17, 1
        %s206 = scalar_select %p205, %s17, 1
        %p207 = scmp.lt.s32.totalorder %s204, 1
        %s208 = scalar_select %p207, %s204, 1
        %s209 = smul.addr %s206, 2
        %s210 = sadd.s32 %s208, %s209
        %s211 = smul.addr %s210, 4
        %s212 = scalar_lea.vmem %s3, %s211
        %s213 = smul.u32 2, %s18
      $region32: #{tree_forward.16} parent=23 // pred_fallthru
        _
    $region24: #{tree_forward.16} parent=5 // pred_fallthru
      _
    %p214 = scmp.le.s32.totalorder 1, %s10
    %p215 = scmp.lt.s32.totalorder %s10, 3
    %p216 = pnand %p214, %p215
    %p217 = pneg %p216
    // Predicated region
    $region33: #{tree_forward.16} parent=5 // pred_check
      _
    $region34: #{tree_forward.16} parent=5 // pred_check_branch
      %219 = sbr.rel (%p216) target = $region36
    $region35: #{tree_forward.16} parent=5 // pred_region
      %s220 = ssub.s32 %s10, 1
      %s221 = smul.u32 2, %s20
      %p222 = scmp.lt.s32.totalorder %s221, 1
      %s223 = scalar_select %p222, %s221, 1
      %s224 = smul.addr %s223, 4
      %s225 = scalar_lea.vmem %s0, %s224
      %p226 = pneg %p48
      %p227 = pneg %p45
      %p228 = scmp.lt.s32.totalorder %s19, 1
      %s229 = scalar_select %p228, %s19, 1
      %s230 = smul.addr %s229, 2
      %s231 = smul.addr %s230, 4
      %s232 = scalar_lea.vmem %s1, %s231
      %p233 = pneg %p74
      %p234 = pneg %p71
      %s235 = smul.u32 2, %s20
      %p236 = scmp.lt.s32.totalorder %s235, 1
      %s237 = scalar_select %p236, %s235, 1
      %s238 = smul.addr %s237, 8
      %s239 = scalar_lea.vmem %s2, %s238
      %p240 = pneg %p100
      %p241 = pneg %p97
      %s242 = smul.u32 2, %s20
      %p243 = scmp.lt.s32.totalorder %s19, 1
      %s244 = scalar_select %p243, %s19, 1
      %p245 = scmp.lt.s32.totalorder %s242, 1
      %s246 = scalar_select %p245, %s242, 1
      %s247 = smul.addr %s244, 2
      %s248 = sadd.s32 %s246, %s247
      %s249 = smul.addr %s248, 4
      %s250 = scalar_lea.vmem %s3, %s249
      %p251 = pneg %p128
      %p252 = pneg %p125
      %p253 = pneg %p156
      %p254 = pneg %p153
      %s255 = smul.u32 2, %s20
      %p256 = scmp.lt.s32.totalorder %s19, 1
      %s257 = scalar_select %p256, %s19, 1
      %p258 = scmp.lt.s32.totalorder %s255, 1
      %s259 = scalar_select %p258, %s255, 1
      %s260 = smul.addr %s257, 2
      %s261 = sadd.s32 %s259, %s260
      %s262 = smul.addr %s261, 4
      %s263 = scalar_lea.vmem %s4, %s262
      %s264 = smul.u32 2, %s20
      %p265 = scmp.lt.s32.totalorder %s264, 1
      %s266 = scalar_select %p265, %s264, 1
      %s267 = smul.addr %s266, 4
      %s268 = scalar_lea.vmem %s0, %s267
      %s269 = smul.u32 2, %s20
      %p270 = scmp.lt.s32.totalorder %s19, 1
      %s271 = scalar_select %p270, %s19, 1
      %s272 = smul.addr %s271, 2
      %s273 = smul.addr %s272, 4
      %s274 = scalar_lea.vmem %s1, %s273
      %s275 = smul.u32 2, %s20
      %p276 = scmp.lt.s32.totalorder %s275, 1
      %s277 = scalar_select %p276, %s275, 1
      %s278 = smul.addr %s277, 8
      %s279 = scalar_lea.vmem %s2, %s278
      %s280 = smul.u32 2, %s20
      %s281 = smul.u32 2, %s20
      %p282 = scmp.lt.s32.totalorder %s19, 1
      %s283 = scalar_select %p282, %s19, 1
      %p284 = scmp.lt.s32.totalorder %s281, 1
      %s285 = scalar_select %p284, %s281, 1
      %s286 = smul.addr %s283, 2
      %s287 = sadd.s32 %s285, %s286
      %s288 = smul.addr %s287, 4
      %s289 = scalar_lea.vmem %s3, %s288
      %s290 = smul.u32 2, %s20
      %s291 = smul.u32 2, %s20
      %p292 = scmp.lt.s32.totalorder %s19, 1
      %s293 = scalar_select %p292, %s19, 1
      %p294 = scmp.lt.s32.totalorder %s291, 1
      %s295 = scalar_select %p294, %s291, 1
      %s296 = smul.addr %s293, 2
      %s297 = sadd.s32 %s295, %s296
      %s298 = smul.addr %s297, 4
      %s299 = scalar_lea.vmem %s4, %s298
      %s300 = smul.u32 2, %s20
      %v302 = vld [vmem:[%s274] sm:$0xf]
      %v303 = vld [vmem:[%s274 + $0x4] sm:$0xf]
      %v304 = vld [vmem:[%s268] sm:$0xf]
      %v305 = vld [vmem:[%s268 + $0x4] sm:$0xf]
      %s306 = scalar_lea.vmem %s268, 8
      %v307 = vld [vmem:[%s306] sm:$0xf]
      %v308 = vld [vmem:[%s306 + $0x4] sm:$0xf]
      %v311 = vunpack.c.l.b16 %v307
      %v312 = vunpack.c.l.b16 %v308
      %v313 = vpack.c.b16 %v312, %v311
      %v316 = vunpack.c.l.b16 %v302
      %v317 = vunpack.c.l.b16 %v303
      %v318 = vpack.c.b16 %v317, %v316
      %319 = vrot.lane.b32.xlu0 %v318, 127
      %v320 = vpop.permute.xlu0 %319
      %vm322 = vcmask 130048
      %v324 = vsel %vm322, %v313, 0
      %326 = vmatprep.subr.bf16.mxu0 0
      %327 = vmatpush1.bf16.msra.mxu0 %v320
      %328 = vmatprep.subr.bf16.mxu0 0
      %329 = vmatpush1.bf16.msra.mxu0 0
      %330 = vmatprep.subr.bf16.mxu0 0
      %331 = vmatpush1.bf16.msra.mxu0 0
      %332 = vmatprep.subr.bf16.mxu0 0
      %333 = vmatpush1.bf16.msra.mxu0 0
      %334 = vmatprep.subr.bf16.mxu0 0
      %335 = vmatpush1.bf16.msra.mxu0 0
      %336 = vmatprep.subr.bf16.mxu0 0
      %337 = vmatpush1.bf16.msra.mxu0 0
      %338 = vmatprep.subr.bf16.mxu0 0
      %339 = vmatpush1.bf16.msra.mxu0 0
      %340 = vmatprep.subr.bf16.mxu0 0
      %341 = vmatpush1.bf16.msra.mxu0 0
      %342 = vmatprep.subr.bf16.mxu0 0
      %343 = vmatpush1.bf16.msra.mxu0 0
      %344 = vmatprep.subr.bf16.mxu0 0
      %345 = vmatpush1.bf16.msra.mxu0 0
      %346 = vmatprep.subr.bf16.mxu0 0
      %347 = vmatpush1.bf16.msra.mxu0 0
      %348 = vmatprep.subr.bf16.mxu0 0
      %349 = vmatpush1.bf16.msra.mxu0 0
      %350 = vmatprep.subr.bf16.mxu0 0
      %351 = vmatpush1.bf16.msra.mxu0 0
      %352 = vmatprep.subr.bf16.mxu0 0
      %353 = vmatpush1.bf16.msra.mxu0 0
      %354 = vmatprep.subr.bf16.mxu0 0
      %355 = vmatpush1.bf16.msra.mxu0 0
      %356 = vmatprep.subr.bf16.mxu0 0
      %357 = vmatpush1.bf16.msra.mxu0 0
      %358 = vmatprep.mubr.bf16.mxu0 0
      %359 = vmatmul.mubr.bf16.gmra.mrb[0].mxu0 %v324
      %v360 = vpop.f32.mrb[0].mxu0
      %v361 = vadd.f32 0.0, %v360
      %v362 = vpop.f32.mrb[0].mxu0
      %v363 = vpop.f32.mrb[0].mxu0
      %v364 = vadd.f32 0.0, %v363
      %v365 = vpop.f32.mrb[0].mxu0
      %366 = vdwg.mxu0
      %v369 = vunpack.c.l.b16 %v304
      %v370 = vunpack.c.l.b16 %v305
      %v371 = vpack.c.b16 %v370, %v369
      %v374 = vsel %vm322, %v371, 0
      %376 = vmatprep.subr.bf16.mxu0 0
      %377 = vmatpush1.bf16.msra.mxu0 %v318
      %378 = vmatprep.subr.bf16.mxu0 0
      %379 = vmatpush1.bf16.msra.mxu0 0
      %380 = vmatprep.subr.bf16.mxu0 0
      %381 = vmatpush1.bf16.msra.mxu0 0
      %382 = vmatprep.subr.bf16.mxu0 0
      %383 = vmatpush1.bf16.msra.mxu0 0
      %384 = vmatprep.subr.bf16.mxu0 0
      %385 = vmatpush1.bf16.msra.mxu0 0
      %386 = vmatprep.subr.bf16.mxu0 0
      %387 = vmatpush1.bf16.msra.mxu0 0
      %388 = vmatprep.subr.bf16.mxu0 0
      %389 = vmatpush1.bf16.msra.mxu0 0
      %390 = vmatprep.subr.bf16.mxu0 0
      %391 = vmatpush1.bf16.msra.mxu0 0
      %392 = vmatprep.subr.bf16.mxu0 0
      %393 = vmatpush1.bf16.msra.mxu0 0
      %394 = vmatprep.subr.bf16.mxu0 0
      %395 = vmatpush1.bf16.msra.mxu0 0
      %396 = vmatprep.subr.bf16.mxu0 0
      %397 = vmatpush1.bf16.msra.mxu0 0
      %398 = vmatprep.subr.bf16.mxu0 0
      %399 = vmatpush1.bf16.msra.mxu0 0
      %400 = vmatprep.subr.bf16.mxu0 0
      %401 = vmatpush1.bf16.msra.mxu0 0
      %402 = vmatprep.subr.bf16.mxu0 0
      %403 = vmatpush1.bf16.msra.mxu0 0
      %404 = vmatprep.subr.bf16.mxu0 0
      %405 = vmatpush1.bf16.msra.mxu0 0
      %406 = vmatprep.subr.bf16.mxu0 0
      %407 = vmatpush1.bf16.msra.mxu0 0
      %408 = vmatprep.mubr.bf16.mxu0 0
      %409 = vmatmul.mubr.bf16.gmra.mrb[0].mxu0 %v374
      %v410 = vpop.f32.mrb[0].mxu0
      %v411 = vadd.f32 %v361, %v410
      %v412 = vpop.f32.mrb[0].mxu0
      %v413 = vpop.f32.mrb[0].mxu0
      %v414 = vadd.f32 %v364, %v413
      %v415 = vpop.f32.mrb[0].mxu0
      %416 = vdwg.mxu0
      %s417 = scalar_lea.vmem %s268, 16
      %v418 = vld [vmem:[%s417] sm:$0xf]
      %v419 = vld [vmem:[%s417 + $0x4] sm:$0xf]
      %v422 = vunpack.c.l.b16 %v418
      %v423 = vunpack.c.l.b16 %v419
      %v424 = vpack.c.b16 %v423, %v422
      %425 = vrot.lane.b32.xlu0 %v318, 126
      %v426 = vpop.permute.xlu0 %425
      %v429 = vsel %vm322, %v424, 0
      %431 = vmatprep.subr.bf16.mxu0 0
      %432 = vmatpush1.bf16.msra.mxu0 %v426
      %433 = vmatprep.subr.bf16.mxu0 0
      %434 = vmatpush1.bf16.msra.mxu0 0
      %435 = vmatprep.subr.bf16.mxu0 0
      %436 = vmatpush1.bf16.msra.mxu0 0
      %437 = vmatprep.subr.bf16.mxu0 0
      %438 = vmatpush1.bf16.msra.mxu0 0
      %439 = vmatprep.subr.bf16.mxu0 0
      %440 = vmatpush1.bf16.msra.mxu0 0
      %441 = vmatprep.subr.bf16.mxu0 0
      %442 = vmatpush1.bf16.msra.mxu0 0
      %443 = vmatprep.subr.bf16.mxu0 0
      %444 = vmatpush1.bf16.msra.mxu0 0
      %445 = vmatprep.subr.bf16.mxu0 0
      %446 = vmatpush1.bf16.msra.mxu0 0
      %447 = vmatprep.subr.bf16.mxu0 0
      %448 = vmatpush1.bf16.msra.mxu0 0
      %449 = vmatprep.subr.bf16.mxu0 0
      %450 = vmatpush1.bf16.msra.mxu0 0
      %451 = vmatprep.subr.bf16.mxu0 0
      %452 = vmatpush1.bf16.msra.mxu0 0
      %453 = vmatprep.subr.bf16.mxu0 0
      %454 = vmatpush1.bf16.msra.mxu0 0
      %455 = vmatprep.subr.bf16.mxu0 0
      %456 = vmatpush1.bf16.msra.mxu0 0
      %457 = vmatprep.subr.bf16.mxu0 0
      %458 = vmatpush1.bf16.msra.mxu0 0
      %459 = vmatprep.subr.bf16.mxu0 0
      %460 = vmatpush1.bf16.msra.mxu0 0
      %461 = vmatprep.subr.bf16.mxu0 0
      %462 = vmatpush1.bf16.msra.mxu0 0
      %463 = vmatprep.mubr.bf16.mxu0 0
      %464 = vmatmul.mubr.bf16.gmra.mrb[0].mxu0 %v429
      %v465 = vpop.f32.mrb[0].mxu0
      %v466 = vadd.f32 0.0, %v465
      %v467 = vpop.f32.mrb[0].mxu0
      %v468 = vpop.f32.mrb[0].mxu0
      %v469 = vadd.f32 0.0, %v468
      %v470 = vpop.f32.mrb[0].mxu0
      %471 = vdwg.mxu0
      %v472 = vadd.f32 %v411, %v466
      %v473 = vadd.f32 %v414, %v469
      %s474 = scalar_lea.vmem %s268, 24
      %v475 = vld [vmem:[%s474] sm:$0xf]
      %v476 = vld [vmem:[%s474 + $0x4] sm:$0xf]
      %v479 = vunpack.c.l.b16 %v475
      %v480 = vunpack.c.l.b16 %v476
      %v481 = vpack.c.b16 %v480, %v479
      %482 = vrot.lane.b32.xlu0 %v318, 118
      %v483 = vpop.permute.xlu0 %482
      %v486 = vsel %vm322, %v481, 0
      %488 = vmatprep.subr.bf16.mxu0 0
      %489 = vmatpush1.bf16.msra.mxu0 %v483
      %490 = vmatprep.subr.bf16.mxu0 0
      %491 = vmatpush1.bf16.msra.mxu0 0
      %492 = vmatprep.subr.bf16.mxu0 0
      %493 = vmatpush1.bf16.msra.mxu0 0
      %494 = vmatprep.subr.bf16.mxu0 0
      %495 = vmatpush1.bf16.msra.mxu0 0
      %496 = vmatprep.subr.bf16.mxu0 0
      %497 = vmatpush1.bf16.msra.mxu0 0
      %498 = vmatprep.subr.bf16.mxu0 0
      %499 = vmatpush1.bf16.msra.mxu0 0
      %500 = vmatprep.subr.bf16.mxu0 0
      %501 = vmatpush1.bf16.msra.mxu0 0
      %502 = vmatprep.subr.bf16.mxu0 0
      %503 = vmatpush1.bf16.msra.mxu0 0
      %504 = vmatprep.subr.bf16.mxu0 0
      %505 = vmatpush1.bf16.msra.mxu0 0
      %506 = vmatprep.subr.bf16.mxu0 0
      %507 = vmatpush1.bf16.msra.mxu0 0
      %508 = vmatprep.subr.bf16.mxu0 0
      %509 = vmatpush1.bf16.msra.mxu0 0
      %510 = vmatprep.subr.bf16.mxu0 0
      %511 = vmatpush1.bf16.msra.mxu0 0
      %512 = vmatprep.subr.bf16.mxu0 0
      %513 = vmatpush1.bf16.msra.mxu0 0
      %514 = vmatprep.subr.bf16.mxu0 0
      %515 = vmatpush1.bf16.msra.mxu0 0
      %516 = vmatprep.subr.bf16.mxu0 0
      %517 = vmatpush1.bf16.msra.mxu0 0
      %518 = vmatprep.subr.bf16.mxu0 0
      %519 = vmatpush1.bf16.msra.mxu0 0
      %520 = vmatprep.mubr.bf16.mxu0 0
      %521 = vmatmul.mubr.bf16.gmra.mrb[0].mxu0 %v486
      %v522 = vpop.f32.mrb[0].mxu0
      %v523 = vadd.f32 0.0, %v522
      %v524 = vpop.f32.mrb[0].mxu0
      %v525 = vpop.f32.mrb[0].mxu0
      %v526 = vadd.f32 0.0, %v525
      %v527 = vpop.f32.mrb[0].mxu0
      %528 = vdwg.mxu0
      %v529 = vadd.f32 %v472, %v523
      %v530 = vadd.f32 %v473, %v526
      %s531 = scalar_lea.vmem %s268, 32
      %v532 = vld [vmem:[%s531] sm:$0xf]
      %v533 = vld [vmem:[%s531 + $0x4] sm:$0xf]
      %v536 = vunpack.c.l.b16 %v532
      %v537 = vunpack.c.l.b16 %v533
      %v538 = vpack.c.b16 %v537, %v536
      %539 = vrot.lane.b32.xlu0 %v318, 117
      %v540 = vpop.permute.xlu0 %539
      %v543 = vsel %vm322, %v538, 0
      %545 = vmatprep.subr.bf16.mxu0 0
      %546 = vmatpush1.bf16.msra.mxu0 %v540
      %547 = vmatprep.subr.bf16.mxu0 0
      %548 = vmatpush1.bf16.msra.mxu0 0
      %549 = vmatprep.subr.bf16.mxu0 0
      %550 = vmatpush1.bf16.msra.mxu0 0
      %551 = vmatprep.subr.bf16.mxu0 0
      %552 = vmatpush1.bf16.msra.mxu0 0
      %553 = vmatprep.subr.bf16.mxu0 0
      %554 = vmatpush1.bf16.msra.mxu0 0
      %555 = vmatprep.subr.bf16.mxu0 0
      %556 = vmatpush1.bf16.msra.mxu0 0
      %557 = vmatprep.subr.bf16.mxu0 0
      %558 = vmatpush1.bf16.msra.mxu0 0
      %559 = vmatprep.subr.bf16.mxu0 0
      %560 = vmatpush1.bf16.msra.mxu0 0
      %561 = vmatprep.subr.bf16.mxu0 0
      %562 = vmatpush1.bf16.msra.mxu0 0
      %563 = vmatprep.subr.bf16.mxu0 0
      %564 = vmatpush1.bf16.msra.mxu0 0
      %565 = vmatprep.subr.bf16.mxu0 0
      %566 = vmatpush1.bf16.msra.mxu0 0
      %567 = vmatprep.subr.bf16.mxu0 0
      %568 = vmatpush1.bf16.msra.mxu0 0
      %569 = vmatprep.subr.bf16.mxu0 0
      %570 = vmatpush1.bf16.msra.mxu0 0
      %571 = vmatprep.subr.bf16.mxu0 0
      %572 = vmatpush1.bf16.msra.mxu0 0
      %573 = vmatprep.subr.bf16.mxu0 0
      %574 = vmatpush1.bf16.msra.mxu0 0
      %575 = vmatprep.subr.bf16.mxu0 0
      %576 = vmatpush1.bf16.msra.mxu0 0
      %577 = vmatprep.mubr.bf16.mxu0 0
      %578 = vmatmul.mubr.bf16.gmra.mrb[0].mxu0 %v543
      %v579 = vpop.f32.mrb[0].mxu0
      %v580 = vadd.f32 0.0, %v579
      %v581 = vpop.f32.mrb[0].mxu0
      %v582 = vpop.f32.mrb[0].mxu0
      %v583 = vadd.f32 0.0, %v582
      %v584 = vpop.f32.mrb[0].mxu0
      %585 = vdwg.mxu0
      %v586 = vadd.f32 %v529, %v580
      %v587 = vadd.f32 %v530, %v583
      %s588 = scalar_lea.vmem %s268, 40
      %v589 = vld [vmem:[%s588] sm:$0xf]
      %v590 = vld [vmem:[%s588 + $0x4] sm:$0xf]
      %v593 = vunpack.c.l.b16 %v589
      %v594 = vunpack.c.l.b16 %v590
      %v595 = vpack.c.b16 %v594, %v593
      %596 = vrot.lane.b32.xlu0 %v318, 116
      %v597 = vpop.permute.xlu0 %596
      %v600 = vsel %vm322, %v595, 0
      %602 = vmatprep.subr.bf16.mxu0 0
      %603 = vmatpush1.bf16.msra.mxu0 %v597
      %604 = vmatprep.subr.bf16.mxu0 0
      %605 = vmatpush1.bf16.msra.mxu0 0
      %606 = vmatprep.subr.bf16.mxu0 0
      %607 = vmatpush1.bf16.msra.mxu0 0
      %608 = vmatprep.subr.bf16.mxu0 0
      %609 = vmatpush1.bf16.msra.mxu0 0
      %610 = vmatprep.subr.bf16.mxu0 0
      %611 = vmatpush1.bf16.msra.mxu0 0
      %612 = vmatprep.subr.bf16.mxu0 0
      %613 = vmatpush1.bf16.msra.mxu0 0
      %614 = vmatprep.subr.bf16.mxu0 0
      %615 = vmatpush1.bf16.msra.mxu0 0
      %616 = vmatprep.subr.bf16.mxu0 0
      %617 = vmatpush1.bf16.msra.mxu0 0
      %618 = vmatprep.subr.bf16.mxu0 0
      %619 = vmatpush1.bf16.msra.mxu0 0
      %620 = vmatprep.subr.bf16.mxu0 0
      %621 = vmatpush1.bf16.msra.mxu0 0
      %622 = vmatprep.subr.bf16.mxu0 0
      %623 = vmatpush1.bf16.msra.mxu0 0
      %624 = vmatprep.subr.bf16.mxu0 0
      %625 = vmatpush1.bf16.msra.mxu0 0
      %626 = vmatprep.subr.bf16.mxu0 0
      %627 = vmatpush1.bf16.msra.mxu0 0
      %628 = vmatprep.subr.bf16.mxu0 0
      %629 = vmatpush1.bf16.msra.mxu0 0
      %630 = vmatprep.subr.bf16.mxu0 0
      %631 = vmatpush1.bf16.msra.mxu0 0
      %632 = vmatprep.subr.bf16.mxu0 0
      %633 = vmatpush1.bf16.msra.mxu0 0
      %634 = vmatprep.mubr.bf16.mxu0 0
      %635 = vmatmul.mubr.bf16.gmra.mrb[0].mxu0 %v600
      %v636 = vpop.f32.mrb[0].mxu0
      %v637 = vadd.f32 0.0, %v636
      %v638 = vpop.f32.mrb[0].mxu0
      %v639 = vpop.f32.mrb[0].mxu0
      %v640 = vadd.f32 0.0, %v639
      %v641 = vpop.f32.mrb[0].mxu0
      %642 = vdwg.mxu0
      %v643 = vadd.f32 %v586, %v637
      %v644 = vadd.f32 %v587, %v640
      %s645 = scalar_lea.vmem %s268, 48
      %v646 = vld [vmem:[%s645] sm:$0xf]
      %v647 = vld [vmem:[%s645 + $0x4] sm:$0xf]
      %v650 = vunpack.c.l.b16 %v646
      %v651 = vunpack.c.l.b16 %v647
      %v652 = vpack.c.b16 %v651, %v650
      %653 = vrot.lane.b32.xlu0 %v318, 108
      %v654 = vpop.permute.xlu0 %653
      %v657 = vsel %vm322, %v652, 0
      %659 = vmatprep.subr.bf16.mxu0 0
      %660 = vmatpush1.bf16.msra.mxu0 %v654
      %661 = vmatprep.subr.bf16.mxu0 0
      %662 = vmatpush1.bf16.msra.mxu0 0
      %663 = vmatprep.subr.bf16.mxu0 0
      %664 = vmatpush1.bf16.msra.mxu0 0
      %665 = vmatprep.subr.bf16.mxu0 0
      %666 = vmatpush1.bf16.msra.mxu0 0
      %667 = vmatprep.subr.bf16.mxu0 0
      %668 = vmatpush1.bf16.msra.mxu0 0
      %669 = vmatprep.subr.bf16.mxu0 0
      %670 = vmatpush1.bf16.msra.mxu0 0
      %671 = vmatprep.subr.bf16.mxu0 0
      %672 = vmatpush1.bf16.msra.mxu0 0
      %673 = vmatprep.subr.bf16.mxu0 0
      %674 = vmatpush1.bf16.msra.mxu0 0
      %675 = vmatprep.subr.bf16.mxu0 0
      %676 = vmatpush1.bf16.msra.mxu0 0
      %677 = vmatprep.subr.bf16.mxu0 0
      %678 = vmatpush1.bf16.msra.mxu0 0
      %679 = vmatprep.subr.bf16.mxu0 0
      %680 = vmatpush1.bf16.msra.mxu0 0
      %681 = vmatprep.subr.bf16.mxu0 0
      %682 = vmatpush1.bf16.msra.mxu0 0
      %683 = vmatprep.subr.bf16.mxu0 0
      %684 = vmatpush1.bf16.msra.mxu0 0
      %685 = vmatprep.subr.bf16.mxu0 0
      %686 = vmatpush1.bf16.msra.mxu0 0
      %687 = vmatprep.subr.bf16.mxu0 0
      %688 = vmatpush1.bf16.msra.mxu0 0
      %689 = vmatprep.subr.bf16.mxu0 0
      %690 = vmatpush1.bf16.msra.mxu0 0
      %691 = vmatprep.mubr.bf16.mxu0 0
      %692 = vmatmul.mubr.bf16.gmra.mrb[0].mxu0 %v657
      %v693 = vpop.f32.mrb[0].mxu0
      %v694 = vadd.f32 0.0, %v693
      %v695 = vpop.f32.mrb[0].mxu0
      %v696 = vpop.f32.mrb[0].mxu0
      %v697 = vadd.f32 0.0, %v696
      %v698 = vpop.f32.mrb[0].mxu0
      %699 = vdwg.mxu0
      %v700 = vadd.f32 %v643, %v694
      %v701 = vadd.f32 %v644, %v697
      %s702 = scalar_lea.vmem %s268, 56
      %v703 = vld [vmem:[%s702] sm:$0xf]
      %v704 = vld [vmem:[%s702 + $0x4] sm:$0xf]
      %v707 = vunpack.c.l.b16 %v703
      %v708 = vunpack.c.l.b16 %v704
      %v709 = vpack.c.b16 %v708, %v707
      %710 = vrot.lane.b32.xlu0 %v318, 107
      %v711 = vpop.permute.xlu0 %710
      %v714 = vsel %vm322, %v709, 0
      %716 = vmatprep.subr.bf16.mxu0 0
      %717 = vmatpush1.bf16.msra.mxu0 %v711
      %718 = vmatprep.subr.bf16.mxu0 0
      %719 = vmatpush1.bf16.msra.mxu0 0
      %720 = vmatprep.subr.bf16.mxu0 0
      %721 = vmatpush1.bf16.msra.mxu0 0
      %722 = vmatprep.subr.bf16.mxu0 0
      %723 = vmatpush1.bf16.msra.mxu0 0
      %724 = vmatprep.subr.bf16.mxu0 0
      %725 = vmatpush1.bf16.msra.mxu0 0
      %726 = vmatprep.subr.bf16.mxu0 0
      %727 = vmatpush1.bf16.msra.mxu0 0
      %728 = vmatprep.subr.bf16.mxu0 0
      %729 = vmatpush1.bf16.msra.mxu0 0
      %730 = vmatprep.subr.bf16.mxu0 0
      %731 = vmatpush1.bf16.msra.mxu0 0
      %732 = vmatprep.subr.bf16.mxu0 0
      %733 = vmatpush1.bf16.msra.mxu0 0
      %734 = vmatprep.subr.bf16.mxu0 0
      %735 = vmatpush1.bf16.msra.mxu0 0
      %736 = vmatprep.subr.bf16.mxu0 0
      %737 = vmatpush1.bf16.msra.mxu0 0
      %738 = vmatprep.subr.bf16.mxu0 0
      %739 = vmatpush1.bf16.msra.mxu0 0
      %740 = vmatprep.subr.bf16.mxu0 0
      %741 = vmatpush1.bf16.msra.mxu0 0
      %742 = vmatprep.subr.bf16.mxu0 0
      %743 = vmatpush1.bf16.msra.mxu0 0
      %744 = vmatprep.subr.bf16.mxu0 0
      %745 = vmatpush1.bf16.msra.mxu0 0
      %746 = vmatprep.subr.bf16.mxu0 0
      %747 = vmatpush1.bf16.msra.mxu0 0
      %748 = vmatprep.mubr.bf16.mxu0 0
      %749 = vmatmul.mubr.bf16.gmra.mrb[0].mxu0 %v714
      %v750 = vpop.f32.mrb[0].mxu0
      %v751 = vadd.f32 0.0, %v750
      %v752 = vpop.f32.mrb[0].mxu0
      %v753 = vpop.f32.mrb[0].mxu0
      %v754 = vadd.f32 0.0, %v753
      %v755 = vpop.f32.mrb[0].mxu0
      %756 = vdwg.mxu0
      %v757 = vadd.f32 %v700, %v751
      %v758 = vadd.f32 %v701, %v754
      %s759 = scalar_lea.vmem %s268, 64
      %v760 = vld [vmem:[%s759] sm:$0xf]
      %v761 = vld [vmem:[%s759 + $0x4] sm:$0xf]
      %v764 = vunpack.c.l.b16 %v760
      %v765 = vunpack.c.l.b16 %v761
      %v766 = vpack.c.b16 %v765, %v764
      %767 = vrot.lane.b32.xlu0 %v318, 106
      %v768 = vpop.permute.xlu0 %767
      %v771 = vsel %vm322, %v766, 0
      %773 = vmatprep.subr.bf16.mxu0 0
      %774 = vmatpush1.bf16.msra.mxu0 %v768
      %775 = vmatprep.subr.bf16.mxu0 0
      %776 = vmatpush1.bf16.msra.mxu0 0
      %777 = vmatprep.subr.bf16.mxu0 0
      %778 = vmatpush1.bf16.msra.mxu0 0
      %779 = vmatprep.subr.bf16.mxu0 0
      %780 = vmatpush1.bf16.msra.mxu0 0
      %781 = vmatprep.subr.bf16.mxu0 0
      %782 = vmatpush1.bf16.msra.mxu0 0
      %783 = vmatprep.subr.bf16.mxu0 0
      %784 = vmatpush1.bf16.msra.mxu0 0
      %785 = vmatprep.subr.bf16.mxu0 0
      %786 = vmatpush1.bf16.msra.mxu0 0
      %787 = vmatprep.subr.bf16.mxu0 0
      %788 = vmatpush1.bf16.msra.mxu0 0
      %789 = vmatprep.subr.bf16.mxu0 0
      %790 = vmatpush1.bf16.msra.mxu0 0
      %791 = vmatprep.subr.bf16.mxu0 0
      %792 = vmatpush1.bf16.msra.mxu0 0
      %793 = vmatprep.subr.bf16.mxu0 0
      %794 = vmatpush1.bf16.msra.mxu0 0
      %795 = vmatprep.subr.bf16.mxu0 0
      %796 = vmatpush1.bf16.msra.mxu0 0
      %797 = vmatprep.subr.bf16.mxu0 0
      %798 = vmatpush1.bf16.msra.mxu0 0
      %799 = vmatprep.subr.bf16.mxu0 0
      %800 = vmatpush1.bf16.msra.mxu0 0
      %801 = vmatprep.subr.bf16.mxu0 0
      %802 = vmatpush1.bf16.msra.mxu0 0
      %803 = vmatprep.subr.bf16.mxu0 0
      %804 = vmatpush1.bf16.msra.mxu0 0
      %805 = vmatprep.mubr.bf16.mxu0 0
      %806 = vmatmul.mubr.bf16.gmra.mrb[0].mxu0 %v771
      %v807 = vpop.f32.mrb[0].mxu0
      %v808 = vadd.f32 0.0, %v807
      %v809 = vpop.f32.mrb[0].mxu0
      %v810 = vpop.f32.mrb[0].mxu0
      %v811 = vadd.f32 0.0, %v810
      %v812 = vpop.f32.mrb[0].mxu0
      %813 = vdwg.mxu0
      %v814 = vadd.f32 %v757, %v808
      %v815 = vadd.f32 %v758, %v811
      %v816 = vld [vmem:[%s279] sm:$0xff]
      %v817 = vld [vmem:[%s279 + $0x8] sm:$0xff]
      %819 = vset.pattern.permute.xlu0 0
      %820 = vperm.xlu0 %819, %v816
      %v821 = vpop.permute.xlu0 %820
      %824 = vset.pattern.permute.xlu0 0
      %825 = vperm.xlu0 %824, %v817
      %v826 = vpop.permute.xlu0 %825
      %v828 = vadd.f32 %v814, %v821
      %v829 = vadd.f32 %v815, %v826
      %v830 = vld [vmem:[%s289] sm:$0xf]
      %v831 = vld [vmem:[%s289 + $0x4] sm:$0xf]
      %v832 = vunpack.c.l.bf16 %v830
      %v833 = vunpack.c.l.bf16 %v831
      %v834 = vadd.f32 %v828, %v832
      %v835 = vadd.f32 %v829, %v833
      %v836 = vmax.f32 %v834, 0.0
      %v837 = vmax.f32 %v835, 0.0
      %v838 = vpack.c.bf16 %v837, %v836
      %v840 = vunpack.c.l.b16 %v838
      %v841 = vunpack.c.h.b16 %v838
      %v842 = vpack.c.b16 %v840, %v840
      %v843 = vpack.c.b16 %v841, %v841
      %vm846 = vcmask 650240
      %847 = vst.msk [vmem:[%s299] sm:$0xf] %vm846, %v842
      %848 = vst.msk [vmem:[%s299 + $0x4] sm:$0xf] %vm846, %v843
      %s849 = smul.u32 2, %s20
      %p850 = scmp.lt.s32.totalorder %s19, 1
      %s851 = scalar_select %p850, %s19, 1
      %p852 = scmp.lt.s32.totalorder %s849, 1
      %s853 = scalar_select %p852, %s849, 1
      %s854 = smul.addr %s851, 2
      %s855 = sadd.s32 %s853, %s854
      %s856 = smul.addr %s855, 4
      %s857 = scalar_lea.vmem %s4, %s856
      // Predicated region
      $region37: #{tree_forward.16} parent=35 // pred_check
        %p858 = pneg %p153
      $region38: #{tree_forward.16} parent=35 // pred_check_branch
        %860 = sbr.rel (%p858) target = $region40
      $region39: #{tree_forward.16} parent=35 // pred_region
        %s861 = smul.u32 2, %s20
      $region40: #{tree_forward.16} parent=35 // pred_fallthru
        _
    $region36: #{tree_forward.16} parent=5 // pred_fallthru
      _
    %p862 = scmp.le.s32.totalorder 2, %s10
    // Predicated region
    $region41: #{tree_forward.16} parent=5 // pred_check
      %p863 = pneg %p862
    $region42: #{tree_forward.16} parent=5 // pred_check_branch
      %865 = sbr.rel (%p863) target = $region44
    $region43: #{tree_forward.16} parent=5 // pred_region
      %s866 = ssub.s32 %s10, 2
      // Predicated region
      $region45: #{tree_forward.16} parent=43 // pred_check
        %p867 = pneg %p159
      $region46: #{tree_forward.16} parent=43 // pred_check_branch
        %869 = sbr.rel (%p867) target = $region48
      $region47: #{tree_forward.16} parent=43 // pred_region
        %s870 = smul.u32 2, %s22
        %p871 = scmp.lt.s32.totalorder %s21, 1
        %s872 = scalar_select %p871, %s21, 1
        %p873 = scmp.lt.s32.totalorder %s870, 1
        %s874 = scalar_select %p873, %s870, 1
        %s875 = smul.addr %s872, 2
        %s876 = sadd.s32 %s874, %s875
        %s877 = smul.addr %s876, 4
        %s878 = scalar_lea.vmem %s4, %s877
      $region48: #{tree_forward.16} parent=43 // pred_fallthru
        _
    $region44: #{tree_forward.16} parent=5 // pred_fallthru
      _
  $region6: #{tree_forward.16} parent=0 // loop_footer
    %s14 = sadd.s32 1, %s10
  $region7: #{tree_forward.16} parent=0 // loop_footer_branch
    %9 = sbr.rel target = $region3
  $region8: #{tree_forward.16} parent=0 // loop_exit
    _

// kernel: tree_forward.19
$region0: #{tree_forward.19}
  #allocation0 [shape = 'u32[]', space=smem, size = 0x4, offset = 0x4, fixed_abs, tag = 'smem constant byte address 0x4 - core index']
  #allocation1 [shape = 'u32[144,128]{1,0:T(1,128)}', space=vmem, size = 0x12000, scoped, tag = 'internal scratch']
  #allocation2 [shape = 'f32[16,64]{1,0:T(8,128)}', space=vmem, size = 0x2000, scoped, tag = 'scratch operand']
  %s0 = inlined_call_operand.vmem [shape: bf16[16,16], index: 0, kind: input, shape index: {}]
  %s1 = inlined_call_operand.vmem [shape: bf16[2,16,64], index: 1, kind: input, shape index: {}]
  %s2 = inlined_call_operand.vmem [shape: bf16[16,16], index: 2, kind: input, shape index: {}]
  %s3 = inlined_call_operand.vmem [shape: bf16[2,16,64], index: 3, kind: input, shape index: {}]
  %s4 = inlined_call_operand.vmem [shape: f32[16,1], index: 4, kind: input, shape index: {}]
  %s5 = inlined_call_operand.vmem [shape: bf16[2,16,64], index: 5, kind: output, shape index: {}]
  %s6 = sld [smem:[#allocation0]]
  $region61: #{tree_forward.19} parent=0
    _
  %s8 = ssub.s32 1, %s6
  %s9 = scalar_select 0, %s8, %s6
  loop: start=0, step=1, limit=4
  $region2: #{tree_forward.19} parent=0 // loop_pre_header
    _
  $region3: #{tree_forward.19} parent=0 // loop_header
    %s11 = sphi 0, %s15
    %p12 = scmp.ge.s32.totalorder %s11, 4
    %s18 = sphi 0, %s44
    %s19 = sphi 0, %s40
    %s20 = sphi 0, %s36
    %s21 = sphi 0, %s32
    %s22 = sphi 0, %s18
    %s23 = sphi 0, %s19
    %s24 = sphi 0, %s20
    %s25 = sphi 0, %s21
    %s26 = sphi 0, %s22
    %s27 = sphi 0, %s23
    %s28 = sphi 0, %s24
    %s29 = sphi 0, %s25
    %s49 = sphi 0, %s51
    %s52 = sphi 0, %s49
    %s53 = sphi 0, %s52
    %s69 = sphi 0, %s53
    %s79 = sphi 0, %s81
    %s82 = sphi 0, %s79
    %s83 = sphi 0, %s82
    %s99 = sphi 0, %s83
    %s107 = sphi 0, %s109
    %s110 = sphi 0, %s107
    %s111 = sphi 0, %s110
    %s127 = sphi 0, %s111
    %s137 = sphi 0, %s139
    %s140 = sphi 0, %s137
    %s141 = sphi 0, %s140
    %s157 = sphi 0, %s141
    %s163 = sphi 0, %s165
    %s166 = sphi 0, %s163
    %s167 = sphi 0, %s166
    %s183 = sphi 0, %s167
    %s193 = sphi 0, %s195
    %s196 = sphi 0, %s193
    %s197 = sphi 0, %s196
    %s213 = sphi 0, %s197
  $region4: #{tree_forward.19} parent=0 // loop_header_branch
    %14 = sbr.rel (%p12) target = $region8
  $region5: #{tree_forward.19} parent=0 // loop_body
    %s16 = ssub.s32 %s11, 1
    %s17 = ssub.s32 %s11, 2
    %s30 = sadd.s32 1, %s21
    %p31 = scmp.ge.s32.totalorder %s30, 1
    %s32 = scalar_select %p31, 0, %s30
    %s33 = sadd.s32 1, %s20
    %s34 = scalar_select %p31, %s33, %s20
    %p35 = scmp.ge.s32.totalorder %s34, 1
    %s36 = scalar_select %p35, 0, %s34
    %s37 = sadd.s32 1, %s19
    %s38 = scalar_select %p35, %s37, %s19
    %p39 = scmp.ge.s32.totalorder %s38, 1
    %s40 = scalar_select %p39, 0, %s38
    %s41 = sadd.s32 1, %s18
    %s42 = scalar_select %p39, %s41, %s18
    %p43 = scmp.ge.s32.totalorder %s42, 2
    %s44 = scalar_select %p43, 0, %s42
    %s45 = ssub.s32 %s19, %s40
    %s46 = ssub.s32 %s21, %s32
    %s47 = sor.u32 %s45, %s46
    %p48 = scmp.eq.s32.totalorder %s47, 0
    %s50 = sadd.s32 %s49, 1
    %s51 = scalar_select %p48, %s49, %s50
    %p54 = pneg %p48
    %p55 = scmp.eq.s32.totalorder %s11, 1
    %p56 = por %p54, %p55
    %p57 = scmp.ne.s32.totalorder %s49, %s52
    %p58 = scmp.eq.s32.totalorder %s11, 0
    %p59 = por %p57, %p58
    %p60 = scmp.ne.s32.totalorder %s49, %s52
    %p61 = scmp.eq.s32.totalorder %s16, 1
    %p62 = por %p60, %p61
    %p63 = scmp.ne.s32.totalorder %s52, %s53
    %p64 = scmp.eq.s32.totalorder %s16, 0
    %p65 = por %p63, %p64
    %p66 = scmp.ne.s32.totalorder %s52, %s53
    %p67 = scmp.eq.s32.totalorder %s17, 1
    %p68 = por %p66, %p67
    %p70 = scmp.ne.s32.totalorder %s53, %s69
    %p71 = scmp.eq.s32.totalorder %s17, 0
    %p72 = por %p70, %p71
    %s73 = ssub.s32 %s18, %s44
    %s74 = ssub.s32 %s21, %s32
    %s75 = sor.u32 %s73, %s74
    %s76 = ssub.s32 %s20, %s36
    %s77 = sor.u32 %s75, %s76
    %p78 = scmp.eq.s32.totalorder %s77, 0
    %s80 = sadd.s32 %s79, 1
    %s81 = scalar_select %p78, %s79, %s80
    %p84 = pneg %p78
    %p85 = scmp.eq.s32.totalorder %s11, 1
    %p86 = por %p84, %p85
    %p87 = scmp.ne.s32.totalorder %s79, %s82
    %p88 = scmp.eq.s32.totalorder %s11, 0
    %p89 = por %p87, %p88
    %p90 = scmp.ne.s32.totalorder %s79, %s82
    %p91 = scmp.eq.s32.totalorder %s16, 1
    %p92 = por %p90, %p91
    %p93 = scmp.ne.s32.totalorder %s82, %s83
    %p94 = scmp.eq.s32.totalorder %s16, 0
    %p95 = por %p93, %p94
    %p96 = scmp.ne.s32.totalorder %s82, %s83
    %p97 = scmp.eq.s32.totalorder %s17, 1
    %p98 = por %p96, %p97
    %p100 = scmp.ne.s32.totalorder %s83, %s99
    %p101 = scmp.eq.s32.totalorder %s17, 0
    %p102 = por %p100, %p101
    %s103 = ssub.s32 %s19, %s40
    %s104 = ssub.s32 %s21, %s32
    %s105 = sor.u32 %s103, %s104
    %p106 = scmp.eq.s32.totalorder %s105, 0
    %s108 = sadd.s32 %s107, 1
    %s109 = scalar_select %p106, %s107, %s108
    %p112 = pneg %p106
    %p113 = scmp.eq.s32.totalorder %s11, 1
    %p114 = por %p112, %p113
    %p115 = scmp.ne.s32.totalorder %s107, %s110
    %p116 = scmp.eq.s32.totalorder %s11, 0
    %p117 = por %p115, %p116
    %p118 = scmp.ne.s32.totalorder %s107, %s110
    %p119 = scmp.eq.s32.totalorder %s16, 1
    %p120 = por %p118, %p119
    %p121 = scmp.ne.s32.totalorder %s110, %s111
    %p122 = scmp.eq.s32.totalorder %s16, 0
    %p123 = por %p121, %p122
    %p124 = scmp.ne.s32.totalorder %s110, %s111
    %p125 = scmp.eq.s32.totalorder %s17, 1
    %p126 = por %p124, %p125
    %p128 = scmp.ne.s32.totalorder %s111, %s127
    %p129 = scmp.eq.s32.totalorder %s17, 0
    %p130 = por %p128, %p129
    %s131 = ssub.s32 %s18, %s44
    %s132 = ssub.s32 %s21, %s32
    %s133 = sor.u32 %s131, %s132
    %s134 = ssub.s32 %s20, %s36
    %s135 = sor.u32 %s133, %s134
    %p136 = scmp.eq.s32.totalorder %s135, 0
    %s138 = sadd.s32 %s137, 1
    %s139 = scalar_select %p136, %s137, %s138
    %p142 = pneg %p136
    %p143 = scmp.eq.s32.totalorder %s11, 1
    %p144 = por %p142, %p143
    %p145 = scmp.ne.s32.totalorder %s137, %s140
    %p146 = scmp.eq.s32.totalorder %s11, 0
    %p147 = por %p145, %p146
    %p148 = scmp.ne.s32.totalorder %s137, %s140
    %p149 = scmp.eq.s32.totalorder %s16, 1
    %p150 = por %p148, %p149
    %p151 = scmp.ne.s32.totalorder %s140, %s141
    %p152 = scmp.eq.s32.totalorder %s16, 0
    %p153 = por %p151, %p152
    %p154 = scmp.ne.s32.totalorder %s140, %s141
    %p155 = scmp.eq.s32.totalorder %s17, 1
    %p156 = por %p154, %p155
    %p158 = scmp.ne.s32.totalorder %s141, %s157
    %p159 = scmp.eq.s32.totalorder %s17, 0
    %p160 = por %p158, %p159
    %s161 = ssub.s32 %s19, %s40
    %p162 = scmp.eq.s32.totalorder %s161, 0
    %s164 = sadd.s32 %s163, 1
    %s165 = scalar_select %p162, %s163, %s164
    %p168 = pneg %p162
    %p169 = scmp.eq.s32.totalorder %s11, 1
    %p170 = por %p168, %p169
    %p171 = scmp.ne.s32.totalorder %s163, %s166
    %p172 = scmp.eq.s32.totalorder %s11, 0
    %p173 = por %p171, %p172
    %p174 = scmp.ne.s32.totalorder %s163, %s166
    %p175 = scmp.eq.s32.totalorder %s16, 1
    %p176 = por %p174, %p175
    %p177 = scmp.ne.s32.totalorder %s166, %s167
    %p178 = scmp.eq.s32.totalorder %s16, 0
    %p179 = por %p177, %p178
    %p180 = scmp.ne.s32.totalorder %s166, %s167
    %p181 = scmp.eq.s32.totalorder %s17, 1
    %p182 = por %p180, %p181
    %p184 = scmp.ne.s32.totalorder %s167, %s183
    %p185 = scmp.eq.s32.totalorder %s17, 0
    %p186 = por %p184, %p185
    %s187 = ssub.s32 %s18, %s44
    %s188 = ssub.s32 %s19, %s40
    %s189 = sor.u32 %s187, %s188
    %s190 = ssub.s32 %s20, %s36
    %s191 = sor.u32 %s189, %s190
    %p192 = scmp.eq.s32.totalorder %s191, 0
    %s194 = sadd.s32 %s193, 1
    %s195 = scalar_select %p192, %s193, %s194
    %p198 = pneg %p192
    %p199 = scmp.eq.s32.totalorder %s11, 1
    %p200 = por %p198, %p199
    %p201 = scmp.ne.s32.totalorder %s193, %s196
    %p202 = scmp.eq.s32.totalorder %s11, 0
    %p203 = por %p201, %p202
    %p204 = scmp.ne.s32.totalorder %s193, %s196
    %p205 = scmp.eq.s32.totalorder %s16, 1
    %p206 = por %p204, %p205
    %p207 = scmp.ne.s32.totalorder %s196, %s197
    %p208 = scmp.eq.s32.totalorder %s16, 0
    %p209 = por %p207, %p208
    %p210 = scmp.ne.s32.totalorder %s196, %s197
    %p211 = scmp.eq.s32.totalorder %s17, 1
    %p212 = por %p210, %p211
    %p214 = scmp.ne.s32.totalorder %s197, %s213
    %p215 = scmp.eq.s32.totalorder %s17, 0
    %p216 = por %p214, %p215
    %p217 = scmp.le.s32.totalorder 1, %s11
    %p218 = scmp.lt.s32.totalorder %s11, 3
    %p219 = pnand %p217, %p218
    %p220 = pneg %p219
    // Predicated region
    $region9: #{tree_forward.19} parent=5 // pred_check
      _
    $region10: #{tree_forward.19} parent=5 // pred_check_branch
      %222 = sbr.rel (%p219) target = $region12
    $region11: #{tree_forward.19} parent=5 // pred_region
      %s223 = ssub.s32 %s11, 1
      // Predicated region
      $region13: #{tree_forward.19} parent=11 // pred_check
        %p224 = pneg %p65
      $region14: #{tree_forward.19} parent=11 // pred_check_branch
        %226 = sbr.rel (%p224) target = $region16
      $region15: #{tree_forward.19} parent=11 // pred_region
        %s227 = smul.u32 2, %s23
        %p228 = scmp.lt.s32.totalorder %s227, 1
        %s229 = scalar_select %p228, %s227, 1
        %p230 = scmp.lt.s32.totalorder %s25, 0
        %s231 = scalar_select %p230, %s25, 0
        %s232 = sadd.s32 %s231, %s229
        %s233 = smul.addr %s232, 4
        %s234 = scalar_lea.vmem %s0, %s233
        %s235 = smul.u32 2, %s23
      $region16: #{tree_forward.19} parent=11 // pred_fallthru
        _
      // Predicated region
      $region17: #{tree_forward.19} parent=11 // pred_check
        %p236 = pneg %p123
      $region18: #{tree_forward.19} parent=11 // pred_check_branch
        %238 = sbr.rel (%p236) target = $region20
      $region19: #{tree_forward.19} parent=11 // pred_region
        %s239 = smul.u32 2, %s23
        %p240 = scmp.lt.s32.totalorder %s239, 1
        %s241 = scalar_select %p240, %s239, 1
        %p242 = scmp.lt.s32.totalorder %s25, 0
        %s243 = scalar_select %p242, %s25, 0
        %s244 = sadd.s32 %s243, %s241
        %s245 = smul.addr %s244, 4
        %s246 = scalar_lea.vmem %s2, %s245
        %s247 = smul.u32 2, %s23
      $region20: #{tree_forward.19} parent=11 // pred_fallthru
        _
      // Predicated region
      $region21: #{tree_forward.19} parent=11 // pred_check
        %p248 = pneg %p179
      $region22: #{tree_forward.19} parent=11 // pred_check_branch
        %250 = sbr.rel (%p248) target = $region24
      $region23: #{tree_forward.19} parent=11 // pred_region
        %s251 = smul.u32 2, %s23
        %p252 = scmp.lt.s32.totalorder %s251, 1
        %s253 = scalar_select %p252, %s251, 1
        %s254 = smul.addr %s253, 8
        %s255 = scalar_lea.vmem %s4, %s254
        %s256 = smul.u32 2, %s23
      $region24: #{tree_forward.19} parent=11 // pred_fallthru
        _
    $region12: #{tree_forward.19} parent=5 // pred_fallthru
      _
    %p257 = scmp.lt.s32.totalorder %s11, 2
    // Predicated region
    $region25: #{tree_forward.19} parent=5 // pred_check
      %p258 = pneg %p257
    $region26: #{tree_forward.19} parent=5 // pred_check_branch
      %260 = sbr.rel (%p258) target = $region28
    $region27: #{tree_forward.19} parent=5 // pred_region
      // Predicated region
      $region29: #{tree_forward.19} parent=27 // pred_check
        %p261 = pneg %p89
      $region30: #{tree_forward.19} parent=27 // pred_check_branch
        %263 = sbr.rel (%p261) target = $region32
      $region31: #{tree_forward.19} parent=27 // pred_region
        %s264 = smul.u32 2, %s21
        %p265 = scmp.lt.s32.totalorder %s18, 1
        %s266 = scalar_select %p265, %s18, 1
        %p267 = scmp.lt.s32.totalorder %s264, 1
        %s268 = scalar_select %p267, %s264, 1
        %p269 = scmp.lt.s32.totalorder %s20, 0
        %s270 = scalar_select %p269, %s20, 0
        %s271 = sadd.s32 %s270, %s268
        %s272 = smul.addr %s266, 2
        %s273 = sadd.s32 %s271, %s272
        %s274 = smul.addr %s273, 4
        %s275 = scalar_lea.vmem %s1, %s274
        %s276 = smul.u32 2, %s21
      $region32: #{tree_forward.19} parent=27 // pred_fallthru
        _
      // Predicated region
      $region33: #{tree_forward.19} parent=27 // pred_check
        %p277 = pneg %p147
      $region34: #{tree_forward.19} parent=27 // pred_check_branch
        %279 = sbr.rel (%p277) target = $region36
      $region35: #{tree_forward.19} parent=27 // pred_region
        %s280 = smul.u32 2, %s21
        %p281 = scmp.lt.s32.totalorder %s18, 1
        %s282 = scalar_select %p281, %s18, 1
        %p283 = scmp.lt.s32.totalorder %s280, 1
        %s284 = scalar_select %p283, %s280, 1
        %p285 = scmp.lt.s32.totalorder %s20, 0
        %s286 = scalar_select %p285, %s20, 0
        %s287 = sadd.s32 %s286, %s284
        %s288 = smul.addr %s282, 2
        %s289 = sadd.s32 %s287, %s288
        %s290 = smul.addr %s289, 4
        %s291 = scalar_lea.vmem %s3, %s290
        %s292 = smul.u32 2, %s21
      $region36: #{tree_forward.19} parent=27 // pred_fallthru
        _
    $region28: #{tree_forward.19} parent=5 // pred_fallthru
      _
    %p293 = scmp.le.s32.totalorder 1, %s11
    %p294 = scmp.lt.s32.totalorder %s11, 3
    %p295 = pnand %p293, %p294
    %p296 = pneg %p295
    // Predicated region
    $region37: #{tree_forward.19} parent=5 // pred_check
      _
    $region38: #{tree_forward.19} parent=5 // pred_check_branch
      %298 = sbr.rel (%p295) target = $region40
    $region39: #{tree_forward.19} parent=5 // pred_region
      %s299 = ssub.s32 %s11, 1
      %s300 = smul.u32 2, %s23
      %p301 = scmp.lt.s32.totalorder %s300, 1
      %s302 = scalar_select %p301, %s300, 1
      %p303 = scmp.lt.s32.totalorder %s25, 0
      %s304 = scalar_select %p303, %s25, 0
      %s305 = sadd.s32 %s304, %s302
      %s306 = smul.addr %s305, 4
      %s307 = scalar_lea.vmem %s0, %s306
      %p308 = pneg %p65
      %p309 = pneg %p62
      %s310 = smul.u32 2, %s25
      %p311 = scmp.lt.s32.totalorder %s22, 1
      %s312 = scalar_select %p311, %s22, 1
      %p313 = scmp.lt.s32.totalorder %s310, 1
      %s314 = scalar_select %p313, %s310, 1
      %p315 = scmp.lt.s32.totalorder %s24, 0
      %s316 = scalar_select %p315, %s24, 0
      %s317 = sadd.s32 %s316, %s314
      %s318 = smul.addr %s312, 2
      %s319 = sadd.s32 %s317, %s318
      %s320 = smul.addr %s319, 4
      %s321 = scalar_lea.vmem %s1, %s320
      %p322 = pneg %p95
      %p323 = pneg %p92
      %s324 = smul.u32 2, %s23
      %p325 = scmp.lt.s32.totalorder %s324, 1
      %s326 = scalar_select %p325, %s324, 1
      %p327 = scmp.lt.s32.totalorder %s25, 0
      %s328 = scalar_select %p327, %s25, 0
      %s329 = sadd.s32 %s328, %s326
      %s330 = smul.addr %s329, 4
      %s331 = scalar_lea.vmem %s2, %s330
      %p332 = pneg %p123
      %p333 = pneg %p120
      %s334 = smul.u32 2, %s25
      %p335 = scmp.lt.s32.totalorder %s22, 1
      %s336 = scalar_select %p335, %s22, 1
      %p337 = scmp.lt.s32.totalorder %s334, 1
      %s338 = scalar_select %p337, %s334, 1
      %p339 = scmp.lt.s32.totalorder %s24, 0
      %s340 = scalar_select %p339, %s24, 0
      %s341 = sadd.s32 %s340, %s338
      %s342 = smul.addr %s336, 2
      %s343 = sadd.s32 %s341, %s342
      %s344 = smul.addr %s343, 4
      %s345 = scalar_lea.vmem %s3, %s344
      %p346 = pneg %p153
      %p347 = pneg %p150
      %s348 = smul.u32 2, %s23
      %p349 = scmp.lt.s32.totalorder %s348, 1
      %s350 = scalar_select %p349, %s348, 1
      %s351 = smul.addr %s350, 8
      %s352 = scalar_lea.vmem %s4, %s351
      %p353 = pneg %p179
      %p354 = pneg %p176
      %p355 = pneg %p209
      %p356 = pneg %p206
      %s357 = smul.u32 2, %s23
      %p358 = scmp.lt.s32.totalorder %s22, 1
      %s359 = scalar_select %p358, %s22, 1
      %p360 = scmp.lt.s32.totalorder %s357, 1
      %s361 = scalar_select %p360, %s357, 1
      %p362 = scmp.lt.s32.totalorder %s24, 0
      %s363 = scalar_select %p362, %s24, 0
      %s364 = sadd.s32 %s363, %s361
      %s365 = smul.addr %s359, 2
      %s366 = sadd.s32 %s364, %s365
      %s367 = smul.addr %s366, 4
      %s368 = scalar_lea.vmem %s5, %s367
      %s369 = smul.u32 2, %s23
      %p370 = scmp.lt.s32.totalorder %s369, 1
      %s371 = scalar_select %p370, %s369, 1
      %p372 = scmp.lt.s32.totalorder %s25, 0
      %s373 = scalar_select %p372, %s25, 0
      %s374 = sadd.s32 %s373, %s371
      %s375 = smul.addr %s374, 4
      %s376 = scalar_lea.vmem %s0, %s375
      %s377 = smul.u32 2, %s23
      %s378 = smul.u32 2, %s25
      %p379 = scmp.lt.s32.totalorder %s22, 1
      %s380 = scalar_select %p379, %s22, 1
      %p381 = scmp.lt.s32.totalorder %s378, 1
      %s382 = scalar_select %p381, %s378, 1
      %p383 = scmp.lt.s32.totalorder %s24, 0
      %s384 = scalar_select %p383, %s24, 0
      %s385 = sadd.s32 %s384, %s382
      %s386 = smul.addr %s380, 2
      %s387 = sadd.s32 %s385, %s386
      %s388 = smul.addr %s387, 4
      %s389 = scalar_lea.vmem %s1, %s388
      %s390 = smul.u32 2, %s25
      %s391 = smul.u32 2, %s23
      %p392 = scmp.lt.s32.totalorder %s391, 1
      %s393 = scalar_select %p392, %s391, 1
      %p394 = scmp.lt.s32.totalorder %s25, 0
      %s395 = scalar_select %p394, %s25, 0
      %s396 = sadd.s32 %s395, %s393
      %s397 = smul.addr %s396, 4
      %s398 = scalar_lea.vmem %s2, %s397
      %s399 = smul.u32 2, %s23
      %s400 = smul.u32 2, %s25
      %p401 = scmp.lt.s32.totalorder %s22, 1
      %s402 = scalar_select %p401, %s22, 1
      %p403 = scmp.lt.s32.totalorder %s400, 1
      %s404 = scalar_select %p403, %s400, 1
      %p405 = scmp.lt.s32.totalorder %s24, 0
      %s406 = scalar_select %p405, %s24, 0
      %s407 = sadd.s32 %s406, %s404
      %s408 = smul.addr %s402, 2
      %s409 = sadd.s32 %s407, %s408
      %s410 = smul.addr %s409, 4
      %s411 = scalar_lea.vmem %s3, %s410
      %s412 = smul.u32 2, %s25
      %s413 = smul.u32 2, %s23
      %p414 = scmp.lt.s32.totalorder %s413, 1
      %s415 = scalar_select %p414, %s413, 1
      %s416 = smul.addr %s415, 8
      %s417 = scalar_lea.vmem %s4, %s416
      %s418 = smul.u32 2, %s23
      %s419 = smul.u32 2, %s23
      %p420 = scmp.lt.s32.totalorder %s22, 1
      %s421 = scalar_select %p420, %s22, 1
      %p422 = scmp.lt.s32.totalorder %s419, 1
      %s423 = scalar_select %p422, %s419, 1
      %p424 = scmp.lt.s32.totalorder %s24, 0
      %s425 = scalar_select %p424, %s24, 0
      %s426 = sadd.s32 %s425, %s423
      %s427 = smul.addr %s421, 2
      %s428 = sadd.s32 %s426, %s427
      %s429 = smul.addr %s428, 4
      %s430 = scalar_lea.vmem %s5, %s429
      %s431 = smul.u32 2, %s23
      %p433 = scmp.eq.s32.totalorder %s25, 0
      // Predicated region
      $region41: #{tree_forward.19} parent=39 // pred_check
        %p434 = pneg %p433
      $region42: #{tree_forward.19} parent=39 // pred_check_branch
        %436 = sbr.rel (%p434) target = $region44
      $region43: #{tree_forward.19} parent=39 // pred_region
        %vm437 = vcmask 523264
        %438 = vst.msk [vmem:[#allocation2] sm:$0xff] %vm437, 0.0
        %439 = vst.msk [vmem:[#allocation2 + $0x8] sm:$0xff] %vm437, 0.0
      $region44: #{tree_forward.19} parent=39 // pred_fallthru
        _
      %v440 = vld [vmem:[#allocation2] sm:$0xff]
      %v441 = vld [vmem:[#allocation2 + $0x8] sm:$0xff]
      %v442 = vld [vmem:[%s376] sm:$0xf]
      %v443 = vld [vmem:[%s376 + $0x4] sm:$0xf]
      %v444 = vld [vmem:[%s389] sm:$0xf]
      %v445 = vld [vmem:[%s389 + $0x4] sm:$0xf]
      %v448 = vunpack.c.l.b16 %v442
      %v449 = vunpack.c.l.b16 %v443
      %v450 = vpack.c.b16 %v449, %v448
      %v453 = vunpack.c.l.b16 %v444
      %v454 = vunpack.c.l.b16 %v445
      %v455 = vpack.c.b16 %v454, %v453
      %vm457 = vcmask 130048
      %v459 = vsel %vm457, %v450, 0
      %461 = vmatprep.subr.bf16.mxu0 0
      %462 = vmatpush1.bf16.msra.mxu0 %v455
      %463 = vmatprep.subr.bf16.mxu0 0
      %464 = vmatpush1.bf16.msra.mxu0 0
      %465 = vmatprep.subr.bf16.mxu0 0
      %466 = vmatpush1.bf16.msra.mxu0 0
      %467 = vmatprep.subr.bf16.mxu0 0
      %468 = vmatpush1.bf16.msra.mxu0 0
      %469 = vmatprep.subr.bf16.mxu0 0
      %470 = vmatpush1.bf16.msra.mxu0 0
      %471 = vmatprep.subr.bf16.mxu0 0
      %472 = vmatpush1.bf16.msra.mxu0 0
      %473 = vmatprep.subr.bf16.mxu0 0
      %474 = vmatpush1.bf16.msra.mxu0 0
      %475 = vmatprep.subr.bf16.mxu0 0
      %476 = vmatpush1.bf16.msra.mxu0 0
      %477 = vmatprep.subr.bf16.mxu0 0
      %478 = vmatpush1.bf16.msra.mxu0 0
      %479 = vmatprep.subr.bf16.mxu0 0
      %480 = vmatpush1.bf16.msra.mxu0 0
      %481 = vmatprep.subr.bf16.mxu0 0
      %482 = vmatpush1.bf16.msra.mxu0 0
      %483 = vmatprep.subr.bf16.mxu0 0
      %484 = vmatpush1.bf16.msra.mxu0 0
      %485 = vmatprep.subr.bf16.mxu0 0
      %486 = vmatpush1.bf16.msra.mxu0 0
      %487 = vmatprep.subr.bf16.mxu0 0
      %488 = vmatpush1.bf16.msra.mxu0 0
      %489 = vmatprep.subr.bf16.mxu0 0
      %490 = vmatpush1.bf16.msra.mxu0 0
      %491 = vmatprep.subr.bf16.mxu0 0
      %492 = vmatpush1.bf16.msra.mxu0 0
      %493 = vmatprep.mubr.bf16.mxu0 0
      %494 = vmatmul.mubr.bf16.gmra.mrb[0].mxu0 %v459
      %v495 = vpop.f32.mrb[0].mxu0
      %v496 = vadd.f32 0.0, %v495
      %v497 = vpop.f32.mrb[0].mxu0
      %v498 = vpop.f32.mrb[0].mxu0
      %v499 = vadd.f32 0.0, %v498
      %v500 = vpop.f32.mrb[0].mxu0
      %501 = vdwg.mxu0
      %v502 = vadd.f32 %v440, %v496
      %v503 = vadd.f32 %v441, %v499
      %vm504 = vcmask 523264
      %505 = vst.msk [vmem:[#allocation2] sm:$0xff] %vm504, %v502
      %506 = vst.msk [vmem:[#allocation2 + $0x8] sm:$0xff] %vm504, %v503
      %v507 = vld [vmem:[#allocation2] sm:$0xff]
      %v508 = vld [vmem:[#allocation2 + $0x8] sm:$0xff]
      %v509 = vld [vmem:[%s398] sm:$0xf]
      %v510 = vld [vmem:[%s398 + $0x4] sm:$0xf]
      %v511 = vld [vmem:[%s411] sm:$0xf]
      %v512 = vld [vmem:[%s411 + $0x4] sm:$0xf]
      %v515 = vunpack.c.l.b16 %v509
      %v516 = vunpack.c.l.b16 %v510
      %v517 = vpack.c.b16 %v516, %v515
      %v520 = vunpack.c.l.b16 %v511
      %v521 = vunpack.c.l.b16 %v512
      %v522 = vpack.c.b16 %v521, %v520
      %v525 = vsel %vm457, %v517, 0
      %527 = vmatprep.subr.bf16.mxu0 0
      %528 = vmatpush1.bf16.msra.mxu0 %v522
      %529 = vmatprep.subr.bf16.mxu0 0
      %530 = vmatpush1.bf16.msra.mxu0 0
      %531 = vmatprep.subr.bf16.mxu0 0
      %532 = vmatpush1.bf16.msra.mxu0 0
      %533 = vmatprep.subr.bf16.mxu0 0
      %534 = vmatpush1.bf16.msra.mxu0 0
      %535 = vmatprep.subr.bf16.mxu0 0
      %536 = vmatpush1.bf16.msra.mxu0 0
      %537 = vmatprep.subr.bf16.mxu0 0
      %538 = vmatpush1.bf16.msra.mxu0 0
      %539 = vmatprep.subr.bf16.mxu0 0
      %540 = vmatpush1.bf16.msra.mxu0 0
      %541 = vmatprep.subr.bf16.mxu0 0
      %542 = vmatpush1.bf16.msra.mxu0 0
      %543 = vmatprep.subr.bf16.mxu0 0
      %544 = vmatpush1.bf16.msra.mxu0 0
      %545 = vmatprep.subr.bf16.mxu0 0
      %546 = vmatpush1.bf16.msra.mxu0 0
      %547 = vmatprep.subr.bf16.mxu0 0
      %548 = vmatpush1.bf16.msra.mxu0 0
      %549 = vmatprep.subr.bf16.mxu0 0
      %550 = vmatpush1.bf16.msra.mxu0 0
      %551 = vmatprep.subr.bf16.mxu0 0
      %552 = vmatpush1.bf16.msra.mxu0 0
      %553 = vmatprep.subr.bf16.mxu0 0
      %554 = vmatpush1.bf16.msra.mxu0 0
      %555 = vmatprep.subr.bf16.mxu0 0
      %556 = vmatpush1.bf16.msra.mxu0 0
      %557 = vmatprep.subr.bf16.mxu0 0
      %558 = vmatpush1.bf16.msra.mxu0 0
      %559 = vmatprep.mubr.bf16.mxu0 0
      %560 = vmatmul.mubr.bf16.gmra.mrb[0].mxu0 %v525
      %v561 = vpop.f32.mrb[0].mxu0
      %v562 = vadd.f32 0.0, %v561
      %v563 = vpop.f32.mrb[0].mxu0
      %v564 = vpop.f32.mrb[0].mxu0
      %v565 = vadd.f32 0.0, %v564
      %v566 = vpop.f32.mrb[0].mxu0
      %567 = vdwg.mxu0
      %v568 = vadd.f32 %v507, %v562
      %v569 = vadd.f32 %v508, %v565
      %570 = vst.msk [vmem:[#allocation2] sm:$0xff] %vm504, %v568
      %571 = vst.msk [vmem:[#allocation2 + $0x8] sm:$0xff] %vm504, %v569
      // Predicated region
      $region45: #{tree_forward.19} parent=39 // pred_check
        %p572 = pneg %p433
      $region46: #{tree_forward.19} parent=39 // pred_check_branch
        %574 = sbr.rel (%p572) target = $region48
      $region47: #{tree_forward.19} parent=39 // pred_region
        %v575 = vld [vmem:[#allocation2] sm:$0xff]
        %v576 = vld [vmem:[#allocation2 + $0x8] sm:$0xff]
        %v577 = vld [vmem:[%s417] sm:$0xff]
        %v578 = vld [vmem:[%s417 + $0x8] sm:$0xff]
        %580 = vset.pattern.permute.xlu0 0
        %581 = vperm.xlu0 %580, %v577
        %v582 = vpop.permute.xlu0 %581
        %585 = vset.pattern.permute.xlu0 0
        %586 = vperm.xlu0 %585, %v578
        %v587 = vpop.permute.xlu0 %586
        %v589 = vadd.f32 %v575, %v582
        %v590 = vadd.f32 %v576, %v587
        %v591 = vmax.f32 %v589, 0.0
        %v592 = vmax.f32 %v590, 0.0
        %v593 = vpack.c.bf16 %v592, %v591
        %v595 = vunpack.c.l.b16 %v593
        %v596 = vunpack.c.h.b16 %v593
        %v597 = vpack.c.b16 %v595, %v595
        %v598 = vpack.c.b16 %v596, %v596
        %vm601 = vcmask 519168
        %602 = vst.msk [vmem:[%s430] sm:$0xf] %vm601, %v597
        %603 = vst.msk [vmem:[%s430 + $0x4] sm:$0xf] %vm601, %v598
      $region48: #{tree_forward.19} parent=39 // pred_fallthru
        _
      %s604 = smul.u32 2, %s23
      %p605 = scmp.lt.s32.totalorder %s22, 1
      %s606 = scalar_select %p605, %s22, 1
      %p607 = scmp.lt.s32.totalorder %s604, 1
      %s608 = scalar_select %p607, %s604, 1
      %p609 = scmp.lt.s32.totalorder %s24, 0
      %s610 = scalar_select %p609, %s24, 0
      %s611 = sadd.s32 %s610, %s608
      %s612 = smul.addr %s606, 2
      %s613 = sadd.s32 %s611, %s612
      %s614 = smul.addr %s613, 4
      %s615 = scalar_lea.vmem %s5, %s614
      // Predicated region
      $region49: #{tree_forward.19} parent=39 // pred_check
        %p616 = pneg %p206
      $region50: #{tree_forward.19} parent=39 // pred_check_branch
        %618 = sbr.rel (%p616) target = $region52
      $region51: #{tree_forward.19} parent=39 // pred_region
        %s619 = smul.u32 2, %s23
      $region52: #{tree_forward.19} parent=39 // pred_fallthru
        _
    $region40: #{tree_forward.19} parent=5 // pred_fallthru
      _
    %p620 = scmp.le.s32.totalorder 2, %s11
    // Predicated region
    $region53: #{tree_forward.19} parent=5 // pred_check
      %p621 = pneg %p620
    $region54: #{tree_forward.19} parent=5 // pred_check_branch
      %623 = sbr.rel (%p621) target = $region56
    $region55: #{tree_forward.19} parent=5 // pred_region
      %s624 = ssub.s32 %s11, 2
      // Predicated region
      $region57: #{tree_forward.19} parent=55 // pred_check
        %p625 = pneg %p212
      $region58: #{tree_forward.19} parent=55 // pred_check_branch
        %627 = sbr.rel (%p625) target = $region60
      $region59: #{tree_forward.19} parent=55 // pred_region
        %s628 = smul.u32 2, %s27
        %p629 = scmp.lt.s32.totalorder %s26, 1
        %s630 = scalar_select %p629, %s26, 1
        %p631 = scmp.lt.s32.totalorder %s628, 1
        %s632 = scalar_select %p631, %s628, 1
        %p633 = scmp.lt.s32.totalorder %s28, 0
        %s634 = scalar_select %p633, %s28, 0
        %s635 = sadd.s32 %s634, %s632
        %s636 = smul.addr %s630, 2
        %s637 = sadd.s32 %s635, %s636
        %s638 = smul.addr %s637, 4
        %s639 = scalar_lea.vmem %s5, %s638
      $region60: #{tree_forward.19} parent=55 // pred_fallthru
        _
    $region56: #{tree_forward.19} parent=5 // pred_fallthru
      _
  $region6: #{tree_forward.19} parent=0 // loop_footer
    %s15 = sadd.s32 1, %s11
  $region7: #{tree_forward.19} parent=0 // loop_footer_branch
    %10 = sbr.rel target = $region3
  $region8: #{tree_forward.19} parent=0 // loop_exit
    _

// kernel: tree_forward.24
$region0: #{tree_forward.24}
  #allocation0 [shape = 'u32[]', space=smem, size = 0x4, offset = 0x4, fixed_abs, tag = 'smem constant byte address 0x4 - core index']
  #allocation1 [shape = 'u32[144,128]{1,0:T(1,128)}', space=vmem, size = 0x12000, scoped, tag = 'internal scratch']
  #allocation2 [shape = 'f32[16,64]{1,0:T(8,128)}', space=vmem, size = 0x2000, scoped, tag = 'scratch operand']
  %s0 = inlined_call_operand.vmem [shape: bf16[16,16], index: 0, kind: input, shape index: {}]
  %s1 = inlined_call_operand.vmem [shape: bf16[2,16,64], index: 1, kind: input, shape index: {}]
  %s2 = inlined_call_operand.vmem [shape: bf16[16,16], index: 2, kind: input, shape index: {}]
  %s3 = inlined_call_operand.vmem [shape: bf16[2,16,64], index: 3, kind: input, shape index: {}]
  %s4 = inlined_call_operand.vmem [shape: bf16[16,8], index: 4, kind: input, shape index: {}]
  %s5 = inlined_call_operand.vmem [shape: bf16[2,8,64], index: 5, kind: input, shape index: {}]
  %s6 = inlined_call_operand.vmem [shape: bf16[16,16], index: 6, kind: input, shape index: {}]
  %s7 = inlined_call_operand.vmem [shape: bf16[2,16,64], index: 7, kind: input, shape index: {}]
  %s8 = inlined_call_operand.vmem [shape: f32[16,1], index: 8, kind: input, shape index: {}]
  %s9 = inlined_call_operand.vmem [shape: bf16[2,16,64], index: 9, kind: output, shape index: {}]
  %s10 = sld [smem:[#allocation0]]
  $region77: #{tree_forward.24} parent=0
    _
  %s12 = ssub.s32 1, %s10
  %s13 = scalar_select 0, %s12, %s10
  loop: start=0, step=1, limit=4
  $region2: #{tree_forward.24} parent=0 // loop_pre_header
    _
  $region3: #{tree_forward.24} parent=0 // loop_header
    %s15 = sphi 0, %s19
    %p16 = scmp.ge.s32.totalorder %s15, 4
    %s22 = sphi 0, %s48
    %s23 = sphi 0, %s44
    %s24 = sphi 0, %s40
    %s25 = sphi 0, %s36
    %s26 = sphi 0, %s22
    %s27 = sphi 0, %s23
    %s28 = sphi 0, %s24
    %s29 = sphi 0, %s25
    %s30 = sphi 0, %s26
    %s31 = sphi 0, %s27
    %s32 = sphi 0, %s28
    %s33 = sphi 0, %s29
    %s53 = sphi 0, %s55
    %s56 = sphi 0, %s53
    %s57 = sphi 0, %s56
    %s73 = sphi 0, %s57
    %s83 = sphi 0, %s85
    %s86 = sphi 0, %s83
    %s87 = sphi 0, %s86
    %s103 = sphi 0, %s87
    %s111 = sphi 0, %s113
    %s114 = sphi 0, %s111
    %s115 = sphi 0, %s114
    %s131 = sphi 0, %s115
    %s141 = sphi 0, %s143
    %s144 = sphi 0, %s141
    %s145 = sphi 0, %s144
    %s161 = sphi 0, %s145
    %s169 = sphi 0, %s171
    %s172 = sphi 0, %s169
    %s173 = sphi 0, %s172
    %s189 = sphi 0, %s173
    %s199 = sphi 0, %s201
    %s202 = sphi 0, %s199
    %s203 = sphi 0, %s202
    %s219 = sphi 0, %s203
    %s227 = sphi 0, %s229
    %s230 = sphi 0, %s227
    %s231 = sphi 0, %s230
    %s247 = sphi 0, %s231
    %s257 = sphi 0, %s259
    %s260 = sphi 0, %s257
    %s261 = sphi 0, %s260
    %s277 = sphi 0, %s261
    %s283 = sphi 0, %s285
    %s286 = sphi 0, %s283
    %s287 = sphi 0, %s286
    %s303 = sphi 0, %s287
    %s313 = sphi 0, %s315
    %s316 = sphi 0, %s313
    %s317 = sphi 0, %s316
    %s333 = sphi 0, %s317
  $region4: #{tree_forward.24} parent=0 // loop_header_branch
    %18 = sbr.rel (%p16) target = $region8
  $region5: #{tree_forward.24} parent=0 // loop_body
    %s20 = ssub.s32 %s15, 1
    %s21 = ssub.s32 %s15, 2
    %s34 = sadd.s32 1, %s25
    %p35 = scmp.ge.s32.totalorder %s34, 1
    %s36 = scalar_select %p35, 0, %s34
    %s37 = sadd.s32 1, %s24
    %s38 = scalar_select %p35, %s37, %s24
    %p39 = scmp.ge.s32.totalorder %s38, 1
    %s40 = scalar_select %p39, 0, %s38
    %s41 = sadd.s32 1, %s23
    %s42 = scalar_select %p39, %s41, %s23
    %p43 = scmp.ge.s32.totalorder %s42, 1
    %s44 = scalar_select %p43, 0, %s42
    %s45 = sadd.s32 1, %s22
    %s46 = scalar_select %p43, %s45, %s22
    %p47 = scmp.ge.s32.totalorder %s46, 2
    %s48 = scalar_select %p47, 0, %s46
    %s49 = ssub.s32 %s23, %s44
    %s50 = ssub.s32 %s25, %s36
    %s51 = sor.u32 %s49, %s50
    %p52 = scmp.eq.s32.totalorder %s51, 0
    %s54 = sadd.s32 %s53, 1
    %s55 = scalar_select %p52, %s53, %s54
    %p58 = pneg %p52
    %p59 = scmp.eq.s32.totalorder %s15, 1
    %p60 = por %p58, %p59
    %p61 = scmp.ne.s32.totalorder %s53, %s56
    %p62 = scmp.eq.s32.totalorder %s15, 0
    %p63 = por %p61, %p62
    %p64 = scmp.ne.s32.totalorder %s53, %s56
    %p65 = scmp.eq.s32.totalorder %s20, 1
    %p66 = por %p64, %p65
    %p67 = scmp.ne.s32.totalorder %s56, %s57
    %p68 = scmp.eq.s32.totalorder %s20, 0
    %p69 = por %p67, %p68
    %p70 = scmp.ne.s32.totalorder %s56, %s57
    %p71 = scmp.eq.s32.totalorder %s21, 1
    %p72 = por %p70, %p71
    %p74 = scmp.ne.s32.totalorder %s57, %s73
    %p75 = scmp.eq.s32.totalorder %s21, 0
    %p76 = por %p74, %p75
    %s77 = ssub.s32 %s22, %s48
    %s78 = ssub.s32 %s25, %s36
    %s79 = sor.u32 %s77, %s78
    %s80 = ssub.s32 %s24, %s40
    %s81 = sor.u32 %s79, %s80
    %p82 = scmp.eq.s32.totalorder %s81, 0
    %s84 = sadd.s32 %s83, 1
    %s85 = scalar_select %p82, %s83, %s84
    %p88 = pneg %p82
    %p89 = scmp.eq.s32.totalorder %s15, 1
    %p90 = por %p88, %p89
    %p91 = scmp.ne.s32.totalorder %s83, %s86
    %p92 = scmp.eq.s32.totalorder %s15, 0
    %p93 = por %p91, %p92
    %p94 = scmp.ne.s32.totalorder %s83, %s86
    %p95 = scmp.eq.s32.totalorder %s20, 1
    %p96 = por %p94, %p95
    %p97 = scmp.ne.s32.totalorder %s86, %s87
    %p98 = scmp.eq.s32.totalorder %s20, 0
    %p99 = por %p97, %p98
    %p100 = scmp.ne.s32.totalorder %s86, %s87
    %p101 = scmp.eq.s32.totalorder %s21, 1
    %p102 = por %p100, %p101
    %p104 = scmp.ne.s32.totalorder %s87, %s103
    %p105 = scmp.eq.s32.totalorder %s21, 0
    %p106 = por %p104, %p105
    %s107 = ssub.s32 %s23, %s44
    %s108 = ssub.s32 %s25, %s36
    %s109 = sor.u32 %s107, %s108
    %p110 = scmp.eq.s32.totalorder %s109, 0
    %s112 = sadd.s32 %s111, 1
    %s113 = scalar_select %p110, %s111, %s112
    %p116 = pneg %p110
    %p117 = scmp.eq.s32.totalorder %s15, 1
    %p118 = por %p116, %p117
    %p119 = scmp.ne.s32.totalorder %s111, %s114
    %p120 = scmp.eq.s32.totalorder %s15, 0
    %p121 = por %p119, %p120
    %p122 = scmp.ne.s32.totalorder %s111, %s114
    %p123 = scmp.eq.s32.totalorder %s20, 1
    %p124 = por %p122, %p123
    %p125 = scmp.ne.s32.totalorder %s114, %s115
    %p126 = scmp.eq.s32.totalorder %s20, 0
    %p127 = por %p125, %p126
    %p128 = scmp.ne.s32.totalorder %s114, %s115
    %p129 = scmp.eq.s32.totalorder %s21, 1
    %p130 = por %p128, %p129
    %p132 = scmp.ne.s32.totalorder %s115, %s131
    %p133 = scmp.eq.s32.totalorder %s21, 0
    %p134 = por %p132, %p133
    %s135 = ssub.s32 %s22, %s48
    %s136 = ssub.s32 %s25, %s36
    %s137 = sor.u32 %s135, %s136
    %s138 = ssub.s32 %s24, %s40
    %s139 = sor.u32 %s137, %s138
    %p140 = scmp.eq.s32.totalorder %s139, 0
    %s142 = sadd.s32 %s141, 1
    %s143 = scalar_select %p140, %s141, %s142
    %p146 = pneg %p140
    %p147 = scmp.eq.s32.totalorder %s15, 1
    %p148 = por %p146, %p147
    %p149 = scmp.ne.s32.totalorder %s141, %s144
    %p150 = scmp.eq.s32.totalorder %s15, 0
    %p151 = por %p149, %p150
    %p152 = scmp.ne.s32.totalorder %s141, %s144
    %p153 = scmp.eq.s32.totalorder %s20, 1
    %p154 = por %p152, %p153
    %p155 = scmp.ne.s32.totalorder %s144, %s145
    %p156 = scmp.eq.s32.totalorder %s20, 0
    %p157 = por %p155, %p156
    %p158 = scmp.ne.s32.totalorder %s144, %s145
    %p159 = scmp.eq.s32.totalorder %s21, 1
    %p160 = por %p158, %p159
    %p162 = scmp.ne.s32.totalorder %s145, %s161
    %p163 = scmp.eq.s32.totalorder %s21, 0
    %p164 = por %p162, %p163
    %s165 = ssub.s32 %s23, %s44
    %s166 = ssub.s32 %s25, %s36
    %s167 = sor.u32 %s165, %s166
    %p168 = scmp.eq.s32.totalorder %s167, 0
    %s170 = sadd.s32 %s169, 1
    %s171 = scalar_select %p168, %s169, %s170
    %p174 = pneg %p168
    %p175 = scmp.eq.s32.totalorder %s15, 1
    %p176 = por %p174, %p175
    %p177 = scmp.ne.s32.totalorder %s169, %s172
    %p178 = scmp.eq.s32.totalorder %s15, 0
    %p179 = por %p177, %p178
    %p180 = scmp.ne.s32.totalorder %s169, %s172
    %p181 = scmp.eq.s32.totalorder %s20, 1
    %p182 = por %p180, %p181
    %p183 = scmp.ne.s32.totalorder %s172, %s173
    %p184 = scmp.eq.s32.totalorder %s20, 0
    %p185 = por %p183, %p184
    %p186 = scmp.ne.s32.totalorder %s172, %s173
    %p187 = scmp.eq.s32.totalorder %s21, 1
    %p188 = por %p186, %p187
    %p190 = scmp.ne.s32.totalorder %s173, %s189
    %p191 = scmp.eq.s32.totalorder %s21, 0
    %p192 = por %p190, %p191
    %s193 = ssub.s32 %s22, %s48
    %s194 = ssub.s32 %s25, %s36
    %s195 = sor.u32 %s193, %s194
    %s196 = ssub.s32 %s24, %s40
    %s197 = sor.u32 %s195, %s196
    %p198 = scmp.eq.s32.totalorder %s197, 0
    %s200 = sadd.s32 %s199, 1
    %s201 = scalar_select %p198, %s199, %s200
    %p204 = pneg %p198
    %p205 = scmp.eq.s32.totalorder %s15, 1
    %p206 = por %p204, %p205
    %p207 = scmp.ne.s32.totalorder %s199, %s202
    %p208 = scmp.eq.s32.totalorder %s15, 0
    %p209 = por %p207, %p208
    %p210 = scmp.ne.s32.totalorder %s199, %s202
    %p211 = scmp.eq.s32.totalorder %s20, 1
    %p212 = por %p210, %p211
    %p213 = scmp.ne.s32.totalorder %s202, %s203
    %p214 = scmp.eq.s32.totalorder %s20, 0
    %p215 = por %p213, %p214
    %p216 = scmp.ne.s32.totalorder %s202, %s203
    %p217 = scmp.eq.s32.totalorder %s21, 1
    %p218 = por %p216, %p217
    %p220 = scmp.ne.s32.totalorder %s203, %s219
    %p221 = scmp.eq.s32.totalorder %s21, 0
    %p222 = por %p220, %p221
    %s223 = ssub.s32 %s23, %s44
    %s224 = ssub.s32 %s25, %s36
    %s225 = sor.u32 %s223, %s224
    %p226 = scmp.eq.s32.totalorder %s225, 0
    %s228 = sadd.s32 %s227, 1
    %s229 = scalar_select %p226, %s227, %s228
    %p232 = pneg %p226
    %p233 = scmp.eq.s32.totalorder %s15, 1
    %p234 = por %p232, %p233
    %p235 = scmp.ne.s32.totalorder %s227, %s230
    %p236 = scmp.eq.s32.totalorder %s15, 0
    %p237 = por %p235, %p236
    %p238 = scmp.ne.s32.totalorder %s227, %s230
    %p239 = scmp.eq.s32.totalorder %s20, 1
    %p240 = por %p238, %p239
    %p241 = scmp.ne.s32.totalorder %s230, %s231
    %p242 = scmp.eq.s32.totalorder %s20, 0
    %p243 = por %p241, %p242
    %p244 = scmp.ne.s32.totalorder %s230, %s231
    %p245 = scmp.eq.s32.totalorder %s21, 1
    %p246 = por %p244, %p245
    %p248 = scmp.ne.s32.totalorder %s231, %s247
    %p249 = scmp.eq.s32.totalorder %s21, 0
    %p250 = por %p248, %p249
    %s251 = ssub.s32 %s22, %s48
    %s252 = ssub.s32 %s25, %s36
    %s253 = sor.u32 %s251, %s252
    %s254 = ssub.s32 %s24, %s40
    %s255 = sor.u32 %s253, %s254
    %p256 = scmp.eq.s32.totalorder %s255, 0
    %s258 = sadd.s32 %s257, 1
    %s259 = scalar_select %p256, %s257, %s258
    %p262 = pneg %p256
    %p263 = scmp.eq.s32.totalorder %s15, 1
    %p264 = por %p262, %p263
    %p265 = scmp.ne.s32.totalorder %s257, %s260
    %p266 = scmp.eq.s32.totalorder %s15, 0
    %p267 = por %p265, %p266
    %p268 = scmp.ne.s32.totalorder %s257, %s260
    %p269 = scmp.eq.s32.totalorder %s20, 1
    %p270 = por %p268, %p269
    %p271 = scmp.ne.s32.totalorder %s260, %s261
    %p272 = scmp.eq.s32.totalorder %s20, 0
    %p273 = por %p271, %p272
    %p274 = scmp.ne.s32.totalorder %s260, %s261
    %p275 = scmp.eq.s32.totalorder %s21, 1
    %p276 = por %p274, %p275
    %p278 = scmp.ne.s32.totalorder %s261, %s277
    %p279 = scmp.eq.s32.totalorder %s21, 0
    %p280 = por %p278, %p279
    %s281 = ssub.s32 %s23, %s44
    %p282 = scmp.eq.s32.totalorder %s281, 0
    %s284 = sadd.s32 %s283, 1
    %s285 = scalar_select %p282, %s283, %s284
    %p288 = pneg %p282
    %p289 = scmp.eq.s32.totalorder %s15, 1
    %p290 = por %p288, %p289
    %p291 = scmp.ne.s32.totalorder %s283, %s286
    %p292 = scmp.eq.s32.totalorder %s15, 0
    %p293 = por %p291, %p292
    %p294 = scmp.ne.s32.totalorder %s283, %s286
    %p295 = scmp.eq.s32.totalorder %s20, 1
    %p296 = por %p294, %p295
    %p297 = scmp.ne.s32.totalorder %s286, %s287
    %p298 = scmp.eq.s32.totalorder %s20, 0
    %p299 = por %p297, %p298
    %p300 = scmp.ne.s32.totalorder %s286, %s287
    %p301 = scmp.eq.s32.totalorder %s21, 1
    %p302 = por %p300, %p301
    %p304 = scmp.ne.s32.totalorder %s287, %s303
    %p305 = scmp.eq.s32.totalorder %s21, 0
    %p306 = por %p304, %p305
    %s307 = ssub.s32 %s22, %s48
    %s308 = ssub.s32 %s23, %s44
    %s309 = sor.u32 %s307, %s308
    %s310 = ssub.s32 %s24, %s40
    %s311 = sor.u32 %s309, %s310
    %p312 = scmp.eq.s32.totalorder %s311, 0
    %s314 = sadd.s32 %s313, 1
    %s315 = scalar_select %p312, %s313, %s314
    %p318 = pneg %p312
    %p319 = scmp.eq.s32.totalorder %s15, 1
    %p320 = por %p318, %p319
    %p321 = scmp.ne.s32.totalorder %s313, %s316
    %p322 = scmp.eq.s32.totalorder %s15, 0
    %p323 = por %p321, %p322
    %p324 = scmp.ne.s32.totalorder %s313, %s316
    %p325 = scmp.eq.s32.totalorder %s20, 1
    %p326 = por %p324, %p325
    %p327 = scmp.ne.s32.totalorder %s316, %s317
    %p328 = scmp.eq.s32.totalorder %s20, 0
    %p329 = por %p327, %p328
    %p330 = scmp.ne.s32.totalorder %s316, %s317
    %p331 = scmp.eq.s32.totalorder %s21, 1
    %p332 = por %p330, %p331
    %p334 = scmp.ne.s32.totalorder %s317, %s333
    %p335 = scmp.eq.s32.totalorder %s21, 0
    %p336 = por %p334, %p335
    %p337 = scmp.le.s32.totalorder 1, %s15
    %p338 = scmp.lt.s32.totalorder %s15, 3
    %p339 = pnand %p337, %p338
    %p340 = pneg %p339
    // Predicated region
    $region9: #{tree_forward.24} parent=5 // pred_check
      _
    $region10: #{tree_forward.24} parent=5 // pred_check_branch
      %342 = sbr.rel (%p339) target = $region12
    $region11: #{tree_forward.24} parent=5 // pred_region
      %s343 = ssub.s32 %s15, 1
      // Predicated region
      $region13: #{tree_forward.24} parent=11 // pred_check
        %p344 = pneg %p69
      $region14: #{tree_forward.24} parent=11 // pred_check_branch
        %346 = sbr.rel (%p344) target = $region16
      $region15: #{tree_forward.24} parent=11 // pred_region
        %s347 = smul.u32 2, %s27
        %p348 = scmp.lt.s32.totalorder %s347, 1
        %s349 = scalar_select %p348, %s347, 1
        %p350 = scmp.lt.s32.totalorder %s29, 0
        %s351 = scalar_select %p350, %s29, 0
        %s352 = sadd.s32 %s351, %s349
        %s353 = smul.addr %s352, 4
        %s354 = scalar_lea.vmem %s0, %s353
        %s355 = smul.u32 2, %s27
      $region16: #{tree_forward.24} parent=11 // pred_fallthru
        _
      // Predicated region
      $region17: #{tree_forward.24} parent=11 // pred_check
        %p356 = pneg %p127
      $region18: #{tree_forward.24} parent=11 // pred_check_branch
        %358 = sbr.rel (%p356) target = $region20
      $region19: #{tree_forward.24} parent=11 // pred_region
        %s359 = smul.u32 2, %s27
        %p360 = scmp.lt.s32.totalorder %s359, 1
        %s361 = scalar_select %p360, %s359, 1
        %p362 = scmp.lt.s32.totalorder %s29, 0
        %s363 = scalar_select %p362, %s29, 0
        %s364 = sadd.s32 %s363, %s361
        %s365 = smul.addr %s364, 4
        %s366 = scalar_lea.vmem %s2, %s365
        %s367 = smul.u32 2, %s27
      $region20: #{tree_forward.24} parent=11 // pred_fallthru
        _
      // Predicated region
      $region21: #{tree_forward.24} parent=11 // pred_check
        %p368 = pneg %p185
      $region22: #{tree_forward.24} parent=11 // pred_check_branch
        %370 = sbr.rel (%p368) target = $region24
      $region23: #{tree_forward.24} parent=11 // pred_region
        %s371 = smul.u32 2, %s27
        %p372 = scmp.lt.s32.totalorder %s371, 1
        %s373 = scalar_select %p372, %s371, 1
        %p374 = scmp.lt.s32.totalorder %s29, 0
        %s375 = scalar_select %p374, %s29, 0
        %s376 = sadd.s32 %s375, %s373
        %s377 = smul.addr %s376, 4
        %s378 = scalar_lea.vmem %s4, %s377
        %s379 = smul.u32 2, %s27
      $region24: #{tree_forward.24} parent=11 // pred_fallthru
        _
      // Predicated region
      $region25: #{tree_forward.24} parent=11 // pred_check
        %p380 = pneg %p243
      $region26: #{tree_forward.24} parent=11 // pred_check_branch
        %382 = sbr.rel (%p380) target = $region28
      $region27: #{tree_forward.24} parent=11 // pred_region
        %s383 = smul.u32 2, %s27
        %p384 = scmp.lt.s32.totalorder %s383, 1
        %s385 = scalar_select %p384, %s383, 1
        %p386 = scmp.lt.s32.totalorder %s29, 0
        %s387 = scalar_select %p386, %s29, 0
        %s388 = sadd.s32 %s387, %s385
        %s389 = smul.addr %s388, 4
        %s390 = scalar_lea.vmem %s6, %s389
        %s391 = smul.u32 2, %s27
      $region28: #{tree_forward.24} parent=11 // pred_fallthru
        _
      // Predicated region
      $region29: #{tree_forward.24} parent=11 // pred_check
        %p392 = pneg %p299
      $region30: #{tree_forward.24} parent=11 // pred_check_branch
        %394 = sbr.rel (%p392) target = $region32
      $region31: #{tree_forward.24} parent=11 // pred_region
        %s395 = smul.u32 2, %s27
        %p396 = scmp.lt.s32.totalorder %s395, 1
        %s397 = scalar_select %p396, %s395, 1
        %s398 = smul.addr %s397, 8
        %s399 = scalar_lea.vmem %s8, %s398
        %s400 = smul.u32 2, %s27
      $region32: #{tree_forward.24} parent=11 // pred_fallthru
        _
    $region12: #{tree_forward.24} parent=5 // pred_fallthru
      _
    %p401 = scmp.lt.s32.totalorder %s15, 2
    // Predicated region
    $region33: #{tree_forward.24} parent=5 // pred_check
      %p402 = pneg %p401
    $region34: #{tree_forward.24} parent=5 // pred_check_branch
      %404 = sbr.rel (%p402) target = $region36
    $region35: #{tree_forward.24} parent=5 // pred_region
      // Predicated region
      $region37: #{tree_forward.24} parent=35 // pred_check
        %p405 = pneg %p93
      $region38: #{tree_forward.24} parent=35 // pred_check_branch
        %407 = sbr.rel (%p405) target = $region40
      $region39: #{tree_forward.24} parent=35 // pred_region
        %s408 = smul.u32 2, %s25
        %p409 = scmp.lt.s32.totalorder %s22, 1
        %s410 = scalar_select %p409, %s22, 1
        %p411 = scmp.lt.s32.totalorder %s408, 1
        %s412 = scalar_select %p411, %s408, 1
        %p413 = scmp.lt.s32.totalorder %s24, 0
        %s414 = scalar_select %p413, %s24, 0
        %s415 = sadd.s32 %s414, %s412
        %s416 = smul.addr %s410, 2
        %s417 = sadd.s32 %s415, %s416
        %s418 = smul.addr %s417, 4
        %s419 = scalar_lea.vmem %s1, %s418
        %s420 = smul.u32 2, %s25
      $region40: #{tree_forward.24} parent=35 // pred_fallthru
        _
      // Predicated region
      $region41: #{tree_forward.24} parent=35 // pred_check
        %p421 = pneg %p151
      $region42: #{tree_forward.24} parent=35 // pred_check_branch
        %423 = sbr.rel (%p421) target = $region44
      $region43: #{tree_forward.24} parent=35 // pred_region
        %s424 = smul.u32 2, %s25
        %p425 = scmp.lt.s32.totalorder %s22, 1
        %s426 = scalar_select %p425, %s22, 1
        %p427 = scmp.lt.s32.totalorder %s424, 1
        %s428 = scalar_select %p427, %s424, 1
        %p429 = scmp.lt.s32.totalorder %s24, 0
        %s430 = scalar_select %p429, %s24, 0
        %s431 = sadd.s32 %s430, %s428
        %s432 = smul.addr %s426, 2
        %s433 = sadd.s32 %s431, %s432
        %s434 = smul.addr %s433, 4
        %s435 = scalar_lea.vmem %s3, %s434
        %s436 = smul.u32 2, %s25
      $region44: #{tree_forward.24} parent=35 // pred_fallthru
        _
      // Predicated region
      $region45: #{tree_forward.24} parent=35 // pred_check
        %p437 = pneg %p209
      $region46: #{tree_forward.24} parent=35 // pred_check_branch
        %439 = sbr.rel (%p437) target = $region48
      $region47: #{tree_forward.24} parent=35 // pred_region
        %p440 = scmp.lt.s32.totalorder %s22, 1
        %s441 = scalar_select %p440, %s22, 1
        %p442 = scmp.lt.s32.totalorder %s25, 0
        %s443 = scalar_select %p442, %s25, 0
        %p444 = scmp.lt.s32.totalorder %s24, 0
        %s445 = scalar_select %p444, %s24, 0
        %s446 = sadd.s32 %s445, %s443
        %s447 = sadd.s32 %s446, %s441
        %s448 = smul.addr %s447, 4
        %s449 = scalar_lea.vmem %s5, %s448
      $region48: #{tree_forward.24} parent=35 // pred_fallthru
        _
      // Predicated region
      $region49: #{tree_forward.24} parent=35 // pred_check
        %p450 = pneg %p267
      $region50: #{tree_forward.24} parent=35 // pred_check_branch
        %452 = sbr.rel (%p450) target = $region52
      $region51: #{tree_forward.24} parent=35 // pred_region
        %s453 = smul.u32 2, %s25
        %p454 = scmp.lt.s32.totalorder %s22, 1
        %s455 = scalar_select %p454, %s22, 1
        %p456 = scmp.lt.s32.totalorder %s453, 1
        %s457 = scalar_select %p456, %s453, 1
        %p458 = scmp.lt.s32.totalorder %s24, 0
        %s459 = scalar_select %p458, %s24, 0
        %s460 = sadd.s32 %s459, %s457
        %s461 = smul.addr %s455, 2
        %s462 = sadd.s32 %s460, %s461
        %s463 = smul.addr %s462, 4
        %s464 = scalar_lea.vmem %s7, %s463
        %s465 = smul.u32 2, %s25
      $region52: #{tree_forward.24} parent=35 // pred_fallthru
        _
    $region36: #{tree_forward.24} parent=5 // pred_fallthru
      _
    %p466 = scmp.le.s32.totalorder 1, %s15
    %p467 = scmp.lt.s32.totalorder %s15, 3
    %p468 = pnand %p466, %p467
    %p469 = pneg %p468
    // Predicated region
    $region53: #{tree_forward.24} parent=5 // pred_check
      _
    $region54: #{tree_forward.24} parent=5 // pred_check_branch
      %471 = sbr.rel (%p468) target = $region56
    $region55: #{tree_forward.24} parent=5 // pred_region
      %s472 = ssub.s32 %s15, 1
      %s473 = smul.u32 2, %s27
      %p474 = scmp.lt.s32.totalorder %s473, 1
      %s475 = scalar_select %p474, %s473, 1
      %p476 = scmp.lt.s32.totalorder %s29, 0
      %s477 = scalar_select %p476, %s29, 0
      %s478 = sadd.s32 %s477, %s475
      %s479 = smul.addr %s478, 4
      %s480 = scalar_lea.vmem %s0, %s479
      %p481 = pneg %p69
      %p482 = pneg %p66
      %s483 = smul.u32 2, %s29
      %p484 = scmp.lt.s32.totalorder %s26, 1
      %s485 = scalar_select %p484, %s26, 1
      %p486 = scmp.lt.s32.totalorder %s483, 1
      %s487 = scalar_select %p486, %s483, 1
      %p488 = scmp.lt.s32.totalorder %s28, 0
      %s489 = scalar_select %p488, %s28, 0
      %s490 = sadd.s32 %s489, %s487
      %s491 = smul.addr %s485, 2
      %s492 = sadd.s32 %s490, %s491
      %s493 = smul.addr %s492, 4
      %s494 = scalar_lea.vmem %s1, %s493
      %p495 = pneg %p99
      %p496 = pneg %p96
      %s497 = smul.u32 2, %s27
      %p498 = scmp.lt.s32.totalorder %s497, 1
      %s499 = scalar_select %p498, %s497, 1
      %p500 = scmp.lt.s32.totalorder %s29, 0
      %s501 = scalar_select %p500, %s29, 0
      %s502 = sadd.s32 %s501, %s499
      %s503 = smul.addr %s502, 4
      %s504 = scalar_lea.vmem %s2, %s503
      %p505 = pneg %p127
      %p506 = pneg %p124
      %s507 = smul.u32 2, %s29
      %p508 = scmp.lt.s32.totalorder %s26, 1
      %s509 = scalar_select %p508, %s26, 1
      %p510 = scmp.lt.s32.totalorder %s507, 1
      %s511 = scalar_select %p510, %s507, 1
      %p512 = scmp.lt.s32.totalorder %s28, 0
      %s513 = scalar_select %p512, %s28, 0
      %s514 = sadd.s32 %s513, %s511
      %s515 = smul.addr %s509, 2
      %s516 = sadd.s32 %s514, %s515
      %s517 = smul.addr %s516, 4
      %s518 = scalar_lea.vmem %s3, %s517
      %p519 = pneg %p157
      %p520 = pneg %p154
      %s521 = smul.u32 2, %s27
      %p522 = scmp.lt.s32.totalorder %s521, 1
      %s523 = scalar_select %p522, %s521, 1
      %p524 = scmp.lt.s32.totalorder %s29, 0
      %s525 = scalar_select %p524, %s29, 0
      %s526 = sadd.s32 %s525, %s523
      %s527 = smul.addr %s526, 4
      %s528 = scalar_lea.vmem %s4, %s527
      %p529 = pneg %p185
      %p530 = pneg %p182
      %p531 = scmp.lt.s32.totalorder %s26, 1
      %s532 = scalar_select %p531, %s26, 1
      %p533 = scmp.lt.s32.totalorder %s29, 0
      %s534 = scalar_select %p533, %s29, 0
      %p535 = scmp.lt.s32.totalorder %s28, 0
      %s536 = scalar_select %p535, %s28, 0
      %s537 = sadd.s32 %s536, %s534
      %s538 = sadd.s32 %s537, %s532
      %s539 = smul.addr %s538, 4
      %s540 = scalar_lea.vmem %s5, %s539
      %p541 = pneg %p215
      %p542 = pneg %p212
      %s543 = smul.u32 2, %s27
      %p544 = scmp.lt.s32.totalorder %s543, 1
      %s545 = scalar_select %p544, %s543, 1
      %p546 = scmp.lt.s32.totalorder %s29, 0
      %s547 = scalar_select %p546, %s29, 0
      %s548 = sadd.s32 %s547, %s545
      %s549 = smul.addr %s548, 4
      %s550 = scalar_lea.vmem %s6, %s549
      %p551 = pneg %p243
      %p552 = pneg %p240
      %s553 = smul.u32 2, %s29
      %p554 = scmp.lt.s32.totalorder %s26, 1
      %s555 = scalar_select %p554, %s26, 1
      %p556 = scmp.lt.s32.totalorder %s553, 1
      %s557 = scalar_select %p556, %s553, 1
      %p558 = scmp.lt.s32.totalorder %s28, 0
      %s559 = scalar_select %p558, %s28, 0
      %s560 = sadd.s32 %s559, %s557
      %s561 = smul.addr %s555, 2
      %s562 = sadd.s32 %s560, %s561
      %s563 = smul.addr %s562, 4
      %s564 = scalar_lea.vmem %s7, %s563
      %p565 = pneg %p273
      %p566 = pneg %p270
      %s567 = smul.u32 2, %s27
      %p568 = scmp.lt.s32.totalorder %s567, 1
      %s569 = scalar_select %p568, %s567, 1
      %s570 = smul.addr %s569, 8
      %s571 = scalar_lea.vmem %s8, %s570
      %p572 = pneg %p299
      %p573 = pneg %p296
      %p574 = pneg %p329
      %p575 = pneg %p326
      %s576 = smul.u32 2, %s27
      %p577 = scmp.lt.s32.totalorder %s26, 1
      %s578 = scalar_select %p577, %s26, 1
      %p579 = scmp.lt.s32.totalorder %s576, 1
      %s580 = scalar_select %p579, %s576, 1
      %p581 = scmp.lt.s32.totalorder %s28, 0
      %s582 = scalar_select %p581, %s28, 0
      %s583 = sadd.s32 %s582, %s580
      %s584 = smul.addr %s578, 2
      %s585 = sadd.s32 %s583, %s584
      %s586 = smul.addr %s585, 4
      %s587 = scalar_lea.vmem %s9, %s586
      %s588 = smul.u32 2, %s27
      %p589 = scmp.lt.s32.totalorder %s588, 1
      %s590 = scalar_select %p589, %s588, 1
      %p591 = scmp.lt.s32.totalorder %s29, 0
      %s592 = scalar_select %p591, %s29, 0
      %s593 = sadd.s32 %s592, %s590
      %s594 = smul.addr %s593, 4
      %s595 = scalar_lea.vmem %s0, %s594
      %s596 = smul.u32 2, %s27
      %s597 = smul.u32 2, %s29
      %p598 = scmp.lt.s32.totalorder %s26, 1
      %s599 = scalar_select %p598, %s26, 1
      %p600 = scmp.lt.s32.totalorder %s597, 1
      %s601 = scalar_select %p600, %s597, 1
      %p602 = scmp.lt.s32.totalorder %s28, 0
      %s603 = scalar_select %p602, %s28, 0
      %s604 = sadd.s32 %s603, %s601
      %s605 = smul.addr %s599, 2
      %s606 = sadd.s32 %s604, %s605
      %s607 = smul.addr %s606, 4
      %s608 = scalar_lea.vmem %s1, %s607
      %s609 = smul.u32 2, %s29
      %s610 = smul.u32 2, %s27
      %p611 = scmp.lt.s32.totalorder %s610, 1
      %s612 = scalar_select %p611, %s610, 1
      %p613 = scmp.lt.s32.totalorder %s29, 0
      %s614 = scalar_select %p613, %s29, 0
      %s615 = sadd.s32 %s614, %s612
      %s616 = smul.addr %s615, 4
      %s617 = scalar_lea.vmem %s2, %s616
      %s618 = smul.u32 2, %s27
      %s619 = smul.u32 2, %s29
      %p620 = scmp.lt.s32.totalorder %s26, 1
      %s621 = scalar_select %p620, %s26, 1
      %p622 = scmp.lt.s32.totalorder %s619, 1
      %s623 = scalar_select %p622, %s619, 1
      %p624 = scmp.lt.s32.totalorder %s28, 0
      %s625 = scalar_select %p624, %s28, 0
      %s626 = sadd.s32 %s625, %s623
      %s627 = smul.addr %s621, 2
      %s628 = sadd.s32 %s626, %s627
      %s629 = smul.addr %s628, 4
      %s630 = scalar_lea.vmem %s3, %s629
      %s631 = smul.u32 2, %s29
      %s632 = smul.u32 2, %s27
      %p633 = scmp.lt.s32.totalorder %s632, 1
      %s634 = scalar_select %p633, %s632, 1
      %p635 = scmp.lt.s32.totalorder %s29, 0
      %s636 = scalar_select %p635, %s29, 0
      %s637 = sadd.s32 %s636, %s634
      %s638 = smul.addr %s637, 4
      %s639 = scalar_lea.vmem %s4, %s638
      %s640 = smul.u32 2, %s27
      %p641 = scmp.lt.s32.totalorder %s26, 1
      %s642 = scalar_select %p641, %s26, 1
      %p643 = scmp.lt.s32.totalorder %s29, 0
      %s644 = scalar_select %p643, %s29, 0
      %p645 = scmp.lt.s32.totalorder %s28, 0
      %s646 = scalar_select %p645, %s28, 0
      %s647 = sadd.s32 %s646, %s644
      %s648 = sadd.s32 %s647, %s642
      %s649 = smul.addr %s648, 4
      %s650 = scalar_lea.vmem %s5, %s649
      %s651 = smul.u32 2, %s27
      %p652 = scmp.lt.s32.totalorder %s651, 1
      %s653 = scalar_select %p652, %s651, 1
      %p654 = scmp.lt.s32.totalorder %s29, 0
      %s655 = scalar_select %p654, %s29, 0
      %s656 = sadd.s32 %s655, %s653
      %s657 = smul.addr %s656, 4
      %s658 = scalar_lea.vmem %s6, %s657
      %s659 = smul.u32 2, %s27
      %s660 = smul.u32 2, %s29
      %p661 = scmp.lt.s32.totalorder %s26, 1
      %s662 = scalar_select %p661, %s26, 1
      %p663 = scmp.lt.s32.totalorder %s660, 1
      %s664 = scalar_select %p663, %s660, 1
      %p665 = scmp.lt.s32.totalorder %s28, 0
      %s666 = scalar_select %p665, %s28, 0
      %s667 = sadd.s32 %s666, %s664
      %s668 = smul.addr %s662, 2
      %s669 = sadd.s32 %s667, %s668
      %s670 = smul.addr %s669, 4
      %s671 = scalar_lea.vmem %s7, %s670
      %s672 = smul.u32 2, %s29
      %s673 = smul.u32 2, %s27
      %p674 = scmp.lt.s32.totalorder %s673, 1
      %s675 = scalar_select %p674, %s673, 1
      %s676 = smul.addr %s675, 8
      %s677 = scalar_lea.vmem %s8, %s676
      %s678 = smul.u32 2, %s27
      %s679 = smul.u32 2, %s27
      %p680 = scmp.lt.s32.totalorder %s26, 1
      %s681 = scalar_select %p680, %s26, 1
      %p682 = scmp.lt.s32.totalorder %s679, 1
      %s683 = scalar_select %p682, %s679, 1
      %p684 = scmp.lt.s32.totalorder %s28, 0
      %s685 = scalar_select %p684, %s28, 0
      %s686 = sadd.s32 %s685, %s683
      %s687 = smul.addr %s681, 2
      %s688 = sadd.s32 %s686, %s687
      %s689 = smul.addr %s688, 4
      %s690 = scalar_lea.vmem %s9, %s689
      %s691 = smul.u32 2, %s27
      %p693 = scmp.eq.s32.totalorder %s29, 0
      // Predicated region
      $region57: #{tree_forward.24} parent=55 // pred_check
        %p694 = pneg %p693
      $region58: #{tree_forward.24} parent=55 // pred_check_branch
        %696 = sbr.rel (%p694) target = $region60
      $region59: #{tree_forward.24} parent=55 // pred_region
        %vm697 = vcmask 523264
        %698 = vst.msk [vmem:[#allocation2] sm:$0xff] %vm697, 0.0
        %699 = vst.msk [vmem:[#allocation2 + $0x8] sm:$0xff] %vm697, 0.0
      $region60: #{tree_forward.24} parent=55 // pred_fallthru
        _
      %v700 = vld [vmem:[#allocation2] sm:$0xff]
      %v701 = vld [vmem:[#allocation2 + $0x8] sm:$0xff]
      %v702 = vld [vmem:[%s595] sm:$0xf]
      %v703 = vld [vmem:[%s595 + $0x4] sm:$0xf]
      %v704 = vld [vmem:[%s608] sm:$0xf]
      %v705 = vld [vmem:[%s608 + $0x4] sm:$0xf]
      %v708 = vunpack.c.l.b16 %v702
      %v709 = vunpack.c.l.b16 %v703
      %v710 = vpack.c.b16 %v709, %v708
      %v713 = vunpack.c.l.b16 %v704
      %v714 = vunpack.c.l.b16 %v705
      %v715 = vpack.c.b16 %v714, %v713
      %vm717 = vcmask 130048
      %v719 = vsel %vm717, %v710, 0
      %721 = vmatprep.subr.bf16.mxu0 0
      %722 = vmatpush1.bf16.msra.mxu0 %v715
      %723 = vmatprep.subr.bf16.mxu0 0
      %724 = vmatpush1.bf16.msra.mxu0 0
      %725 = vmatprep.subr.bf16.mxu0 0
      %726 = vmatpush1.bf16.msra.mxu0 0
      %727 = vmatprep.subr.bf16.mxu0 0
      %728 = vmatpush1.bf16.msra.mxu0 0
      %729 = vmatprep.subr.bf16.mxu0 0
      %730 = vmatpush1.bf16.msra.mxu0 0
      %731 = vmatprep.subr.bf16.mxu0 0
      %732 = vmatpush1.bf16.msra.mxu0 0
      %733 = vmatprep.subr.bf16.mxu0 0
      %734 = vmatpush1.bf16.msra.mxu0 0
      %735 = vmatprep.subr.bf16.mxu0 0
      %736 = vmatpush1.bf16.msra.mxu0 0
      %737 = vmatprep.subr.bf16.mxu0 0
      %738 = vmatpush1.bf16.msra.mxu0 0
      %739 = vmatprep.subr.bf16.mxu0 0
      %740 = vmatpush1.bf16.msra.mxu0 0
      %741 = vmatprep.subr.bf16.mxu0 0
      %742 = vmatpush1.bf16.msra.mxu0 0
      %743 = vmatprep.subr.bf16.mxu0 0
      %744 = vmatpush1.bf16.msra.mxu0 0
      %745 = vmatprep.subr.bf16.mxu0 0
      %746 = vmatpush1.bf16.msra.mxu0 0
      %747 = vmatprep.subr.bf16.mxu0 0
      %748 = vmatpush1.bf16.msra.mxu0 0
      %749 = vmatprep.subr.bf16.mxu0 0
      %750 = vmatpush1.bf16.msra.mxu0 0
      %751 = vmatprep.subr.bf16.mxu0 0
      %752 = vmatpush1.bf16.msra.mxu0 0
      %753 = vmatprep.mubr.bf16.mxu0 0
      %754 = vmatmul.mubr.bf16.gmra.mrb[0].mxu0 %v719
      %v755 = vpop.f32.mrb[0].mxu0
      %v756 = vadd.f32 0.0, %v755
      %v757 = vpop.f32.mrb[0].mxu0
      %v758 = vpop.f32.mrb[0].mxu0
      %v759 = vadd.f32 0.0, %v758
      %v760 = vpop.f32.mrb[0].mxu0
      %761 = vdwg.mxu0
      %v762 = vadd.f32 %v700, %v756
      %v763 = vadd.f32 %v701, %v759
      %vm764 = vcmask 523264
      %765 = vst.msk [vmem:[#allocation2] sm:$0xff] %vm764, %v762
      %766 = vst.msk [vmem:[#allocation2 + $0x8] sm:$0xff] %vm764, %v763
      %v767 = vld [vmem:[#allocation2] sm:$0xff]
      %v768 = vld [vmem:[#allocation2 + $0x8] sm:$0xff]
      %v769 = vld [vmem:[%s617] sm:$0xf]
      %v770 = vld [vmem:[%s617 + $0x4] sm:$0xf]
      %v771 = vld [vmem:[%s630] sm:$0xf]
      %v772 = vld [vmem:[%s630 + $0x4] sm:$0xf]
      %v775 = vunpack.c.l.b16 %v769
      %v776 = vunpack.c.l.b16 %v770
      %v777 = vpack.c.b16 %v776, %v775
      %v780 = vunpack.c.l.b16 %v771
      %v781 = vunpack.c.l.b16 %v772
      %v782 = vpack.c.b16 %v781, %v780
      %v785 = vsel %vm717, %v777, 0
      %787 = vmatprep.subr.bf16.mxu0 0
      %788 = vmatpush1.bf16.msra.mxu0 %v782
      %789 = vmatprep.subr.bf16.mxu0 0
      %790 = vmatpush1.bf16.msra.mxu0 0
      %791 = vmatprep.subr.bf16.mxu0 0
      %792 = vmatpush1.bf16.msra.mxu0 0
      %793 = vmatprep.subr.bf16.mxu0 0
      %794 = vmatpush1.bf16.msra.mxu0 0
      %795 = vmatprep.subr.bf16.mxu0 0
      %796 = vmatpush1.bf16.msra.mxu0 0
      %797 = vmatprep.subr.bf16.mxu0 0
      %798 = vmatpush1.bf16.msra.mxu0 0
      %799 = vmatprep.subr.bf16.mxu0 0
      %800 = vmatpush1.bf16.msra.mxu0 0
      %801 = vmatprep.subr.bf16.mxu0 0
      %802 = vmatpush1.bf16.msra.mxu0 0
      %803 = vmatprep.subr.bf16.mxu0 0
      %804 = vmatpush1.bf16.msra.mxu0 0
      %805 = vmatprep.subr.bf16.mxu0 0
      %806 = vmatpush1.bf16.msra.mxu0 0
      %807 = vmatprep.subr.bf16.mxu0 0
      %808 = vmatpush1.bf16.msra.mxu0 0
      %809 = vmatprep.subr.bf16.mxu0 0
      %810 = vmatpush1.bf16.msra.mxu0 0
      %811 = vmatprep.subr.bf16.mxu0 0
      %812 = vmatpush1.bf16.msra.mxu0 0
      %813 = vmatprep.subr.bf16.mxu0 0
      %814 = vmatpush1.bf16.msra.mxu0 0
      %815 = vmatprep.subr.bf16.mxu0 0
      %816 = vmatpush1.bf16.msra.mxu0 0
      %817 = vmatprep.subr.bf16.mxu0 0
      %818 = vmatpush1.bf16.msra.mxu0 0
      %819 = vmatprep.mubr.bf16.mxu0 0
      %820 = vmatmul.mubr.bf16.gmra.mrb[0].mxu0 %v785
      %v821 = vpop.f32.mrb[0].mxu0
      %v822 = vadd.f32 0.0, %v821
      %v823 = vpop.f32.mrb[0].mxu0
      %v824 = vpop.f32.mrb[0].mxu0
      %v825 = vadd.f32 0.0, %v824
      %v826 = vpop.f32.mrb[0].mxu0
      %827 = vdwg.mxu0
      %v828 = vadd.f32 %v767, %v822
      %v829 = vadd.f32 %v768, %v825
      %830 = vst.msk [vmem:[#allocation2] sm:$0xff] %vm764, %v828
      %831 = vst.msk [vmem:[#allocation2 + $0x8] sm:$0xff] %vm764, %v829
      %v832 = vld [vmem:[#allocation2] sm:$0xff]
      %v833 = vld [vmem:[#allocation2 + $0x8] sm:$0xff]
      %v834 = vld [vmem:[%s639] sm:$0xf]
      %v835 = vld [vmem:[%s639 + $0x4] sm:$0xf]
      %v836 = vld [vmem:[%s650] sm:$0xf]
      %v839 = vunpack.c.l.b16 %v834
      %v840 = vunpack.c.l.b16 %v835
      %v841 = vpack.c.b16 %v840, %v839
      %vm842 = vcmask 64512
      %v844 = vsel %vm842, %v841, 0
      %vm846 = vcmask 1043456
      %v848 = vsel %vm846, %v836, 0
      %850 = vmatprep.subr.bf16.mxu0 0
      %851 = vmatpush1.bf16.msra.mxu0 %v848
      %852 = vmatprep.subr.bf16.mxu0 0
      %853 = vmatpush1.bf16.msra.mxu0 0
      %854 = vmatprep.subr.bf16.mxu0 0
      %855 = vmatpush1.bf16.msra.mxu0 0
      %856 = vmatprep.subr.bf16.mxu0 0
      %857 = vmatpush1.bf16.msra.mxu0 0
      %858 = vmatprep.subr.bf16.mxu0 0
      %859 = vmatpush1.bf16.msra.mxu0 0
      %860 = vmatprep.subr.bf16.mxu0 0
      %861 = vmatpush1.bf16.msra.mxu0 0
      %862 = vmatprep.subr.bf16.mxu0 0
      %863 = vmatpush1.bf16.msra.mxu0 0
      %864 = vmatprep.subr.bf16.mxu0 0
      %865 = vmatpush1.bf16.msra.mxu0 0
      %866 = vmatprep.subr.bf16.mxu0 0
      %867 = vmatpush1.bf16.msra.mxu0 0
      %868 = vmatprep.subr.bf16.mxu0 0
      %869 = vmatpush1.bf16.msra.mxu0 0
      %870 = vmatprep.subr.bf16.mxu0 0
      %871 = vmatpush1.bf16.msra.mxu0 0
      %872 = vmatprep.subr.bf16.mxu0 0
      %873 = vmatpush1.bf16.msra.mxu0 0
      %874 = vmatprep.subr.bf16.mxu0 0
      %875 = vmatpush1.bf16.msra.mxu0 0
      %876 = vmatprep.subr.bf16.mxu0 0
      %877 = vmatpush1.bf16.msra.mxu0 0
      %878 = vmatprep.subr.bf16.mxu0 0
      %879 = vmatpush1.bf16.msra.mxu0 0
      %880 = vmatprep.subr.bf16.mxu0 0
      %881 = vmatpush1.bf16.msra.mxu0 0
      %882 = vmatprep.mubr.bf16.mxu0 0
      %883 = vmatmul.mubr.bf16.gmra.mrb[0].mxu0 %v844
      %v884 = vpop.f32.mrb[0].mxu0
      %v885 = vadd.f32 0.0, %v884
      %v886 = vpop.f32.mrb[0].mxu0
      %v887 = vpop.f32.mrb[0].mxu0
      %v888 = vadd.f32 0.0, %v887
      %v889 = vpop.f32.mrb[0].mxu0
      %890 = vdwg.mxu0
      %v891 = vadd.f32 %v832, %v885
      %v892 = vadd.f32 %v833, %v888
      %893 = vst.msk [vmem:[#allocation2] sm:$0xff] %vm764, %v891
      %894 = vst.msk [vmem:[#allocation2 + $0x8] sm:$0xff] %vm764, %v892
      %v895 = vld [vmem:[#allocation2] sm:$0xff]
      %v896 = vld [vmem:[#allocation2 + $0x8] sm:$0xff]
      %v897 = vld [vmem:[%s658] sm:$0xf]
      %v898 = vld [vmem:[%s658 + $0x4] sm:$0xf]
      %v899 = vld [vmem:[%s671] sm:$0xf]
      %v900 = vld [vmem:[%s671 + $0x4] sm:$0xf]
      %v903 = vunpack.c.l.b16 %v897
      %v904 = vunpack.c.l.b16 %v898
      %v905 = vpack.c.b16 %v904, %v903
      %v908 = vunpack.c.l.b16 %v899
      %v909 = vunpack.c.l.b16 %v900
      %v910 = vpack.c.b16 %v909, %v908
      %v913 = vsel %vm717, %v905, 0
      %915 = vmatprep.subr.bf16.mxu0 0
      %916 = vmatpush1.bf16.msra.mxu0 %v910
      %917 = vmatprep.subr.bf16.mxu0 0
      %918 = vmatpush1.bf16.msra.mxu0 0
      %919 = vmatprep.subr.bf16.mxu0 0
      %920 = vmatpush1.bf16.msra.mxu0 0
      %921 = vmatprep.subr.bf16.mxu0 0
      %922 = vmatpush1.bf16.msra.mxu0 0
      %923 = vmatprep.subr.bf16.mxu0 0
      %924 = vmatpush1.bf16.msra.mxu0 0
      %925 = vmatprep.subr.bf16.mxu0 0
      %926 = vmatpush1.bf16.msra.mxu0 0
      %927 = vmatprep.subr.bf16.mxu0 0
      %928 = vmatpush1.bf16.msra.mxu0 0
      %929 = vmatprep.subr.bf16.mxu0 0
      %930 = vmatpush1.bf16.msra.mxu0 0
      %931 = vmatprep.subr.bf16.mxu0 0
      %932 = vmatpush1.bf16.msra.mxu0 0
      %933 = vmatprep.subr.bf16.mxu0 0
      %934 = vmatpush1.bf16.msra.mxu0 0
      %935 = vmatprep.subr.bf16.mxu0 0
      %936 = vmatpush1.bf16.msra.mxu0 0
      %937 = vmatprep.subr.bf16.mxu0 0
      %938 = vmatpush1.bf16.msra.mxu0 0
      %939 = vmatprep.subr.bf16.mxu0 0
      %940 = vmatpush1.bf16.msra.mxu0 0
      %941 = vmatprep.subr.bf16.mxu0 0
      %942 = vmatpush1.bf16.msra.mxu0 0
      %943 = vmatprep.subr.bf16.mxu0 0
      %944 = vmatpush1.bf16.msra.mxu0 0
      %945 = vmatprep.subr.bf16.mxu0 0
      %946 = vmatpush1.bf16.msra.mxu0 0
      %947 = vmatprep.mubr.bf16.mxu0 0
      %948 = vmatmul.mubr.bf16.gmra.mrb[0].mxu0 %v913
      %v949 = vpop.f32.mrb[0].mxu0
      %v950 = vadd.f32 0.0, %v949
      %v951 = vpop.f32.mrb[0].mxu0
      %v952 = vpop.f32.mrb[0].mxu0
      %v953 = vadd.f32 0.0, %v952
      %v954 = vpop.f32.mrb[0].mxu0
      %955 = vdwg.mxu0
      %v956 = vadd.f32 %v895, %v950
      %v957 = vadd.f32 %v896, %v953
      %958 = vst.msk [vmem:[#allocation2] sm:$0xff] %vm764, %v956
      %959 = vst.msk [vmem:[#allocation2 + $0x8] sm:$0xff] %vm764, %v957
      // Predicated region
      $region61: #{tree_forward.24} parent=55 // pred_check
        %p960 = pneg %p693
      $region62: #{tree_forward.24} parent=55 // pred_check_branch
        %962 = sbr.rel (%p960) target = $region64
      $region63: #{tree_forward.24} parent=55 // pred_region
        %v963 = vld [vmem:[#allocation2] sm:$0xff]
        %v964 = vld [vmem:[#allocation2 + $0x8] sm:$0xff]
        %v965 = vld [vmem:[%s677] sm:$0xff]
        %v966 = vld [vmem:[%s677 + $0x8] sm:$0xff]
        %968 = vset.pattern.permute.xlu0 0
        %969 = vperm.xlu0 %968, %v965
        %v970 = vpop.permute.xlu0 %969
        %973 = vset.pattern.permute.xlu0 0
        %974 = vperm.xlu0 %973, %v966
        %v975 = vpop.permute.xlu0 %974
        %v977 = vadd.f32 %v963, %v970
        %v978 = vadd.f32 %v964, %v975
        %v979 = vmax.f32 %v977, 0.0
        %v980 = vmax.f32 %v978, 0.0
        %v981 = vpack.c.bf16 %v980, %v979
        %v983 = vunpack.c.l.b16 %v981
        %v984 = vunpack.c.h.b16 %v981
        %v985 = vpack.c.b16 %v983, %v983
        %v986 = vpack.c.b16 %v984, %v984
        %vm989 = vcmask 519168
        %990 = vst.msk [vmem:[%s690] sm:$0xf] %vm989, %v985
        %991 = vst.msk [vmem:[%s690 + $0x4] sm:$0xf] %vm989, %v986
      $region64: #{tree_forward.24} parent=55 // pred_fallthru
        _
      %s992 = smul.u32 2, %s27
      %p993 = scmp.lt.s32.totalorder %s26, 1
      %s994 = scalar_select %p993, %s26, 1
      %p995 = scmp.lt.s32.totalorder %s992, 1
      %s996 = scalar_select %p995, %s992, 1
      %p997 = scmp.lt.s32.totalorder %s28, 0
      %s998 = scalar_select %p997, %s28, 0
      %s999 = sadd.s32 %s998, %s996
      %s1000 = smul.addr %s994, 2
      %s1001 = sadd.s32 %s999, %s1000
      %s1002 = smul.addr %s1001, 4
      %s1003 = scalar_lea.vmem %s9, %s1002
      // Predicated region
      $region65: #{tree_forward.24} parent=55 // pred_check
        %p1004 = pneg %p326
      $region66: #{tree_forward.24} parent=55 // pred_check_branch
        %1006 = sbr.rel (%p1004) target = $region68
      $region67: #{tree_forward.24} parent=55 // pred_region
        %s1007 = smul.u32 2, %s27
      $region68: #{tree_forward.24} parent=55 // pred_fallthru
        _
    $region56: #{tree_forward.24} parent=5 // pred_fallthru
      _
    %p1008 = scmp.le.s32.totalorder 2, %s15
    // Predicated region
    $region69: #{tree_forward.24} parent=5 // pred_check
      %p1009 = pneg %p1008
    $region70: #{tree_forward.24} parent=5 // pred_check_branch
      %1011 = sbr.rel (%p1009) target = $region72
    $region71: #{tree_forward.24} parent=5 // pred_region
      %s1012 = ssub.s32 %s15, 2
      // Predicated region
      $region73: #{tree_forward.24} parent=71 // pred_check
        %p1013 = pneg %p332
      $region74: #{tree_forward.24} parent=71 // pred_check_branch
        %1015 = sbr.rel (%p1013) target = $region76
      $region75: #{tree_forward.24} parent=71 // pred_region
        %s1016 = smul.u32 2, %s31
        %p1017 = scmp.lt.s32.totalorder %s30, 1
        %s1018 = scalar_select %p1017, %s30, 1
        %p1019 = scmp.lt.s32.totalorder %s1016, 1
        %s1020 = scalar_select %p1019, %s1016, 1
        %p1021 = scmp.lt.s32.totalorder %s32, 0
        %s1022 = scalar_select %p1021, %s32, 0
        %s1023 = sadd.s32 %s1022, %s1020
        %s1024 = smul.addr %s1018, 2
        %s1025 = sadd.s32 %s1023, %s1024
        %s1026 = smul.addr %s1025, 4
        %s1027 = scalar_lea.vmem %s9, %s1026
      $region76: #{tree_forward.24} parent=71 // pred_fallthru
        _
    $region72: #{tree_forward.24} parent=5 // pred_fallthru
      _
  $region6: #{tree_forward.24} parent=0 // loop_footer
    %s19 = sadd.s32 1, %s15
  $region7: #{tree_forward.24} parent=0 // loop_footer_branch
    %14 = sbr.rel target = $region3
  $region8: #{tree_forward.24} parent=0 // loop_exit
    _

</llo_original>
